<compile_context>
chip_gen: v6e
topology: v6e:2x2x1
jax: 0.10.0
libtpu: 0.0.40
codegen_flags: <defaults>
</compile_context>

<pallas_src>
import jax
import jax.numpy as jnp
from jax.experimental import pallas as pl
from jax.experimental.pallas import tpu as pltpu


def _nn1_fused_kernel(xq_ref, w1_ref, b1_ref, w2_ref, b2_ref, o_ref,
                      pad2_ref, pool_ref):
    """Fused NN1 forward for one batch tile.

    xq_ref  : (Bt, 4, H/2+1, W/2+1, Cin) bf16  pool-1-phase-deinterleaved padded input
              xq[b, 2a+c, i, j, :] = padded_x[b, 2i+a, 2j+c, :]
    w1_ref  : (9*Cin, C1) bf16   rows ordered (kh, kw, cin)
    b1_ref  : (1, C1)     f32
    w2_ref  : (9*C1, C2)  bf16   rows ordered (kh, kw, c1)
    b2_ref  : (1, C2)     f32
    o_ref   : (Bt, H/4, W/4, C2) f32
    pad2_ref: VMEM (Bt, H/2+2, W/2+2, C1) bf16   zero-halo'd pool1 output
    pool_ref: VMEM (Bt, H/4, W/2, C2) f32        H-pooled conv2 output (W pooling)
    """
    Bt = o_ref.shape[0]
    C1 = pad2_ref.shape[-1]
    C2 = o_ref.shape[-1]
    H2p, W2p = pad2_ref.shape[1], pad2_ref.shape[2]
    H2, W2 = H2p - 2, W2p - 2
    H4, W4 = H2 // 2, W2 // 2
    Cin = xq_ref.shape[-1]
    M2 = Bt * H2 * W2

    # ---- stage 1: conv1 (+bias, ReLU) fused with pool1 --------------------
    # conv1 output at pixel (2*h2+ph, 2*w2+pw), tap (kh, kw) reads phase plane
    # (s, t) = (ph+kh, pw+kw) at offset (s//2, t//2): a static unit-stride view.
    views = {}
    for s in range(4):
        for t in range(4):
            plane = (s % 2) * 2 + (t % 2)
            v = xq_ref[:, plane, s // 2:s // 2 + H2, t // 2:t // 2 + W2, :]
            views[(s, t)] = v.reshape(M2, Cin)              # rows (b, h2, w2)

    p1 = None
    for ph in range(2):
        for pw in range(2):
            acc = jnp.zeros((M2, C1), jnp.float32)
            for kh in range(3):
                for kw in range(3):
                    r0 = (kh * 3 + kw) * Cin
                    acc = acc + jnp.dot(views[(ph + kh, pw + kw)],
                                        w1_ref[r0:r0 + Cin, :],
                                        preferred_element_type=jnp.float32)
            r = jnp.maximum(acc + b1_ref[...], 0.0)
            p1 = r if p1 is None else jnp.maximum(p1, r)     # pool1 over phases

    # ---- write pool1 output into the bf16 halo buffer (conv2 SAME pad) ----
    # Zero only the halo (interior is fully overwritten below); done every step
    # so it is correct under "parallel" megacore sharding.
    pad2_ref[:, 0:1, :, :] = jnp.zeros((Bt, 1, W2p, C1), jnp.bfloat16)
    pad2_ref[:, H2 + 1:H2 + 2, :, :] = jnp.zeros((Bt, 1, W2p, C1), jnp.bfloat16)
    pad2_ref[:, :, 0:1, :] = jnp.zeros((Bt, H2p, 1, C1), jnp.bfloat16)
    pad2_ref[:, :, W2 + 1:W2 + 2, :] = jnp.zeros((Bt, H2p, 1, C1), jnp.bfloat16)
    pad2_ref[:, 1:1 + H2, 1:1 + W2, :] = (
        p1.reshape(Bt, H2, W2, C1).astype(jnp.bfloat16))

    # ---- stage 2: conv2 as 9 accumulating (M,16)@(16,32) matmuls ----------
    acc2 = jnp.zeros((M2, C2), jnp.float32)
    for kh in range(3):
        for kw in range(3):
            r0 = (kh * 3 + kw) * C1
            v = pad2_ref[:, kh:kh + H2, kw:kw + W2, :]       # (Bt,H2,W2,C1) bf16
            acc2 = acc2 + jnp.dot(v.reshape(M2, C1),
                                  w2_ref[r0:r0 + C1, :],
                                  preferred_element_type=jnp.float32)
    h2 = jnp.maximum(acc2 + b2_ref[...], 0.0)                # (M2, C2) f32

    # ---- pool2: H-direction in-register (leading split), W via small scratch
    h2 = h2.reshape(Bt, H4, 2, W2, C2)                       # pure leading split
    hmax = jnp.maximum(h2[:, :, 0], h2[:, :, 1])             # (Bt, H4, W2, C2)
    pool_ref[...] = hmax
    o_ref[...] = jnp.maximum(
        pool_ref[:, :, pl.ds(0, W4, 2), :],
        pool_ref[:, :, pl.ds(1, W4, 2), :]).astype(o_ref.dtype)


def _per_image_vmem_bytes(H, W, Cin, C1, C2):
    """Rough per-image VMEM footprint (tile-padded), used to cap Bt."""
    H2, W2, H4, W4 = H // 2, W // 2, H // 4, W // 4

    def tiled(rows, sub, lane, itemsize):
        return rows * (-(-sub // 8) * 8) * (-(-lane // 128) * 128) * itemsize

    xq = 2 * tiled(4 * (H2 + 1), W2 + 1, Cin, 2)   # double-buffered input block
    pad2 = tiled(H2 + 2, W2 + 2, C1, 2)
    pool = tiled(H4, W2, C2, 4)
    out = 2 * tiled(H4, W4, C2, 4)                 # double-buffered output block
    return xq + pad2 + pool + out


def _pick_batch_tile(n, per_image_bytes, budget_bytes=8 << 20):
    """Largest divisor of n that keeps >=2 grid steps (v7x) and fits VMEM."""
    best = 1
    for bt in range(1, n + 1):
        if n % bt:
            continue
        if n > 1 and n // bt < 2:          # keep both v7x TensorCores busy
            continue
        if bt * per_image_bytes > budget_bytes:
            continue
        best = bt
    return best


def nn1_forward(x_nchw, params):
    """Pallas implementation of NN1.forward. Input NCHW f32, output NCHW f32."""
    w1, b1 = params["w1"], params["b1"]            # (3,3,3,16) HWIO, (16,)
    w2, b2 = params["w2"], params["b2"]            # (3,3,16,32) HWIO, (32,)
    N, Cin, H, W = x_nchw.shape
    C1, C2 = w1.shape[-1], w2.shape[-1]
    assert H % 4 == 0 and W % 4 == 0, "H and W must be divisible by 4"
    assert w1.shape[2] == Cin
    H2, W2, H4, W4 = H // 2, W // 2, H // 4, W // 4

    # Pad input-channel dim to an even width (bf16 packing / matmul K alignment).
    Cin_p = Cin + (Cin % 2)

    x = jnp.transpose(x_nchw, (0, 2, 3, 1))                      # NCHW -> NHWC
    xp = jnp.pad(x, ((0, 0), (1, 1), (1, 1), (0, Cin_p - Cin)))  # conv1 SAME pad
    # Pool-1-phase deinterleave (input-sized; replaces the old 27-wide im2col):
    #   xq[n, 2a+b, i, j, c] = xp[n, 2i+a, 2j+b, c]
    xq = xp.reshape(N, H2 + 1, 2, W2 + 1, 2, Cin_p)
    xq = xq.transpose(0, 2, 4, 1, 3, 5).reshape(N, 4, H2 + 1, W2 + 1, Cin_p)
    xq = xq.astype(jnp.bfloat16)

    w1p = jnp.pad(w1, ((0, 0), (0, 0), (0, Cin_p - Cin), (0, 0)))
    w1m = w1p.reshape(9 * Cin_p, C1).astype(jnp.bfloat16)        # rows (kh,kw,cin)
    w2m = w2.reshape(9 * C1, C2).astype(jnp.bfloat16)            # rows (kh,kw,c1)
    b1m = b1.reshape(1, C1).astype(jnp.float32)
    b2m = b2.reshape(1, C2).astype(jnp.float32)

    Bt = _pick_batch_tile(N, _per_image_vmem_bytes(H, W, Cin_p, C1, C2))
    grid = (N // Bt,)

    out = pl.pallas_call(
        _nn1_fused_kernel,
        out_shape=jax.ShapeDtypeStruct((N, H4, W4, C2), jnp.float32),
        grid=grid,
        in_specs=[
            pl.BlockSpec((Bt, 4, H2 + 1, W2 + 1, Cin_p),
                         lambda i: (i, 0, 0, 0, 0)),
            pl.BlockSpec((9 * Cin_p, C1), lambda i: (0, 0)),
            pl.BlockSpec((1, C1), lambda i: (0, 0)),
            pl.BlockSpec((9 * C1, C2), lambda i: (0, 0)),
            pl.BlockSpec((1, C2), lambda i: (0, 0)),
        ],
        out_specs=pl.BlockSpec((Bt, H4, W4, C2), lambda i: (i, 0, 0, 0)),
        scratch_shapes=[
            pltpu.VMEM((Bt, H2 + 2, W2 + 2, C1), jnp.bfloat16),   # padded pool1
            pltpu.VMEM((Bt, H4, W2, C2), jnp.float32),            # pool2 W-step
        ],
        compiler_params=pltpu.CompilerParams(
            dimension_semantics=("parallel",),
            vmem_limit_bytes=32 * 1024 * 1024),
    )(xq, w1m, b1m, w2m, b2m)

    return jnp.transpose(out, (0, 3, 1, 2))                      # NHWC -> NCHW


def nn1_reference(x_nchw, params):
    """Plain-JAX reference (same semantics as the PyTorch module), f32."""
    def stage(x, w, b):
        y = jax.lax.conv_general_dilated(
            x, w, window_strides=(1, 1), padding="SAME",
            dimension_numbers=("NHWC", "HWIO", "NHWC"))
        y = jax.nn.relu(y + b)
        return jax.lax.reduce_window(y, -jnp.inf, jax.lax.max,
                                     (1, 2, 2, 1), (1, 2, 2, 1), "VALID")
    x = jnp.transpose(x_nchw, (0, 2, 3, 1))
    x = stage(x, params["w1"], params["b1"])
    x = stage(x, params["w2"], params["b2"])
    return jnp.transpose(x, (0, 3, 1, 2))


if __name__ == "__main__":
    key = jax.random.PRNGKey(0)
    k1, k2, k3, k4, kx = jax.random.split(key, 5)

    # Deterministic synthetic parameters (shapes from NN1.__init__), HWIO layout.
    params = {
        "w1": jax.random.normal(k1, (3, 3, 3, 16), jnp.float32) * 0.1,
        "b1": jax.random.normal(k2, (16,), jnp.float32) * 0.1,
        "w2": jax.random.normal(k3, (3, 3, 16, 32), jnp.float32) * 0.05,
        "b2": jax.random.normal(k4, (32,), jnp.float32) * 0.05,
    }

    # Small NCHW input consistent with conv1 (3 input channels).
    x = jax.random.normal(kx, (2, 3, 16, 16), jnp.float32)

    fwd = jax.jit(nn1_forward)
    out = jax.block_until_ready(fwd(x, params))
    assert out.shape == (2, 32, 4, 4), out.shape

    ref = jax.block_until_ready(nn1_reference(x, params))
    err = float(jnp.max(jnp.abs(out - ref)))
    assert jnp.allclose(out, ref, atol=5e-2, rtol=5e-2), err

    print("KERNEL_OK")
</pallas_src>

<mosaic_0001>
module attributes {stable_mosaic.version = 11 : i64} {
  func.func @_nn1_fused_kernel(%arg0: i32, %arg1: memref<1x4x9x9x4xbf16, #tpu.memory_space<vmem>>, %arg2: memref<36x16xbf16, #tpu.memory_space<vmem>>, %arg3: memref<1x16xf32, #tpu.memory_space<vmem>>, %arg4: memref<144x32xbf16, #tpu.memory_space<vmem>>, %arg5: memref<1x32xf32, #tpu.memory_space<vmem>>, %arg6: memref<1x4x4x32xf32, #tpu.memory_space<vmem>>, %arg7: memref<1x10x10x16xbf16, #tpu.memory_space<vmem>>, %arg8: memref<1x4x8x32xf32, #tpu.memory_space<vmem>>) attributes {dimension_semantics = [#tpu.dimension_semantics<parallel>], iteration_bounds = array<i64: 2>, scalar_prefetch = 0 : i64, scratch_operands = 2 : i64, tpu.core_type = #tpu.core_type<tc>, window_params = [{transform_indices = @transform_0, window_bounds = array<i64: 1, 4, 9, 9, 4>}, {pipeline_mode = #tpu.pipeline_mode<synchronous>, transform_indices = @transform_1, window_bounds = array<i64: 36, 16>}, {pipeline_mode = #tpu.pipeline_mode<synchronous>, transform_indices = @transform_2, window_bounds = array<i64: 1, 16>}, {pipeline_mode = #tpu.pipeline_mode<synchronous>, transform_indices = @transform_3, window_bounds = array<i64: 144, 32>}, {pipeline_mode = #tpu.pipeline_mode<synchronous>, transform_indices = @transform_4, window_bounds = array<i64: 1, 32>}, {transform_indices = @transform_5, window_bounds = array<i64: 1, 4, 4, 32>}]} {
    %c0 = arith.constant 0 : index
    %c0_0 = arith.constant 0 : index
    %c0_1 = arith.constant 0 : index
    %c0_2 = arith.constant 0 : index
    %c0_3 = arith.constant 0 : index
    %0 = vector.load %arg1[%c0, %c0_0, %c0_1, %c0_2, %c0_3] : memref<1x4x9x9x4xbf16, #tpu.memory_space<vmem>>, vector<1x1x8x8x4xbf16>
    %1 = vector.shape_cast %0 : vector<1x1x8x8x4xbf16> to vector<1x8x8x4xbf16>
    %2 = vector.shape_cast %1 : vector<1x8x8x4xbf16> to vector<64x4xbf16>
    %c0_4 = arith.constant 0 : index
    %c1 = arith.constant 1 : index
    %c0_5 = arith.constant 0 : index
    %c0_6 = arith.constant 0 : index
    %c0_7 = arith.constant 0 : index
    %3 = vector.load %arg1[%c0_4, %c1, %c0_5, %c0_6, %c0_7] : memref<1x4x9x9x4xbf16, #tpu.memory_space<vmem>>, vector<1x1x8x8x4xbf16>
    %4 = vector.shape_cast %3 : vector<1x1x8x8x4xbf16> to vector<1x8x8x4xbf16>
    %5 = vector.shape_cast %4 : vector<1x8x8x4xbf16> to vector<64x4xbf16>
    %c0_8 = arith.constant 0 : index
    %c0_9 = arith.constant 0 : index
    %c0_10 = arith.constant 0 : index
    %c1_11 = arith.constant 1 : index
    %c0_12 = arith.constant 0 : index
    %6 = vector.load %arg1[%c0_8, %c0_9, %c0_10, %c1_11, %c0_12] : memref<1x4x9x9x4xbf16, #tpu.memory_space<vmem>>, vector<1x1x8x8x4xbf16>
    %7 = vector.shape_cast %6 : vector<1x1x8x8x4xbf16> to vector<1x8x8x4xbf16>
    %8 = vector.shape_cast %7 : vector<1x8x8x4xbf16> to vector<64x4xbf16>
    %c0_13 = arith.constant 0 : index
    %c1_14 = arith.constant 1 : index
    %c0_15 = arith.constant 0 : index
    %c1_16 = arith.constant 1 : index
    %c0_17 = arith.constant 0 : index
    %9 = vector.load %arg1[%c0_13, %c1_14, %c0_15, %c1_16, %c0_17] : memref<1x4x9x9x4xbf16, #tpu.memory_space<vmem>>, vector<1x1x8x8x4xbf16>
    %10 = vector.shape_cast %9 : vector<1x1x8x8x4xbf16> to vector<1x8x8x4xbf16>
    %11 = vector.shape_cast %10 : vector<1x8x8x4xbf16> to vector<64x4xbf16>
    %c0_18 = arith.constant 0 : index
    %c2 = arith.constant 2 : index
    %c0_19 = arith.constant 0 : index
    %c0_20 = arith.constant 0 : index
    %c0_21 = arith.constant 0 : index
    %12 = vector.load %arg1[%c0_18, %c2, %c0_19, %c0_20, %c0_21] : memref<1x4x9x9x4xbf16, #tpu.memory_space<vmem>>, vector<1x1x8x8x4xbf16>
    %13 = vector.shape_cast %12 : vector<1x1x8x8x4xbf16> to vector<1x8x8x4xbf16>
    %14 = vector.shape_cast %13 : vector<1x8x8x4xbf16> to vector<64x4xbf16>
    %c0_22 = arith.constant 0 : index
    %c3 = arith.constant 3 : index
    %c0_23 = arith.constant 0 : index
    %c0_24 = arith.constant 0 : index
    %c0_25 = arith.constant 0 : index
    %15 = vector.load %arg1[%c0_22, %c3, %c0_23, %c0_24, %c0_25] : memref<1x4x9x9x4xbf16, #tpu.memory_space<vmem>>, vector<1x1x8x8x4xbf16>
    %16 = vector.shape_cast %15 : vector<1x1x8x8x4xbf16> to vector<1x8x8x4xbf16>
    %17 = vector.shape_cast %16 : vector<1x8x8x4xbf16> to vector<64x4xbf16>
    %c0_26 = arith.constant 0 : index
    %c2_27 = arith.constant 2 : index
    %c0_28 = arith.constant 0 : index
    %c1_29 = arith.constant 1 : index
    %c0_30 = arith.constant 0 : index
    %18 = vector.load %arg1[%c0_26, %c2_27, %c0_28, %c1_29, %c0_30] : memref<1x4x9x9x4xbf16, #tpu.memory_space<vmem>>, vector<1x1x8x8x4xbf16>
    %19 = vector.shape_cast %18 : vector<1x1x8x8x4xbf16> to vector<1x8x8x4xbf16>
    %20 = vector.shape_cast %19 : vector<1x8x8x4xbf16> to vector<64x4xbf16>
    %c0_31 = arith.constant 0 : index
    %c3_32 = arith.constant 3 : index
    %c0_33 = arith.constant 0 : index
    %c1_34 = arith.constant 1 : index
    %c0_35 = arith.constant 0 : index
    %21 = vector.load %arg1[%c0_31, %c3_32, %c0_33, %c1_34, %c0_35] : memref<1x4x9x9x4xbf16, #tpu.memory_space<vmem>>, vector<1x1x8x8x4xbf16>
    %22 = vector.shape_cast %21 : vector<1x1x8x8x4xbf16> to vector<1x8x8x4xbf16>
    %23 = vector.shape_cast %22 : vector<1x8x8x4xbf16> to vector<64x4xbf16>
    %c0_36 = arith.constant 0 : index
    %c0_37 = arith.constant 0 : index
    %c1_38 = arith.constant 1 : index
    %c0_39 = arith.constant 0 : index
    %c0_40 = arith.constant 0 : index
    %24 = vector.load %arg1[%c0_36, %c0_37, %c1_38, %c0_39, %c0_40] : memref<1x4x9x9x4xbf16, #tpu.memory_space<vmem>>, vector<1x1x8x8x4xbf16>
    %25 = vector.shape_cast %24 : vector<1x1x8x8x4xbf16> to vector<1x8x8x4xbf16>
    %26 = vector.shape_cast %25 : vector<1x8x8x4xbf16> to vector<64x4xbf16>
    %c0_41 = arith.constant 0 : index
    %c1_42 = arith.constant 1 : index
    %c1_43 = arith.constant 1 : index
    %c0_44 = arith.constant 0 : index
    %c0_45 = arith.constant 0 : index
    %27 = vector.load %arg1[%c0_41, %c1_42, %c1_43, %c0_44, %c0_45] : memref<1x4x9x9x4xbf16, #tpu.memory_space<vmem>>, vector<1x1x8x8x4xbf16>
    %28 = vector.shape_cast %27 : vector<1x1x8x8x4xbf16> to vector<1x8x8x4xbf16>
    %29 = vector.shape_cast %28 : vector<1x8x8x4xbf16> to vector<64x4xbf16>
    %c0_46 = arith.constant 0 : index
    %c0_47 = arith.constant 0 : index
    %c1_48 = arith.constant 1 : index
    %c1_49 = arith.constant 1 : index
    %c0_50 = arith.constant 0 : index
    %30 = vector.load %arg1[%c0_46, %c0_47, %c1_48, %c1_49, %c0_50] : memref<1x4x9x9x4xbf16, #tpu.memory_space<vmem>>, vector<1x1x8x8x4xbf16>
    %31 = vector.shape_cast %30 : vector<1x1x8x8x4xbf16> to vector<1x8x8x4xbf16>
    %32 = vector.shape_cast %31 : vector<1x8x8x4xbf16> to vector<64x4xbf16>
    %c0_51 = arith.constant 0 : index
    %c1_52 = arith.constant 1 : index
    %c1_53 = arith.constant 1 : index
    %c1_54 = arith.constant 1 : index
    %c0_55 = arith.constant 0 : index
    %33 = vector.load %arg1[%c0_51, %c1_52, %c1_53, %c1_54, %c0_55] : memref<1x4x9x9x4xbf16, #tpu.memory_space<vmem>>, vector<1x1x8x8x4xbf16>
    %34 = vector.shape_cast %33 : vector<1x1x8x8x4xbf16> to vector<1x8x8x4xbf16>
    %35 = vector.shape_cast %34 : vector<1x8x8x4xbf16> to vector<64x4xbf16>
    %c0_56 = arith.constant 0 : index
    %c2_57 = arith.constant 2 : index
    %c1_58 = arith.constant 1 : index
    %c0_59 = arith.constant 0 : index
    %c0_60 = arith.constant 0 : index
    %36 = vector.load %arg1[%c0_56, %c2_57, %c1_58, %c0_59, %c0_60] : memref<1x4x9x9x4xbf16, #tpu.memory_space<vmem>>, vector<1x1x8x8x4xbf16>
    %37 = vector.shape_cast %36 : vector<1x1x8x8x4xbf16> to vector<1x8x8x4xbf16>
    %38 = vector.shape_cast %37 : vector<1x8x8x4xbf16> to vector<64x4xbf16>
    %c0_61 = arith.constant 0 : index
    %c3_62 = arith.constant 3 : index
    %c1_63 = arith.constant 1 : index
    %c0_64 = arith.constant 0 : index
    %c0_65 = arith.constant 0 : index
    %39 = vector.load %arg1[%c0_61, %c3_62, %c1_63, %c0_64, %c0_65] : memref<1x4x9x9x4xbf16, #tpu.memory_space<vmem>>, vector<1x1x8x8x4xbf16>
    %40 = vector.shape_cast %39 : vector<1x1x8x8x4xbf16> to vector<1x8x8x4xbf16>
    %41 = vector.shape_cast %40 : vector<1x8x8x4xbf16> to vector<64x4xbf16>
    %c0_66 = arith.constant 0 : index
    %c2_67 = arith.constant 2 : index
    %c1_68 = arith.constant 1 : index
    %c1_69 = arith.constant 1 : index
    %c0_70 = arith.constant 0 : index
    %42 = vector.load %arg1[%c0_66, %c2_67, %c1_68, %c1_69, %c0_70] : memref<1x4x9x9x4xbf16, #tpu.memory_space<vmem>>, vector<1x1x8x8x4xbf16>
    %43 = vector.shape_cast %42 : vector<1x1x8x8x4xbf16> to vector<1x8x8x4xbf16>
    %44 = vector.shape_cast %43 : vector<1x8x8x4xbf16> to vector<64x4xbf16>
    %c0_71 = arith.constant 0 : index
    %c3_72 = arith.constant 3 : index
    %c1_73 = arith.constant 1 : index
    %c1_74 = arith.constant 1 : index
    %c0_75 = arith.constant 0 : index
    %45 = vector.load %arg1[%c0_71, %c3_72, %c1_73, %c1_74, %c0_75] : memref<1x4x9x9x4xbf16, #tpu.memory_space<vmem>>, vector<1x1x8x8x4xbf16>
    %46 = vector.shape_cast %45 : vector<1x1x8x8x4xbf16> to vector<1x8x8x4xbf16>
    %47 = vector.shape_cast %46 : vector<1x8x8x4xbf16> to vector<64x4xbf16>
    %cst = arith.constant 0.000000e+00 : f32
    %48 = vector.broadcast %cst : f32 to vector<64x16xf32>
    %c0_76 = arith.constant 0 : index
    %c0_77 = arith.constant 0 : index
    %49 = vector.load %arg2[%c0_76, %c0_77] : memref<36x16xbf16, #tpu.memory_space<vmem>>, vector<4x16xbf16>
    %cst_78 = arith.constant dense<0.000000e+00> : vector<64x16xf32>
    %50 = tpu.matmul %2, %49, %cst_78 {dimension_numbers = #tpu.dot_dimension_numbers<[1], [0], [0], [1], [0, 0, 1, 1], [], []>} : vector<64x4xbf16>, vector<4x16xbf16>, vector<64x16xf32> -> vector<64x16xf32>
    %51 = arith.addf %48, %50 : vector<64x16xf32>
    %c4 = arith.constant 4 : index
    %c0_79 = arith.constant 0 : index
    %52 = vector.load %arg2[%c4, %c0_79] : memref<36x16xbf16, #tpu.memory_space<vmem>>, vector<4x16xbf16>
    %cst_80 = arith.constant dense<0.000000e+00> : vector<64x16xf32>
    %53 = tpu.matmul %5, %52, %cst_80 {dimension_numbers = #tpu.dot_dimension_numbers<[1], [0], [0], [1], [0, 0, 1, 1], [], []>} : vector<64x4xbf16>, vector<4x16xbf16>, vector<64x16xf32> -> vector<64x16xf32>
    %54 = arith.addf %51, %53 : vector<64x16xf32>
    %c8 = arith.constant 8 : index
    %c0_81 = arith.constant 0 : index
    %55 = vector.load %arg2[%c8, %c0_81] : memref<36x16xbf16, #tpu.memory_space<vmem>>, vector<4x16xbf16>
    %cst_82 = arith.constant dense<0.000000e+00> : vector<64x16xf32>
    %56 = tpu.matmul %8, %55, %cst_82 {dimension_numbers = #tpu.dot_dimension_numbers<[1], [0], [0], [1], [0, 0, 1, 1], [], []>} : vector<64x4xbf16>, vector<4x16xbf16>, vector<64x16xf32> -> vector<64x16xf32>
    %57 = arith.addf %54, %56 : vector<64x16xf32>
    %c12 = arith.constant 12 : index
    %c0_83 = arith.constant 0 : index
    %58 = vector.load %arg2[%c12, %c0_83] : memref<36x16xbf16, #tpu.memory_space<vmem>>, vector<4x16xbf16>
    %cst_84 = arith.constant dense<0.000000e+00> : vector<64x16xf32>
    %59 = tpu.matmul %14, %58, %cst_84 {dimension_numbers = #tpu.dot_dimension_numbers<[1], [0], [0], [1], [0, 0, 1, 1], [], []>} : vector<64x4xbf16>, vector<4x16xbf16>, vector<64x16xf32> -> vector<64x16xf32>
    %60 = arith.addf %57, %59 : vector<64x16xf32>
    %c16 = arith.constant 16 : index
    %c0_85 = arith.constant 0 : index
    %61 = vector.load %arg2[%c16, %c0_85] : memref<36x16xbf16, #tpu.memory_space<vmem>>, vector<4x16xbf16>
    %cst_86 = arith.constant dense<0.000000e+00> : vector<64x16xf32>
    %62 = tpu.matmul %17, %61, %cst_86 {dimension_numbers = #tpu.dot_dimension_numbers<[1], [0], [0], [1], [0, 0, 1, 1], [], []>} : vector<64x4xbf16>, vector<4x16xbf16>, vector<64x16xf32> -> vector<64x16xf32>
    %63 = arith.addf %60, %62 : vector<64x16xf32>
    %c20 = arith.constant 20 : index
    %c0_87 = arith.constant 0 : index
    %64 = vector.load %arg2[%c20, %c0_87] : memref<36x16xbf16, #tpu.memory_space<vmem>>, vector<4x16xbf16>
    %cst_88 = arith.constant dense<0.000000e+00> : vector<64x16xf32>
    %65 = tpu.matmul %20, %64, %cst_88 {dimension_numbers = #tpu.dot_dimension_numbers<[1], [0], [0], [1], [0, 0, 1, 1], [], []>} : vector<64x4xbf16>, vector<4x16xbf16>, vector<64x16xf32> -> vector<64x16xf32>
    %66 = arith.addf %63, %65 : vector<64x16xf32>
    %c24 = arith.constant 24 : index
    %c0_89 = arith.constant 0 : index
    %67 = vector.load %arg2[%c24, %c0_89] : memref<36x16xbf16, #tpu.memory_space<vmem>>, vector<4x16xbf16>
    %cst_90 = arith.constant dense<0.000000e+00> : vector<64x16xf32>
    %68 = tpu.matmul %26, %67, %cst_90 {dimension_numbers = #tpu.dot_dimension_numbers<[1], [0], [0], [1], [0, 0, 1, 1], [], []>} : vector<64x4xbf16>, vector<4x16xbf16>, vector<64x16xf32> -> vector<64x16xf32>
    %69 = arith.addf %66, %68 : vector<64x16xf32>
    %c28 = arith.constant 28 : index
    %c0_91 = arith.constant 0 : index
    %70 = vector.load %arg2[%c28, %c0_91] : memref<36x16xbf16, #tpu.memory_space<vmem>>, vector<4x16xbf16>
    %cst_92 = arith.constant dense<0.000000e+00> : vector<64x16xf32>
    %71 = tpu.matmul %29, %70, %cst_92 {dimension_numbers = #tpu.dot_dimension_numbers<[1], [0], [0], [1], [0, 0, 1, 1], [], []>} : vector<64x4xbf16>, vector<4x16xbf16>, vector<64x16xf32> -> vector<64x16xf32>
    %72 = arith.addf %69, %71 : vector<64x16xf32>
    %c32 = arith.constant 32 : index
    %c0_93 = arith.constant 0 : index
    %73 = vector.load %arg2[%c32, %c0_93] : memref<36x16xbf16, #tpu.memory_space<vmem>>, vector<4x16xbf16>
    %cst_94 = arith.constant dense<0.000000e+00> : vector<64x16xf32>
    %74 = tpu.matmul %32, %73, %cst_94 {dimension_numbers = #tpu.dot_dimension_numbers<[1], [0], [0], [1], [0, 0, 1, 1], [], []>} : vector<64x4xbf16>, vector<4x16xbf16>, vector<64x16xf32> -> vector<64x16xf32>
    %75 = arith.addf %72, %74 : vector<64x16xf32>
    %c0_95 = arith.constant 0 : index
    %c0_96 = arith.constant 0 : index
    %76 = vector.load %arg3[%c0_95, %c0_96] : memref<1x16xf32, #tpu.memory_space<vmem>>, vector<1x16xf32>
    %77 = vector.broadcast %76 : vector<1x16xf32> to vector<64x16xf32>
    %78 = arith.addf %75, %77 : vector<64x16xf32>
    %cst_97 = arith.constant 0.000000e+00 : f32
    %79 = vector.broadcast %cst_97 : f32 to vector<64x16xf32>
    %80 = arith.maximumf %78, %79 : vector<64x16xf32>
    %cst_98 = arith.constant 0.000000e+00 : f32
    %81 = vector.broadcast %cst_98 : f32 to vector<64x16xf32>
    %c0_99 = arith.constant 0 : index
    %c0_100 = arith.constant 0 : index
    %82 = vector.load %arg2[%c0_99, %c0_100] : memref<36x16xbf16, #tpu.memory_space<vmem>>, vector<4x16xbf16>
    %cst_101 = arith.constant dense<0.000000e+00> : vector<64x16xf32>
    %83 = tpu.matmul %5, %82, %cst_101 {dimension_numbers = #tpu.dot_dimension_numbers<[1], [0], [0], [1], [0, 0, 1, 1], [], []>} : vector<64x4xbf16>, vector<4x16xbf16>, vector<64x16xf32> -> vector<64x16xf32>
    %84 = arith.addf %81, %83 : vector<64x16xf32>
    %c4_102 = arith.constant 4 : index
    %c0_103 = arith.constant 0 : index
    %85 = vector.load %arg2[%c4_102, %c0_103] : memref<36x16xbf16, #tpu.memory_space<vmem>>, vector<4x16xbf16>
    %cst_104 = arith.constant dense<0.000000e+00> : vector<64x16xf32>
    %86 = tpu.matmul %8, %85, %cst_104 {dimension_numbers = #tpu.dot_dimension_numbers<[1], [0], [0], [1], [0, 0, 1, 1], [], []>} : vector<64x4xbf16>, vector<4x16xbf16>, vector<64x16xf32> -> vector<64x16xf32>
    %87 = arith.addf %84, %86 : vector<64x16xf32>
    %c8_105 = arith.constant 8 : index
    %c0_106 = arith.constant 0 : index
    %88 = vector.load %arg2[%c8_105, %c0_106] : memref<36x16xbf16, #tpu.memory_space<vmem>>, vector<4x16xbf16>
    %cst_107 = arith.constant dense<0.000000e+00> : vector<64x16xf32>
    %89 = tpu.matmul %11, %88, %cst_107 {dimension_numbers = #tpu.dot_dimension_numbers<[1], [0], [0], [1], [0, 0, 1, 1], [], []>} : vector<64x4xbf16>, vector<4x16xbf16>, vector<64x16xf32> -> vector<64x16xf32>
    %90 = arith.addf %87, %89 : vector<64x16xf32>
    %c12_108 = arith.constant 12 : index
    %c0_109 = arith.constant 0 : index
    %91 = vector.load %arg2[%c12_108, %c0_109] : memref<36x16xbf16, #tpu.memory_space<vmem>>, vector<4x16xbf16>
    %cst_110 = arith.constant dense<0.000000e+00> : vector<64x16xf32>
    %92 = tpu.matmul %17, %91, %cst_110 {dimension_numbers = #tpu.dot_dimension_numbers<[1], [0], [0], [1], [0, 0, 1, 1], [], []>} : vector<64x4xbf16>, vector<4x16xbf16>, vector<64x16xf32> -> vector<64x16xf32>
    %93 = arith.addf %90, %92 : vector<64x16xf32>
    %c16_111 = arith.constant 16 : index
    %c0_112 = arith.constant 0 : index
    %94 = vector.load %arg2[%c16_111, %c0_112] : memref<36x16xbf16, #tpu.memory_space<vmem>>, vector<4x16xbf16>
    %cst_113 = arith.constant dense<0.000000e+00> : vector<64x16xf32>
    %95 = tpu.matmul %20, %94, %cst_113 {dimension_numbers = #tpu.dot_dimension_numbers<[1], [0], [0], [1], [0, 0, 1, 1], [], []>} : vector<64x4xbf16>, vector<4x16xbf16>, vector<64x16xf32> -> vector<64x16xf32>
    %96 = arith.addf %93, %95 : vector<64x16xf32>
    %c20_114 = arith.constant 20 : index
    %c0_115 = arith.constant 0 : index
    %97 = vector.load %arg2[%c20_114, %c0_115] : memref<36x16xbf16, #tpu.memory_space<vmem>>, vector<4x16xbf16>
    %cst_116 = arith.constant dense<0.000000e+00> : vector<64x16xf32>
    %98 = tpu.matmul %23, %97, %cst_116 {dimension_numbers = #tpu.dot_dimension_numbers<[1], [0], [0], [1], [0, 0, 1, 1], [], []>} : vector<64x4xbf16>, vector<4x16xbf16>, vector<64x16xf32> -> vector<64x16xf32>
    %99 = arith.addf %96, %98 : vector<64x16xf32>
    %c24_117 = arith.constant 24 : index
    %c0_118 = arith.constant 0 : index
    %100 = vector.load %arg2[%c24_117, %c0_118] : memref<36x16xbf16, #tpu.memory_space<vmem>>, vector<4x16xbf16>
    %cst_119 = arith.constant dense<0.000000e+00> : vector<64x16xf32>
    %101 = tpu.matmul %29, %100, %cst_119 {dimension_numbers = #tpu.dot_dimension_numbers<[1], [0], [0], [1], [0, 0, 1, 1], [], []>} : vector<64x4xbf16>, vector<4x16xbf16>, vector<64x16xf32> -> vector<64x16xf32>
    %102 = arith.addf %99, %101 : vector<64x16xf32>
    %c28_120 = arith.constant 28 : index
    %c0_121 = arith.constant 0 : index
    %103 = vector.load %arg2[%c28_120, %c0_121] : memref<36x16xbf16, #tpu.memory_space<vmem>>, vector<4x16xbf16>
    %cst_122 = arith.constant dense<0.000000e+00> : vector<64x16xf32>
    %104 = tpu.matmul %32, %103, %cst_122 {dimension_numbers = #tpu.dot_dimension_numbers<[1], [0], [0], [1], [0, 0, 1, 1], [], []>} : vector<64x4xbf16>, vector<4x16xbf16>, vector<64x16xf32> -> vector<64x16xf32>
    %105 = arith.addf %102, %104 : vector<64x16xf32>
    %c32_123 = arith.constant 32 : index
    %c0_124 = arith.constant 0 : index
    %106 = vector.load %arg2[%c32_123, %c0_124] : memref<36x16xbf16, #tpu.memory_space<vmem>>, vector<4x16xbf16>
    %cst_125 = arith.constant dense<0.000000e+00> : vector<64x16xf32>
    %107 = tpu.matmul %35, %106, %cst_125 {dimension_numbers = #tpu.dot_dimension_numbers<[1], [0], [0], [1], [0, 0, 1, 1], [], []>} : vector<64x4xbf16>, vector<4x16xbf16>, vector<64x16xf32> -> vector<64x16xf32>
    %108 = arith.addf %105, %107 : vector<64x16xf32>
    %c0_126 = arith.constant 0 : index
    %c0_127 = arith.constant 0 : index
    %109 = vector.load %arg3[%c0_126, %c0_127] : memref<1x16xf32, #tpu.memory_space<vmem>>, vector<1x16xf32>
    %110 = vector.broadcast %109 : vector<1x16xf32> to vector<64x16xf32>
    %111 = arith.addf %108, %110 : vector<64x16xf32>
    %cst_128 = arith.constant 0.000000e+00 : f32
    %112 = vector.broadcast %cst_128 : f32 to vector<64x16xf32>
    %113 = arith.maximumf %111, %112 : vector<64x16xf32>
    %114 = arith.maximumf %80, %113 : vector<64x16xf32>
    %cst_129 = arith.constant 0.000000e+00 : f32
    %115 = vector.broadcast %cst_129 : f32 to vector<64x16xf32>
    %c0_130 = arith.constant 0 : index
    %c0_131 = arith.constant 0 : index
    %116 = vector.load %arg2[%c0_130, %c0_131] : memref<36x16xbf16, #tpu.memory_space<vmem>>, vector<4x16xbf16>
    %cst_132 = arith.constant dense<0.000000e+00> : vector<64x16xf32>
    %117 = tpu.matmul %14, %116, %cst_132 {dimension_numbers = #tpu.dot_dimension_numbers<[1], [0], [0], [1], [0, 0, 1, 1], [], []>} : vector<64x4xbf16>, vector<4x16xbf16>, vector<64x16xf32> -> vector<64x16xf32>
    %118 = arith.addf %115, %117 : vector<64x16xf32>
    %c4_133 = arith.constant 4 : index
    %c0_134 = arith.constant 0 : index
    %119 = vector.load %arg2[%c4_133, %c0_134] : memref<36x16xbf16, #tpu.memory_space<vmem>>, vector<4x16xbf16>
    %cst_135 = arith.constant dense<0.000000e+00> : vector<64x16xf32>
    %120 = tpu.matmul %17, %119, %cst_135 {dimension_numbers = #tpu.dot_dimension_numbers<[1], [0], [0], [1], [0, 0, 1, 1], [], []>} : vector<64x4xbf16>, vector<4x16xbf16>, vector<64x16xf32> -> vector<64x16xf32>
    %121 = arith.addf %118, %120 : vector<64x16xf32>
    %c8_136 = arith.constant 8 : index
    %c0_137 = arith.constant 0 : index
    %122 = vector.load %arg2[%c8_136, %c0_137] : memref<36x16xbf16, #tpu.memory_space<vmem>>, vector<4x16xbf16>
    %cst_138 = arith.constant dense<0.000000e+00> : vector<64x16xf32>
    %123 = tpu.matmul %20, %122, %cst_138 {dimension_numbers = #tpu.dot_dimension_numbers<[1], [0], [0], [1], [0, 0, 1, 1], [], []>} : vector<64x4xbf16>, vector<4x16xbf16>, vector<64x16xf32> -> vector<64x16xf32>
    %124 = arith.addf %121, %123 : vector<64x16xf32>
    %c12_139 = arith.constant 12 : index
    %c0_140 = arith.constant 0 : index
    %125 = vector.load %arg2[%c12_139, %c0_140] : memref<36x16xbf16, #tpu.memory_space<vmem>>, vector<4x16xbf16>
    %cst_141 = arith.constant dense<0.000000e+00> : vector<64x16xf32>
    %126 = tpu.matmul %26, %125, %cst_141 {dimension_numbers = #tpu.dot_dimension_numbers<[1], [0], [0], [1], [0, 0, 1, 1], [], []>} : vector<64x4xbf16>, vector<4x16xbf16>, vector<64x16xf32> -> vector<64x16xf32>
    %127 = arith.addf %124, %126 : vector<64x16xf32>
    %c16_142 = arith.constant 16 : index
    %c0_143 = arith.constant 0 : index
    %128 = vector.load %arg2[%c16_142, %c0_143] : memref<36x16xbf16, #tpu.memory_space<vmem>>, vector<4x16xbf16>
    %cst_144 = arith.constant dense<0.000000e+00> : vector<64x16xf32>
    %129 = tpu.matmul %29, %128, %cst_144 {dimension_numbers = #tpu.dot_dimension_numbers<[1], [0], [0], [1], [0, 0, 1, 1], [], []>} : vector<64x4xbf16>, vector<4x16xbf16>, vector<64x16xf32> -> vector<64x16xf32>
    %130 = arith.addf %127, %129 : vector<64x16xf32>
    %c20_145 = arith.constant 20 : index
    %c0_146 = arith.constant 0 : index
    %131 = vector.load %arg2[%c20_145, %c0_146] : memref<36x16xbf16, #tpu.memory_space<vmem>>, vector<4x16xbf16>
    %cst_147 = arith.constant dense<0.000000e+00> : vector<64x16xf32>
    %132 = tpu.matmul %32, %131, %cst_147 {dimension_numbers = #tpu.dot_dimension_numbers<[1], [0], [0], [1], [0, 0, 1, 1], [], []>} : vector<64x4xbf16>, vector<4x16xbf16>, vector<64x16xf32> -> vector<64x16xf32>
    %133 = arith.addf %130, %132 : vector<64x16xf32>
    %c24_148 = arith.constant 24 : index
    %c0_149 = arith.constant 0 : index
    %134 = vector.load %arg2[%c24_148, %c0_149] : memref<36x16xbf16, #tpu.memory_space<vmem>>, vector<4x16xbf16>
    %cst_150 = arith.constant dense<0.000000e+00> : vector<64x16xf32>
    %135 = tpu.matmul %38, %134, %cst_150 {dimension_numbers = #tpu.dot_dimension_numbers<[1], [0], [0], [1], [0, 0, 1, 1], [], []>} : vector<64x4xbf16>, vector<4x16xbf16>, vector<64x16xf32> -> vector<64x16xf32>
    %136 = arith.addf %133, %135 : vector<64x16xf32>
    %c28_151 = arith.constant 28 : index
    %c0_152 = arith.constant 0 : index
    %137 = vector.load %arg2[%c28_151, %c0_152] : memref<36x16xbf16, #tpu.memory_space<vmem>>, vector<4x16xbf16>
    %cst_153 = arith.constant dense<0.000000e+00> : vector<64x16xf32>
    %138 = tpu.matmul %41, %137, %cst_153 {dimension_numbers = #tpu.dot_dimension_numbers<[1], [0], [0], [1], [0, 0, 1, 1], [], []>} : vector<64x4xbf16>, vector<4x16xbf16>, vector<64x16xf32> -> vector<64x16xf32>
    %139 = arith.addf %136, %138 : vector<64x16xf32>
    %c32_154 = arith.constant 32 : index
    %c0_155 = arith.constant 0 : index
    %140 = vector.load %arg2[%c32_154, %c0_155] : memref<36x16xbf16, #tpu.memory_space<vmem>>, vector<4x16xbf16>
    %cst_156 = arith.constant dense<0.000000e+00> : vector<64x16xf32>
    %141 = tpu.matmul %44, %140, %cst_156 {dimension_numbers = #tpu.dot_dimension_numbers<[1], [0], [0], [1], [0, 0, 1, 1], [], []>} : vector<64x4xbf16>, vector<4x16xbf16>, vector<64x16xf32> -> vector<64x16xf32>
    %142 = arith.addf %139, %141 : vector<64x16xf32>
    %c0_157 = arith.constant 0 : index
    %c0_158 = arith.constant 0 : index
    %143 = vector.load %arg3[%c0_157, %c0_158] : memref<1x16xf32, #tpu.memory_space<vmem>>, vector<1x16xf32>
    %144 = vector.broadcast %143 : vector<1x16xf32> to vector<64x16xf32>
    %145 = arith.addf %142, %144 : vector<64x16xf32>
    %cst_159 = arith.constant 0.000000e+00 : f32
    %146 = vector.broadcast %cst_159 : f32 to vector<64x16xf32>
    %147 = arith.maximumf %145, %146 : vector<64x16xf32>
    %148 = arith.maximumf %114, %147 : vector<64x16xf32>
    %cst_160 = arith.constant 0.000000e+00 : f32
    %149 = vector.broadcast %cst_160 : f32 to vector<64x16xf32>
    %c0_161 = arith.constant 0 : index
    %c0_162 = arith.constant 0 : index
    %150 = vector.load %arg2[%c0_161, %c0_162] : memref<36x16xbf16, #tpu.memory_space<vmem>>, vector<4x16xbf16>
    %cst_163 = arith.constant dense<0.000000e+00> : vector<64x16xf32>
    %151 = tpu.matmul %17, %150, %cst_163 {dimension_numbers = #tpu.dot_dimension_numbers<[1], [0], [0], [1], [0, 0, 1, 1], [], []>} : vector<64x4xbf16>, vector<4x16xbf16>, vector<64x16xf32> -> vector<64x16xf32>
    %152 = arith.addf %149, %151 : vector<64x16xf32>
    %c4_164 = arith.constant 4 : index
    %c0_165 = arith.constant 0 : index
    %153 = vector.load %arg2[%c4_164, %c0_165] : memref<36x16xbf16, #tpu.memory_space<vmem>>, vector<4x16xbf16>
    %cst_166 = arith.constant dense<0.000000e+00> : vector<64x16xf32>
    %154 = tpu.matmul %20, %153, %cst_166 {dimension_numbers = #tpu.dot_dimension_numbers<[1], [0], [0], [1], [0, 0, 1, 1], [], []>} : vector<64x4xbf16>, vector<4x16xbf16>, vector<64x16xf32> -> vector<64x16xf32>
    %155 = arith.addf %152, %154 : vector<64x16xf32>
    %c8_167 = arith.constant 8 : index
    %c0_168 = arith.constant 0 : index
    %156 = vector.load %arg2[%c8_167, %c0_168] : memref<36x16xbf16, #tpu.memory_space<vmem>>, vector<4x16xbf16>
    %cst_169 = arith.constant dense<0.000000e+00> : vector<64x16xf32>
    %157 = tpu.matmul %23, %156, %cst_169 {dimension_numbers = #tpu.dot_dimension_numbers<[1], [0], [0], [1], [0, 0, 1, 1], [], []>} : vector<64x4xbf16>, vector<4x16xbf16>, vector<64x16xf32> -> vector<64x16xf32>
    %158 = arith.addf %155, %157 : vector<64x16xf32>
    %c12_170 = arith.constant 12 : index
    %c0_171 = arith.constant 0 : index
    %159 = vector.load %arg2[%c12_170, %c0_171] : memref<36x16xbf16, #tpu.memory_space<vmem>>, vector<4x16xbf16>
    %cst_172 = arith.constant dense<0.000000e+00> : vector<64x16xf32>
    %160 = tpu.matmul %29, %159, %cst_172 {dimension_numbers = #tpu.dot_dimension_numbers<[1], [0], [0], [1], [0, 0, 1, 1], [], []>} : vector<64x4xbf16>, vector<4x16xbf16>, vector<64x16xf32> -> vector<64x16xf32>
    %161 = arith.addf %158, %160 : vector<64x16xf32>
    %c16_173 = arith.constant 16 : index
    %c0_174 = arith.constant 0 : index
    %162 = vector.load %arg2[%c16_173, %c0_174] : memref<36x16xbf16, #tpu.memory_space<vmem>>, vector<4x16xbf16>
    %cst_175 = arith.constant dense<0.000000e+00> : vector<64x16xf32>
    %163 = tpu.matmul %32, %162, %cst_175 {dimension_numbers = #tpu.dot_dimension_numbers<[1], [0], [0], [1], [0, 0, 1, 1], [], []>} : vector<64x4xbf16>, vector<4x16xbf16>, vector<64x16xf32> -> vector<64x16xf32>
    %164 = arith.addf %161, %163 : vector<64x16xf32>
    %c20_176 = arith.constant 20 : index
    %c0_177 = arith.constant 0 : index
    %165 = vector.load %arg2[%c20_176, %c0_177] : memref<36x16xbf16, #tpu.memory_space<vmem>>, vector<4x16xbf16>
    %cst_178 = arith.constant dense<0.000000e+00> : vector<64x16xf32>
    %166 = tpu.matmul %35, %165, %cst_178 {dimension_numbers = #tpu.dot_dimension_numbers<[1], [0], [0], [1], [0, 0, 1, 1], [], []>} : vector<64x4xbf16>, vector<4x16xbf16>, vector<64x16xf32> -> vector<64x16xf32>
    %167 = arith.addf %164, %166 : vector<64x16xf32>
    %c24_179 = arith.constant 24 : index
    %c0_180 = arith.constant 0 : index
    %168 = vector.load %arg2[%c24_179, %c0_180] : memref<36x16xbf16, #tpu.memory_space<vmem>>, vector<4x16xbf16>
    %cst_181 = arith.constant dense<0.000000e+00> : vector<64x16xf32>
    %169 = tpu.matmul %41, %168, %cst_181 {dimension_numbers = #tpu.dot_dimension_numbers<[1], [0], [0], [1], [0, 0, 1, 1], [], []>} : vector<64x4xbf16>, vector<4x16xbf16>, vector<64x16xf32> -> vector<64x16xf32>
    %170 = arith.addf %167, %169 : vector<64x16xf32>
    %c28_182 = arith.constant 28 : index
    %c0_183 = arith.constant 0 : index
    %171 = vector.load %arg2[%c28_182, %c0_183] : memref<36x16xbf16, #tpu.memory_space<vmem>>, vector<4x16xbf16>
    %cst_184 = arith.constant dense<0.000000e+00> : vector<64x16xf32>
    %172 = tpu.matmul %44, %171, %cst_184 {dimension_numbers = #tpu.dot_dimension_numbers<[1], [0], [0], [1], [0, 0, 1, 1], [], []>} : vector<64x4xbf16>, vector<4x16xbf16>, vector<64x16xf32> -> vector<64x16xf32>
    %173 = arith.addf %170, %172 : vector<64x16xf32>
    %c32_185 = arith.constant 32 : index
    %c0_186 = arith.constant 0 : index
    %174 = vector.load %arg2[%c32_185, %c0_186] : memref<36x16xbf16, #tpu.memory_space<vmem>>, vector<4x16xbf16>
    %cst_187 = arith.constant dense<0.000000e+00> : vector<64x16xf32>
    %175 = tpu.matmul %47, %174, %cst_187 {dimension_numbers = #tpu.dot_dimension_numbers<[1], [0], [0], [1], [0, 0, 1, 1], [], []>} : vector<64x4xbf16>, vector<4x16xbf16>, vector<64x16xf32> -> vector<64x16xf32>
    %176 = arith.addf %173, %175 : vector<64x16xf32>
    %c0_188 = arith.constant 0 : index
    %c0_189 = arith.constant 0 : index
    %177 = vector.load %arg3[%c0_188, %c0_189] : memref<1x16xf32, #tpu.memory_space<vmem>>, vector<1x16xf32>
    %178 = vector.broadcast %177 : vector<1x16xf32> to vector<64x16xf32>
    %179 = arith.addf %176, %178 : vector<64x16xf32>
    %cst_190 = arith.constant 0.000000e+00 : f32
    %180 = vector.broadcast %cst_190 : f32 to vector<64x16xf32>
    %181 = arith.maximumf %179, %180 : vector<64x16xf32>
    %182 = arith.maximumf %148, %181 : vector<64x16xf32>
    %cst_191 = arith.constant 0.000000e+00 : bf16
    %183 = vector.broadcast %cst_191 : bf16 to vector<1x1x10x16xbf16>
    %c0_192 = arith.constant 0 : index
    %c0_193 = arith.constant 0 : index
    %c0_194 = arith.constant 0 : index
    %c0_195 = arith.constant 0 : index
    %184 = vector.load %arg7[%c0_192, %c0_193, %c0_194, %c0_195] : memref<1x10x10x16xbf16, #tpu.memory_space<vmem>>, vector<1x1x10x16xbf16>
    tpu.vector_store %arg7[%c0_192, %c0_193, %c0_194, %c0_195], %183 {strides = array<i32>} : memref<1x10x10x16xbf16, #tpu.memory_space<vmem>>, vector<1x1x10x16xbf16>,
    %cst_196 = arith.constant 0.000000e+00 : bf16
    %185 = vector.broadcast %cst_196 : bf16 to vector<1x1x10x16xbf16>
    %c0_197 = arith.constant 0 : index
    %c9 = arith.constant 9 : index
    %c0_198 = arith.constant 0 : index
    %c0_199 = arith.constant 0 : index
    %186 = vector.load %arg7[%c0_197, %c9, %c0_198, %c0_199] : memref<1x10x10x16xbf16, #tpu.memory_space<vmem>>, vector<1x1x10x16xbf16>
    tpu.vector_store %arg7[%c0_197, %c9, %c0_198, %c0_199], %185 {strides = array<i32>} : memref<1x10x10x16xbf16, #tpu.memory_space<vmem>>, vector<1x1x10x16xbf16>,
    %cst_200 = arith.constant 0.000000e+00 : bf16
    %187 = vector.broadcast %cst_200 : bf16 to vector<1x10x1x16xbf16>
    %c0_201 = arith.constant 0 : index
    %c0_202 = arith.constant 0 : index
    %c0_203 = arith.constant 0 : index
    %c0_204 = arith.constant 0 : index
    %188 = vector.load %arg7[%c0_201, %c0_202, %c0_203, %c0_204] : memref<1x10x10x16xbf16, #tpu.memory_space<vmem>>, vector<1x10x1x16xbf16>
    tpu.vector_store %arg7[%c0_201, %c0_202, %c0_203, %c0_204], %187 {strides = array<i32>} : memref<1x10x10x16xbf16, #tpu.memory_space<vmem>>, vector<1x10x1x16xbf16>,
    %cst_205 = arith.constant 0.000000e+00 : bf16
    %189 = vector.broadcast %cst_205 : bf16 to vector<1x10x1x16xbf16>
    %c0_206 = arith.constant 0 : index
    %c0_207 = arith.constant 0 : index
    %c9_208 = arith.constant 9 : index
    %c0_209 = arith.constant 0 : index
    %190 = vector.load %arg7[%c0_206, %c0_207, %c9_208, %c0_209] : memref<1x10x10x16xbf16, #tpu.memory_space<vmem>>, vector<1x10x1x16xbf16>
    tpu.vector_store %arg7[%c0_206, %c0_207, %c9_208, %c0_209], %189 {strides = array<i32>} : memref<1x10x10x16xbf16, #tpu.memory_space<vmem>>, vector<1x10x1x16xbf16>,
    %191 = vector.shape_cast %182 : vector<64x16xf32> to vector<1x8x8x16xf32>
    %192 = arith.truncf %191 : vector<1x8x8x16xf32> to vector<1x8x8x16xbf16>
    %c0_210 = arith.constant 0 : index
    %c1_211 = arith.constant 1 : index
    %c1_212 = arith.constant 1 : index
    %c0_213 = arith.constant 0 : index
    %193 = vector.load %arg7[%c0_210, %c1_211, %c1_212, %c0_213] : memref<1x10x10x16xbf16, #tpu.memory_space<vmem>>, vector<1x8x8x16xbf16>
    tpu.vector_store %arg7[%c0_210, %c1_211, %c1_212, %c0_213], %192 {strides = array<i32>} : memref<1x10x10x16xbf16, #tpu.memory_space<vmem>>, vector<1x8x8x16xbf16>,
    %cst_214 = arith.constant 0.000000e+00 : f32
    %194 = vector.broadcast %cst_214 : f32 to vector<64x32xf32>
    %c0_215 = arith.constant 0 : index
    %c0_216 = arith.constant 0 : index
    %c0_217 = arith.constant 0 : index
    %c0_218 = arith.constant 0 : index
    %195 = vector.load %arg7[%c0_215, %c0_216, %c0_217, %c0_218] : memref<1x10x10x16xbf16, #tpu.memory_space<vmem>>, vector<1x8x8x16xbf16>
    %196 = vector.shape_cast %195 : vector<1x8x8x16xbf16> to vector<64x16xbf16>
    %c0_219 = arith.constant 0 : index
    %c0_220 = arith.constant 0 : index
    %197 = vector.load %arg4[%c0_219, %c0_220] : memref<144x32xbf16, #tpu.memory_space<vmem>>, vector<16x32xbf16>
    %cst_221 = arith.constant dense<0.000000e+00> : vector<64x32xf32>
    %198 = tpu.matmul %196, %197, %cst_221 {dimension_numbers = #tpu.dot_dimension_numbers<[1], [0], [0], [1], [0, 0, 1, 1], [], []>} : vector<64x16xbf16>, vector<16x32xbf16>, vector<64x32xf32> -> vector<64x32xf32>
    %199 = arith.addf %194, %198 : vector<64x32xf32>
    %c0_222 = arith.constant 0 : index
    %c0_223 = arith.constant 0 : index
    %c1_224 = arith.constant 1 : index
    %c0_225 = arith.constant 0 : index
    %200 = vector.load %arg7[%c0_222, %c0_223, %c1_224, %c0_225] : memref<1x10x10x16xbf16, #tpu.memory_space<vmem>>, vector<1x8x8x16xbf16>
    %201 = vector.shape_cast %200 : vector<1x8x8x16xbf16> to vector<64x16xbf16>
    %c16_226 = arith.constant 16 : index
    %c0_227 = arith.constant 0 : index
    %202 = vector.load %arg4[%c16_226, %c0_227] : memref<144x32xbf16, #tpu.memory_space<vmem>>, vector<16x32xbf16>
    %cst_228 = arith.constant dense<0.000000e+00> : vector<64x32xf32>
    %203 = tpu.matmul %201, %202, %cst_228 {dimension_numbers = #tpu.dot_dimension_numbers<[1], [0], [0], [1], [0, 0, 1, 1], [], []>} : vector<64x16xbf16>, vector<16x32xbf16>, vector<64x32xf32> -> vector<64x32xf32>
    %204 = arith.addf %199, %203 : vector<64x32xf32>
    %c0_229 = arith.constant 0 : index
    %c0_230 = arith.constant 0 : index
    %c2_231 = arith.constant 2 : index
    %c0_232 = arith.constant 0 : index
    %205 = vector.load %arg7[%c0_229, %c0_230, %c2_231, %c0_232] : memref<1x10x10x16xbf16, #tpu.memory_space<vmem>>, vector<1x8x8x16xbf16>
    %206 = vector.shape_cast %205 : vector<1x8x8x16xbf16> to vector<64x16xbf16>
    %c32_233 = arith.constant 32 : index
    %c0_234 = arith.constant 0 : index
    %207 = vector.load %arg4[%c32_233, %c0_234] : memref<144x32xbf16, #tpu.memory_space<vmem>>, vector<16x32xbf16>
    %cst_235 = arith.constant dense<0.000000e+00> : vector<64x32xf32>
    %208 = tpu.matmul %206, %207, %cst_235 {dimension_numbers = #tpu.dot_dimension_numbers<[1], [0], [0], [1], [0, 0, 1, 1], [], []>} : vector<64x16xbf16>, vector<16x32xbf16>, vector<64x32xf32> -> vector<64x32xf32>
    %209 = arith.addf %204, %208 : vector<64x32xf32>
    %c0_236 = arith.constant 0 : index
    %c1_237 = arith.constant 1 : index
    %c0_238 = arith.constant 0 : index
    %c0_239 = arith.constant 0 : index
    %210 = vector.load %arg7[%c0_236, %c1_237, %c0_238, %c0_239] : memref<1x10x10x16xbf16, #tpu.memory_space<vmem>>, vector<1x8x8x16xbf16>
    %211 = vector.shape_cast %210 : vector<1x8x8x16xbf16> to vector<64x16xbf16>
    %c48 = arith.constant 48 : index
    %c0_240 = arith.constant 0 : index
    %212 = vector.load %arg4[%c48, %c0_240] : memref<144x32xbf16, #tpu.memory_space<vmem>>, vector<16x32xbf16>
    %cst_241 = arith.constant dense<0.000000e+00> : vector<64x32xf32>
    %213 = tpu.matmul %211, %212, %cst_241 {dimension_numbers = #tpu.dot_dimension_numbers<[1], [0], [0], [1], [0, 0, 1, 1], [], []>} : vector<64x16xbf16>, vector<16x32xbf16>, vector<64x32xf32> -> vector<64x32xf32>
    %214 = arith.addf %209, %213 : vector<64x32xf32>
    %c0_242 = arith.constant 0 : index
    %c1_243 = arith.constant 1 : index
    %c1_244 = arith.constant 1 : index
    %c0_245 = arith.constant 0 : index
    %215 = vector.load %arg7[%c0_242, %c1_243, %c1_244, %c0_245] : memref<1x10x10x16xbf16, #tpu.memory_space<vmem>>, vector<1x8x8x16xbf16>
    %216 = vector.shape_cast %215 : vector<1x8x8x16xbf16> to vector<64x16xbf16>
    %c64 = arith.constant 64 : index
    %c0_246 = arith.constant 0 : index
    %217 = vector.load %arg4[%c64, %c0_246] : memref<144x32xbf16, #tpu.memory_space<vmem>>, vector<16x32xbf16>
    %cst_247 = arith.constant dense<0.000000e+00> : vector<64x32xf32>
    %218 = tpu.matmul %216, %217, %cst_247 {dimension_numbers = #tpu.dot_dimension_numbers<[1], [0], [0], [1], [0, 0, 1, 1], [], []>} : vector<64x16xbf16>, vector<16x32xbf16>, vector<64x32xf32> -> vector<64x32xf32>
    %219 = arith.addf %214, %218 : vector<64x32xf32>
    %c0_248 = arith.constant 0 : index
    %c1_249 = arith.constant 1 : index
    %c2_250 = arith.constant 2 : index
    %c0_251 = arith.constant 0 : index
    %220 = vector.load %arg7[%c0_248, %c1_249, %c2_250, %c0_251] : memref<1x10x10x16xbf16, #tpu.memory_space<vmem>>, vector<1x8x8x16xbf16>
    %221 = vector.shape_cast %220 : vector<1x8x8x16xbf16> to vector<64x16xbf16>
    %c80 = arith.constant 80 : index
    %c0_252 = arith.constant 0 : index
    %222 = vector.load %arg4[%c80, %c0_252] : memref<144x32xbf16, #tpu.memory_space<vmem>>, vector<16x32xbf16>
    %cst_253 = arith.constant dense<0.000000e+00> : vector<64x32xf32>
    %223 = tpu.matmul %221, %222, %cst_253 {dimension_numbers = #tpu.dot_dimension_numbers<[1], [0], [0], [1], [0, 0, 1, 1], [], []>} : vector<64x16xbf16>, vector<16x32xbf16>, vector<64x32xf32> -> vector<64x32xf32>
    %224 = arith.addf %219, %223 : vector<64x32xf32>
    %c0_254 = arith.constant 0 : index
    %c2_255 = arith.constant 2 : index
    %c0_256 = arith.constant 0 : index
    %c0_257 = arith.constant 0 : index
    %225 = vector.load %arg7[%c0_254, %c2_255, %c0_256, %c0_257] : memref<1x10x10x16xbf16, #tpu.memory_space<vmem>>, vector<1x8x8x16xbf16>
    %226 = vector.shape_cast %225 : vector<1x8x8x16xbf16> to vector<64x16xbf16>
    %c96 = arith.constant 96 : index
    %c0_258 = arith.constant 0 : index
    %227 = vector.load %arg4[%c96, %c0_258] : memref<144x32xbf16, #tpu.memory_space<vmem>>, vector<16x32xbf16>
    %cst_259 = arith.constant dense<0.000000e+00> : vector<64x32xf32>
    %228 = tpu.matmul %226, %227, %cst_259 {dimension_numbers = #tpu.dot_dimension_numbers<[1], [0], [0], [1], [0, 0, 1, 1], [], []>} : vector<64x16xbf16>, vector<16x32xbf16>, vector<64x32xf32> -> vector<64x32xf32>
    %229 = arith.addf %224, %228 : vector<64x32xf32>
    %c0_260 = arith.constant 0 : index
    %c2_261 = arith.constant 2 : index
    %c1_262 = arith.constant 1 : index
    %c0_263 = arith.constant 0 : index
    %230 = vector.load %arg7[%c0_260, %c2_261, %c1_262, %c0_263] : memref<1x10x10x16xbf16, #tpu.memory_space<vmem>>, vector<1x8x8x16xbf16>
    %231 = vector.shape_cast %230 : vector<1x8x8x16xbf16> to vector<64x16xbf16>
    %c112 = arith.constant 112 : index
    %c0_264 = arith.constant 0 : index
    %232 = vector.load %arg4[%c112, %c0_264] : memref<144x32xbf16, #tpu.memory_space<vmem>>, vector<16x32xbf16>
    %cst_265 = arith.constant dense<0.000000e+00> : vector<64x32xf32>
    %233 = tpu.matmul %231, %232, %cst_265 {dimension_numbers = #tpu.dot_dimension_numbers<[1], [0], [0], [1], [0, 0, 1, 1], [], []>} : vector<64x16xbf16>, vector<16x32xbf16>, vector<64x32xf32> -> vector<64x32xf32>
    %234 = arith.addf %229, %233 : vector<64x32xf32>
    %c0_266 = arith.constant 0 : index
    %c2_267 = arith.constant 2 : index
    %c2_268 = arith.constant 2 : index
    %c0_269 = arith.constant 0 : index
    %235 = vector.load %arg7[%c0_266, %c2_267, %c2_268, %c0_269] : memref<1x10x10x16xbf16, #tpu.memory_space<vmem>>, vector<1x8x8x16xbf16>
    %236 = vector.shape_cast %235 : vector<1x8x8x16xbf16> to vector<64x16xbf16>
    %c128 = arith.constant 128 : index
    %c0_270 = arith.constant 0 : index
    %237 = vector.load %arg4[%c128, %c0_270] : memref<144x32xbf16, #tpu.memory_space<vmem>>, vector<16x32xbf16>
    %cst_271 = arith.constant dense<0.000000e+00> : vector<64x32xf32>
    %238 = tpu.matmul %236, %237, %cst_271 {dimension_numbers = #tpu.dot_dimension_numbers<[1], [0], [0], [1], [0, 0, 1, 1], [], []>} : vector<64x16xbf16>, vector<16x32xbf16>, vector<64x32xf32> -> vector<64x32xf32>
    %239 = arith.addf %234, %238 : vector<64x32xf32>
    %c0_272 = arith.constant 0 : index
    %c0_273 = arith.constant 0 : index
    %240 = vector.load %arg5[%c0_272, %c0_273] : memref<1x32xf32, #tpu.memory_space<vmem>>, vector<1x32xf32>
    %241 = vector.broadcast %240 : vector<1x32xf32> to vector<64x32xf32>
    %242 = arith.addf %239, %241 : vector<64x32xf32>
    %cst_274 = arith.constant 0.000000e+00 : f32
    %243 = vector.broadcast %cst_274 : f32 to vector<64x32xf32>
    %244 = arith.maximumf %242, %243 : vector<64x32xf32>
    %245 = vector.shape_cast %244 : vector<64x32xf32> to vector<1x4x2x8x32xf32>
    %246 = vector.extract_strided_slice %245 {offsets = [0, 0, 0, 0, 0], sizes = [1, 4, 1, 8, 32], strides = [1, 1, 1, 1, 1]} : vector<1x4x2x8x32xf32> to vector<1x4x1x8x32xf32>
    %247 = vector.shape_cast %246 : vector<1x4x1x8x32xf32> to vector<1x4x8x32xf32>
    %248 = vector.extract_strided_slice %245 {offsets = [0, 0, 1, 0, 0], sizes = [1, 4, 1, 8, 32], strides = [1, 1, 1, 1, 1]} : vector<1x4x2x8x32xf32> to vector<1x4x1x8x32xf32>
    %249 = vector.shape_cast %248 : vector<1x4x1x8x32xf32> to vector<1x4x8x32xf32>
    %250 = arith.maximumf %247, %249 : vector<1x4x8x32xf32>
    %c0_275 = arith.constant 0 : index
    %c0_276 = arith.constant 0 : index
    %c0_277 = arith.constant 0 : index
    %c0_278 = arith.constant 0 : index
    %251 = vector.load %arg8[%c0_275, %c0_276, %c0_277, %c0_278] : memref<1x4x8x32xf32, #tpu.memory_space<vmem>>, vector<1x4x8x32xf32>
    tpu.vector_store %arg8[%c0_275, %c0_276, %c0_277, %c0_278], %250 {strides = array<i32>} : memref<1x4x8x32xf32, #tpu.memory_space<vmem>>, vector<1x4x8x32xf32>,
    %c0_279 = arith.constant 0 : index
    %c0_280 = arith.constant 0 : index
    %c0_281 = arith.constant 0 : index
    %c0_282 = arith.constant 0 : index
    %252 = tpu.strided_load %arg8[%c0_279, %c0_280, %c0_281, %c0_282] {strides = array<i32: 1, 1, 2, 1>} : memref<1x4x8x32xf32, #tpu.memory_space<vmem>>, vector<1x4x4x32xf32>
    %c0_283 = arith.constant 0 : index
    %c0_284 = arith.constant 0 : index
    %c1_285 = arith.constant 1 : index
    %c0_286 = arith.constant 0 : index
    %253 = tpu.strided_load %arg8[%c0_283, %c0_284, %c1_285, %c0_286] {strides = array<i32: 1, 1, 2, 1>} : memref<1x4x8x32xf32, #tpu.memory_space<vmem>>, vector<1x4x4x32xf32>
    %254 = arith.maximumf %252, %253 : vector<1x4x4x32xf32>
    %c0_287 = arith.constant 0 : index
    %c0_288 = arith.constant 0 : index
    %c0_289 = arith.constant 0 : index
    %c0_290 = arith.constant 0 : index
    %255 = vector.load %arg6[%c0_287, %c0_288, %c0_289, %c0_290] : memref<1x4x4x32xf32, #tpu.memory_space<vmem>>, vector<1x4x4x32xf32>
    tpu.vector_store %arg6[%c0_287, %c0_288, %c0_289, %c0_290], %254 {strides = array<i32>} : memref<1x4x4x32xf32, #tpu.memory_space<vmem>>, vector<1x4x4x32xf32>,
    return
  }
  func.func @transform_0(%arg0: i32) -> (i32, i32, i32, i32, i32) {
    %c0_i32 = arith.constant 0 : i32
    %c0_i32_0 = arith.constant 0 : i32
    %c0_i32_1 = arith.constant 0 : i32
    %c0_i32_2 = arith.constant 0 : i32
    %c0_i32_3 = arith.constant 0 : i32
    return %arg0, %c0_i32, %c0_i32_0, %c0_i32_1, %c0_i32_2 : i32, i32, i32, i32, i32
  }
  func.func @transform_1(%arg0: i32) -> (i32, i32) {
    %c0_i32 = arith.constant 0 : i32
    %c0_i32_0 = arith.constant 0 : i32
    %c0_i32_1 = arith.constant 0 : i32
    return %c0_i32, %c0_i32_0 : i32, i32
  }
  func.func @transform_2(%arg0: i32) -> (i32, i32) {
    %c0_i32 = arith.constant 0 : i32
    %c0_i32_0 = arith.constant 0 : i32
    %c0_i32_1 = arith.constant 0 : i32
    return %c0_i32, %c0_i32_0 : i32, i32
  }
  func.func @transform_3(%arg0: i32) -> (i32, i32) {
    %c0_i32 = arith.constant 0 : i32
    %c0_i32_0 = arith.constant 0 : i32
    %c0_i32_1 = arith.constant 0 : i32
    return %c0_i32, %c0_i32_0 : i32, i32
  }
  func.func @transform_4(%arg0: i32) -> (i32, i32) {
    %c0_i32 = arith.constant 0 : i32
    %c0_i32_0 = arith.constant 0 : i32
    %c0_i32_1 = arith.constant 0 : i32
    return %c0_i32, %c0_i32_0 : i32, i32
  }
  func.func @transform_5(%arg0: i32) -> (i32, i32, i32, i32) {
    %c0_i32 = arith.constant 0 : i32
    %c0_i32_0 = arith.constant 0 : i32
    %c0_i32_1 = arith.constant 0 : i32
    %c0_i32_2 = arith.constant 0 : i32
    return %arg0, %c0_i32, %c0_i32_0, %c0_i32_1 : i32, i32, i32, i32
  }
}

</mosaic_0001>

<llo_original>
// kernel: nn1_forward.1
$region0: #{nn1_forward.1}
  #allocation0 [shape = 'u32[]', space=smem, size = 0x4, offset = 0x4, fixed_abs, tag = 'smem constant byte address 0x4 - core index']
  #allocation1 [shape = 'u32[144,128]{1,0:T(1,128)}', space=vmem, size = 0x12000, scoped, tag = 'internal scratch']
  #allocation2 [shape = 'bf16[1,10,10,16]{3,2,1,0:T(8,128)(2,1)}', space=vmem, size = 0xa000, scoped, tag = 'scratch operand']
  #allocation3 [shape = 'f32[1,4,8,32]{3,2,1,0:T(8,128)}', space=vmem, size = 0x4000, scoped, tag = 'scratch operand']
  %s0 = inlined_call_operand.vmem [shape: bf16[2,4,9,9,4], index: 0, kind: input, shape index: {}]
  %s1 = inlined_call_operand.vmem [shape: bf16[36,16], index: 1, kind: input, shape index: {}]
  %s2 = inlined_call_operand.vmem [shape: f32[1,16], index: 2, kind: input, shape index: {}]
  %s3 = inlined_call_operand.vmem [shape: bf16[144,32], index: 3, kind: input, shape index: {}]
  %s4 = inlined_call_operand.vmem [shape: f32[1,32], index: 4, kind: input, shape index: {}]
  %s5 = inlined_call_operand.hbm [shape: f32[2,4,4,32], index: 5, kind: output, shape index: {}]
  %s6 = sld [smem:[#allocation0]]
  $region53: #{nn1_forward.1} parent=0
    _
  %s8 = ssub.s32 1, %s6
  %s9 = scalar_select 0, %s8, %s6
  $region1: #{nn1_forward.1} parent=0
    #allocation4 [shape = 'u8[16384]{0}', space=vmem, size = 0x4000, scoped, tag = 'output window, operand 0']
    #allocation5 [shape = 's32[2]{0}', space=sflag, size = 0x8, scoped, tag = 'scoped memory for nn1_forward.1']
    %10 = vsyncpa [#allocation5], 0
    %s11 = scalar_lea.sflag [#allocation5], 1
    %12 = vsyncpa %s11, 0
    loop: start=0, step=1, limit=4
    $region2: #{nn1_forward.1} parent=1 // loop_pre_header
      _
    $region3: #{nn1_forward.1} parent=1 // loop_header
      %s14 = sphi 0, %s18
      %p15 = scmp.ge.s32.totalorder %s14, 4
      %s24 = sphi 0, %s26
      %s27 = sphi 0, %s24
      %s28 = sphi 0, %s27
      %s44 = sphi 0, %s28
      %s48 = sphi 0, %s48
      %s50 = sphi 0, %s48
      %s51 = sphi 0, %s50
      %s65 = sphi 0, %s51
      %s69 = sphi 0, %s69
      %s71 = sphi 0, %s69
      %s72 = sphi 0, %s71
      %s86 = sphi 0, %s72
      %s90 = sphi 0, %s90
      %s92 = sphi 0, %s90
      %s93 = sphi 0, %s92
      %s107 = sphi 0, %s93
      %s111 = sphi 0, %s111
      %s113 = sphi 0, %s111
      %s114 = sphi 0, %s113
      %s128 = sphi 0, %s114
      %s134 = sphi 0, %s136
      %s137 = sphi 0, %s134
      %s138 = sphi 0, %s137
      %s154 = sphi 0, %s138
    $region4: #{nn1_forward.1} parent=1 // loop_header_branch
      %17 = sbr.rel (%p15) target = $region8
    $region5: #{nn1_forward.1} parent=1 // loop_body
      %s19 = ssub.s32 %s14, 1
      %s20 = ssub.s32 %s14, 2
      %s21 = sadd.s32 %s14, 1
      %s22 = ssub.s32 %s14, %s21
      %p23 = scmp.eq.s32.totalorder %s22, 0
      %s25 = sadd.s32 %s24, 1
      %s26 = scalar_select %p23, %s24, %s25
      %p29 = pneg %p23
      %p30 = scmp.eq.s32.totalorder %s14, 1
      %p31 = por %p29, %p30
      %p32 = scmp.ne.s32.totalorder %s24, %s27
      %p33 = scmp.eq.s32.totalorder %s14, 0
      %p34 = por %p32, %p33
      %p35 = scmp.ne.s32.totalorder %s24, %s27
      %p36 = scmp.eq.s32.totalorder %s19, 1
      %p37 = por %p35, %p36
      %p38 = scmp.ne.s32.totalorder %s27, %s28
      %p39 = scmp.eq.s32.totalorder %s19, 0
      %p40 = por %p38, %p39
      %p41 = scmp.ne.s32.totalorder %s27, %s28
      %p42 = scmp.eq.s32.totalorder %s20, 1
      %p43 = por %p41, %p42
      %p45 = scmp.ne.s32.totalorder %s28, %s44
      %p46 = scmp.eq.s32.totalorder %s20, 0
      %p47 = por %p45, %p46
      %s49 = sadd.s32 %s48, 1
      %p52 = scmp.eq.s32.totalorder %s14, 1
      %p53 = scmp.ne.s32.totalorder %s48, %s50
      %p54 = scmp.eq.s32.totalorder %s14, 0
      %p55 = por %p53, %p54
      %p56 = scmp.ne.s32.totalorder %s48, %s50
      %p57 = scmp.eq.s32.totalorder %s19, 1
      %p58 = por %p56, %p57
      %p59 = scmp.ne.s32.totalorder %s50, %s51
      %p60 = scmp.eq.s32.totalorder %s19, 0
      %p61 = por %p59, %p60
      %p62 = scmp.ne.s32.totalorder %s50, %s51
      %p63 = scmp.eq.s32.totalorder %s20, 1
      %p64 = por %p62, %p63
      %p66 = scmp.ne.s32.totalorder %s51, %s65
      %p67 = scmp.eq.s32.totalorder %s20, 0
      %p68 = por %p66, %p67
      %s70 = sadd.s32 %s69, 1
      %p73 = scmp.eq.s32.totalorder %s14, 1
      %p74 = scmp.ne.s32.totalorder %s69, %s71
      %p75 = scmp.eq.s32.totalorder %s14, 0
      %p76 = por %p74, %p75
      %p77 = scmp.ne.s32.totalorder %s69, %s71
      %p78 = scmp.eq.s32.totalorder %s19, 1
      %p79 = por %p77, %p78
      %p80 = scmp.ne.s32.totalorder %s71, %s72
      %p81 = scmp.eq.s32.totalorder %s19, 0
      %p82 = por %p80, %p81
      %p83 = scmp.ne.s32.totalorder %s71, %s72
      %p84 = scmp.eq.s32.totalorder %s20, 1
      %p85 = por %p83, %p84
      %p87 = scmp.ne.s32.totalorder %s72, %s86
      %p88 = scmp.eq.s32.totalorder %s20, 0
      %p89 = por %p87, %p88
      %s91 = sadd.s32 %s90, 1
      %p94 = scmp.eq.s32.totalorder %s14, 1
      %p95 = scmp.ne.s32.totalorder %s90, %s92
      %p96 = scmp.eq.s32.totalorder %s14, 0
      %p97 = por %p95, %p96
      %p98 = scmp.ne.s32.totalorder %s90, %s92
      %p99 = scmp.eq.s32.totalorder %s19, 1
      %p100 = por %p98, %p99
      %p101 = scmp.ne.s32.totalorder %s92, %s93
      %p102 = scmp.eq.s32.totalorder %s19, 0
      %p103 = por %p101, %p102
      %p104 = scmp.ne.s32.totalorder %s92, %s93
      %p105 = scmp.eq.s32.totalorder %s20, 1
      %p106 = por %p104, %p105
      %p108 = scmp.ne.s32.totalorder %s93, %s107
      %p109 = scmp.eq.s32.totalorder %s20, 0
      %p110 = por %p108, %p109
      %s112 = sadd.s32 %s111, 1
      %p115 = scmp.eq.s32.totalorder %s14, 1
      %p116 = scmp.ne.s32.totalorder %s111, %s113
      %p117 = scmp.eq.s32.totalorder %s14, 0
      %p118 = por %p116, %p117
      %p119 = scmp.ne.s32.totalorder %s111, %s113
      %p120 = scmp.eq.s32.totalorder %s19, 1
      %p121 = por %p119, %p120
      %p122 = scmp.ne.s32.totalorder %s113, %s114
      %p123 = scmp.eq.s32.totalorder %s19, 0
      %p124 = por %p122, %p123
      %p125 = scmp.ne.s32.totalorder %s113, %s114
      %p126 = scmp.eq.s32.totalorder %s20, 1
      %p127 = por %p125, %p126
      %p129 = scmp.ne.s32.totalorder %s114, %s128
      %p130 = scmp.eq.s32.totalorder %s20, 0
      %p131 = por %p129, %p130
      %s132 = ssub.s32 %s14, %s21
      %p133 = scmp.eq.s32.totalorder %s132, 0
      %s135 = sadd.s32 %s134, 1
      %s136 = scalar_select %p133, %s134, %s135
      %p139 = pneg %p133
      %p140 = scmp.eq.s32.totalorder %s14, 1
      %p141 = por %p139, %p140
      %p142 = scmp.ne.s32.totalorder %s134, %s137
      %p143 = scmp.eq.s32.totalorder %s14, 0
      %p144 = por %p142, %p143
      %p145 = scmp.ne.s32.totalorder %s134, %s137
      %p146 = scmp.eq.s32.totalorder %s19, 1
      %p147 = por %p145, %p146
      %p148 = scmp.ne.s32.totalorder %s137, %s138
      %p149 = scmp.eq.s32.totalorder %s19, 0
      %p150 = por %p148, %p149
      %p151 = scmp.ne.s32.totalorder %s137, %s138
      %p152 = scmp.eq.s32.totalorder %s20, 1
      %p153 = por %p151, %p152
      %p155 = scmp.ne.s32.totalorder %s138, %s154
      %p156 = scmp.eq.s32.totalorder %s20, 0
      %p157 = por %p155, %p156
      %p158 = scmp.le.s32.totalorder 1, %s14
      %p159 = scmp.lt.s32.totalorder %s14, 3
      %p160 = pnand %p158, %p159
      %p161 = pneg %p160
      // Predicated region
      $region9: #{nn1_forward.1} parent=5 // pred_check
        _
      $region10: #{nn1_forward.1} parent=5 // pred_check_branch
        %163 = sbr.rel (%p160) target = $region12
      $region11: #{nn1_forward.1} parent=5 // pred_region
        %s164 = ssub.s32 %s14, 1
        // Predicated region
        $region13: #{nn1_forward.1} parent=11 // pred_check
          %p165 = pneg %p61
        $region14: #{nn1_forward.1} parent=11 // pred_check_branch
          %167 = sbr.rel (%p165) target = $region16
        $region15: #{nn1_forward.1} parent=11 // pred_region
          _
        $region16: #{nn1_forward.1} parent=11 // pred_fallthru
          _
        // Predicated region
        $region17: #{nn1_forward.1} parent=11 // pred_check
          %p168 = pneg %p82
        $region18: #{nn1_forward.1} parent=11 // pred_check_branch
          %170 = sbr.rel (%p168) target = $region20
        $region19: #{nn1_forward.1} parent=11 // pred_region
          _
        $region20: #{nn1_forward.1} parent=11 // pred_fallthru
          _
        // Predicated region
        $region21: #{nn1_forward.1} parent=11 // pred_check
          %p171 = pneg %p103
        $region22: #{nn1_forward.1} parent=11 // pred_check_branch
          %173 = sbr.rel (%p171) target = $region24
        $region23: #{nn1_forward.1} parent=11 // pred_region
          _
        $region24: #{nn1_forward.1} parent=11 // pred_fallthru
          _
        // Predicated region
        $region25: #{nn1_forward.1} parent=11 // pred_check
          %p174 = pneg %p124
        $region26: #{nn1_forward.1} parent=11 // pred_check_branch
          %176 = sbr.rel (%p174) target = $region28
        $region27: #{nn1_forward.1} parent=11 // pred_region
          _
        $region28: #{nn1_forward.1} parent=11 // pred_fallthru
          _
      $region12: #{nn1_forward.1} parent=5 // pred_fallthru
        _
      %p177 = scmp.lt.s32.totalorder %s14, 2
      // Predicated region
      $region29: #{nn1_forward.1} parent=5 // pred_check
        %p178 = pneg %p177
      $region30: #{nn1_forward.1} parent=5 // pred_check_branch
        %180 = sbr.rel (%p178) target = $region32
      $region31: #{nn1_forward.1} parent=5 // pred_region
        // Predicated region
        $region33: #{nn1_forward.1} parent=31 // pred_check
          %p181 = pneg %p34
        $region34: #{nn1_forward.1} parent=31 // pred_check_branch
          %183 = sbr.rel (%p181) target = $region36
        $region35: #{nn1_forward.1} parent=31 // pred_region
          %p184 = scmp.lt.s32.totalorder %s14, 1
          %s185 = scalar_select %p184, %s14, 1
          %s186 = smul.addr %s185, 72
          %s187 = smul.addr %s186, 4
          %s188 = scalar_lea.vmem %s0, %s187
        $region36: #{nn1_forward.1} parent=31 // pred_fallthru
          _
      $region32: #{nn1_forward.1} parent=5 // pred_fallthru
        _
      %p189 = scmp.le.s32.totalorder 1, %s14
      %p190 = scmp.lt.s32.totalorder %s14, 3
      %p191 = pnand %p189, %p190
      %p192 = pneg %p191
      // Predicated region
      $region37: #{nn1_forward.1} parent=5 // pred_check
        _
      $region38: #{nn1_forward.1} parent=5 // pred_check_branch
        %194 = sbr.rel (%p191) target = $region40
      $region39: #{nn1_forward.1} parent=5 // pred_region
        %s195 = ssub.s32 %s14, 1
        %p196 = scmp.lt.s32.totalorder %s19, 1
        %s197 = scalar_select %p196, %s19, 1
        %s198 = smul.addr %s197, 72
        %s199 = smul.addr %s198, 4
        %s200 = scalar_lea.vmem %s0, %s199
        %p201 = pneg %p40
        %p202 = pneg %p37
        %p203 = pneg %p61
        %p204 = pneg %p58
        %p205 = pneg %p82
        %p206 = pneg %p79
        %p207 = pneg %p103
        %p208 = pneg %p100
        %p209 = pneg %p124
        %p210 = pneg %p121
        %p211 = pneg %p150
        %p212 = pneg %p147
        %s213 = sand.u32 %s137, 1
        %s214 = scalar_lea.sflag [#allocation5], %s213
        %s215 = sand.u32 %s137, 1
        %s216 = smul.addr %s215, 16
        %s217 = scalar_lea.vmem [#allocation4], %s216
        %p218 = scmp.lt.s32.totalorder %s19, 1
        %s219 = scalar_select %p218, %s19, 1
        %s220 = smul.addr %s219, 72
        %s221 = smul.addr %s220, 4
        %s222 = scalar_lea.vmem %s0, %s221
        %v224 = vld [vmem:[%s222] sm:$0xf]
        %v225 = vld [vmem:[%s222 + $0x8] sm:$0xf]
        %v226 = vld [vmem:[%s222 + $0x10] sm:$0xf]
        %v227 = vld [vmem:[%s222 + $0x18] sm:$0xf]
        %v228 = vld [vmem:[%s222 + $0x20] sm:$0xf]
        %v229 = vld [vmem:[%s222 + $0x28] sm:$0xf]
        %v230 = vld [vmem:[%s222 + $0x30] sm:$0xf]
        %v231 = vld [vmem:[%s222 + $0x38] sm:$0xf]
        %s232 = scalar_lea.vmem %s222, 72
        %v233 = vld [vmem:[%s232] sm:$0xf]
        %v234 = vld [vmem:[%s232 + $0x8] sm:$0xf]
        %v235 = vld [vmem:[%s232 + $0x10] sm:$0xf]
        %v236 = vld [vmem:[%s232 + $0x18] sm:$0xf]
        %v237 = vld [vmem:[%s232 + $0x20] sm:$0xf]
        %v238 = vld [vmem:[%s232 + $0x28] sm:$0xf]
        %v239 = vld [vmem:[%s232 + $0x30] sm:$0xf]
        %v240 = vld [vmem:[%s232 + $0x38] sm:$0xf]
        %v241 = vld [vmem:[%s222 + $0x4] sm:$0x1]
        %v242 = vld [vmem:[%s222 + $0xc] sm:$0x1]
        %v243 = vld [vmem:[%s222 + $0x14] sm:$0x1]
        %v244 = vld [vmem:[%s222 + $0x1c] sm:$0x1]
        %v245 = vld [vmem:[%s222 + $0x24] sm:$0x1]
        %v246 = vld [vmem:[%s222 + $0x2c] sm:$0x1]
        %v247 = vld [vmem:[%s222 + $0x34] sm:$0x1]
        %v248 = vld [vmem:[%s222 + $0x3c] sm:$0x1]
        %vm249 = vsmask.f32 3328
        %vm250 = vsmask.f32 7440
        %vm251 = vmor %vm249, %vm250
        %v253 = vshrl.u32 %v224, 16
        %v255 = vrot.slane %v253, 4
        %v256 = vshll.u32 %v224, 16
        %v258 = vrot.slane %v256, 5
        %v259 = vor.u32 %v255, %v258
        %v260 = vrot.slane %v259, 4
        %v262 = vshll.u32 %v241, 16
        %v264 = vrot.slane %v262, 5
        %v265 = vsel %vm251, %v260, %v264
        %v267 = vshrl.u32 %v225, 16
        %v269 = vrot.slane %v267, 4
        %v270 = vshll.u32 %v225, 16
        %v272 = vrot.slane %v270, 5
        %v273 = vor.u32 %v269, %v272
        %v274 = vrot.slane %v273, 4
        %v276 = vshll.u32 %v242, 16
        %v278 = vrot.slane %v276, 5
        %v279 = vsel %vm251, %v274, %v278
        %v281 = vshrl.u32 %v226, 16
        %v283 = vrot.slane %v281, 4
        %v284 = vshll.u32 %v226, 16
        %v286 = vrot.slane %v284, 5
        %v287 = vor.u32 %v283, %v286
        %v288 = vrot.slane %v287, 4
        %v290 = vshll.u32 %v243, 16
        %v292 = vrot.slane %v290, 5
        %v293 = vsel %vm251, %v288, %v292
        %v295 = vshrl.u32 %v227, 16
        %v297 = vrot.slane %v295, 4
        %v298 = vshll.u32 %v227, 16
        %v300 = vrot.slane %v298, 5
        %v301 = vor.u32 %v297, %v300
        %v302 = vrot.slane %v301, 4
        %v304 = vshll.u32 %v244, 16
        %v306 = vrot.slane %v304, 5
        %v307 = vsel %vm251, %v302, %v306
        %v309 = vshrl.u32 %v228, 16
        %v311 = vrot.slane %v309, 4
        %v312 = vshll.u32 %v228, 16
        %v314 = vrot.slane %v312, 5
        %v315 = vor.u32 %v311, %v314
        %v316 = vrot.slane %v315, 4
        %v318 = vshll.u32 %v245, 16
        %v320 = vrot.slane %v318, 5
        %v321 = vsel %vm251, %v316, %v320
        %v323 = vshrl.u32 %v229, 16
        %v325 = vrot.slane %v323, 4
        %v326 = vshll.u32 %v229, 16
        %v328 = vrot.slane %v326, 5
        %v329 = vor.u32 %v325, %v328
        %v330 = vrot.slane %v329, 4
        %v332 = vshll.u32 %v246, 16
        %v334 = vrot.slane %v332, 5
        %v335 = vsel %vm251, %v330, %v334
        %v337 = vshrl.u32 %v230, 16
        %v339 = vrot.slane %v337, 4
        %v340 = vshll.u32 %v230, 16
        %v342 = vrot.slane %v340, 5
        %v343 = vor.u32 %v339, %v342
        %v344 = vrot.slane %v343, 4
        %v346 = vshll.u32 %v247, 16
        %v348 = vrot.slane %v346, 5
        %v349 = vsel %vm251, %v344, %v348
        %v351 = vshrl.u32 %v231, 16
        %v353 = vrot.slane %v351, 4
        %v354 = vshll.u32 %v231, 16
        %v356 = vrot.slane %v354, 5
        %v357 = vor.u32 %v353, %v356
        %v358 = vrot.slane %v357, 4
        %v360 = vshll.u32 %v248, 16
        %v362 = vrot.slane %v360, 5
        %v363 = vsel %vm251, %v358, %v362
        %v364 = vld [vmem:[%s232 + $0x4] sm:$0x1]
        %v365 = vld [vmem:[%s232 + $0xc] sm:$0x1]
        %v366 = vld [vmem:[%s232 + $0x14] sm:$0x1]
        %v367 = vld [vmem:[%s232 + $0x1c] sm:$0x1]
        %v368 = vld [vmem:[%s232 + $0x24] sm:$0x1]
        %v369 = vld [vmem:[%s232 + $0x2c] sm:$0x1]
        %v370 = vld [vmem:[%s232 + $0x34] sm:$0x1]
        %v371 = vld [vmem:[%s232 + $0x3c] sm:$0x1]
        %v373 = vshrl.u32 %v233, 16
        %v375 = vrot.slane %v373, 4
        %v376 = vshll.u32 %v233, 16
        %v378 = vrot.slane %v376, 5
        %v379 = vor.u32 %v375, %v378
        %v380 = vrot.slane %v379, 4
        %v382 = vshll.u32 %v364, 16
        %v384 = vrot.slane %v382, 5
        %v385 = vsel %vm251, %v380, %v384
        %v387 = vshrl.u32 %v234, 16
        %v389 = vrot.slane %v387, 4
        %v390 = vshll.u32 %v234, 16
        %v392 = vrot.slane %v390, 5
        %v393 = vor.u32 %v389, %v392
        %v394 = vrot.slane %v393, 4
        %v396 = vshll.u32 %v365, 16
        %v398 = vrot.slane %v396, 5
        %v399 = vsel %vm251, %v394, %v398
        %v401 = vshrl.u32 %v235, 16
        %v403 = vrot.slane %v401, 4
        %v404 = vshll.u32 %v235, 16
        %v406 = vrot.slane %v404, 5
        %v407 = vor.u32 %v403, %v406
        %v408 = vrot.slane %v407, 4
        %v410 = vshll.u32 %v366, 16
        %v412 = vrot.slane %v410, 5
        %v413 = vsel %vm251, %v408, %v412
        %v415 = vshrl.u32 %v236, 16
        %v417 = vrot.slane %v415, 4
        %v418 = vshll.u32 %v236, 16
        %v420 = vrot.slane %v418, 5
        %v421 = vor.u32 %v417, %v420
        %v422 = vrot.slane %v421, 4
        %v424 = vshll.u32 %v367, 16
        %v426 = vrot.slane %v424, 5
        %v427 = vsel %vm251, %v422, %v426
        %v429 = vshrl.u32 %v237, 16
        %v431 = vrot.slane %v429, 4
        %v432 = vshll.u32 %v237, 16
        %v434 = vrot.slane %v432, 5
        %v435 = vor.u32 %v431, %v434
        %v436 = vrot.slane %v435, 4
        %v438 = vshll.u32 %v368, 16
        %v440 = vrot.slane %v438, 5
        %v441 = vsel %vm251, %v436, %v440
        %v443 = vshrl.u32 %v238, 16
        %v445 = vrot.slane %v443, 4
        %v446 = vshll.u32 %v238, 16
        %v448 = vrot.slane %v446, 5
        %v449 = vor.u32 %v445, %v448
        %v450 = vrot.slane %v449, 4
        %v452 = vshll.u32 %v369, 16
        %v454 = vrot.slane %v452, 5
        %v455 = vsel %vm251, %v450, %v454
        %v457 = vshrl.u32 %v239, 16
        %v459 = vrot.slane %v457, 4
        %v460 = vshll.u32 %v239, 16
        %v462 = vrot.slane %v460, 5
        %v463 = vor.u32 %v459, %v462
        %v464 = vrot.slane %v463, 4
        %v466 = vshll.u32 %v370, 16
        %v468 = vrot.slane %v466, 5
        %v469 = vsel %vm251, %v464, %v468
        %v471 = vshrl.u32 %v240, 16
        %v473 = vrot.slane %v471, 4
        %v474 = vshll.u32 %v240, 16
        %v476 = vrot.slane %v474, 5
        %v477 = vor.u32 %v473, %v476
        %v478 = vrot.slane %v477, 4
        %v480 = vshll.u32 %v371, 16
        %v482 = vrot.slane %v480, 5
        %v483 = vsel %vm251, %v478, %v482
        %s484 = scalar_lea.vmem %s222, 144
        %v485 = vld [vmem:[%s484] sm:$0xf]
        %v486 = vld [vmem:[%s484 + $0x8] sm:$0xf]
        %v487 = vld [vmem:[%s484 + $0x10] sm:$0xf]
        %v488 = vld [vmem:[%s484 + $0x18] sm:$0xf]
        %v489 = vld [vmem:[%s484 + $0x20] sm:$0xf]
        %v490 = vld [vmem:[%s484 + $0x28] sm:$0xf]
        %v491 = vld [vmem:[%s484 + $0x30] sm:$0xf]
        %v492 = vld [vmem:[%s484 + $0x38] sm:$0xf]
        %s493 = scalar_lea.vmem %s222, 216
        %v494 = vld [vmem:[%s493] sm:$0xf]
        %v495 = vld [vmem:[%s493 + $0x8] sm:$0xf]
        %v496 = vld [vmem:[%s493 + $0x10] sm:$0xf]
        %v497 = vld [vmem:[%s493 + $0x18] sm:$0xf]
        %v498 = vld [vmem:[%s493 + $0x20] sm:$0xf]
        %v499 = vld [vmem:[%s493 + $0x28] sm:$0xf]
        %v500 = vld [vmem:[%s493 + $0x30] sm:$0xf]
        %v501 = vld [vmem:[%s493 + $0x38] sm:$0xf]
        %v502 = vld [vmem:[%s484 + $0x4] sm:$0x1]
        %v503 = vld [vmem:[%s484 + $0xc] sm:$0x1]
        %v504 = vld [vmem:[%s484 + $0x14] sm:$0x1]
        %v505 = vld [vmem:[%s484 + $0x1c] sm:$0x1]
        %v506 = vld [vmem:[%s484 + $0x24] sm:$0x1]
        %v507 = vld [vmem:[%s484 + $0x2c] sm:$0x1]
        %v508 = vld [vmem:[%s484 + $0x34] sm:$0x1]
        %v509 = vld [vmem:[%s484 + $0x3c] sm:$0x1]
        %v511 = vshrl.u32 %v485, 16
        %v513 = vrot.slane %v511, 4
        %v514 = vshll.u32 %v485, 16
        %v516 = vrot.slane %v514, 5
        %v517 = vor.u32 %v513, %v516
        %v518 = vrot.slane %v517, 4
        %v520 = vshll.u32 %v502, 16
        %v522 = vrot.slane %v520, 5
        %v523 = vsel %vm251, %v518, %v522
        %v525 = vshrl.u32 %v486, 16
        %v527 = vrot.slane %v525, 4
        %v528 = vshll.u32 %v486, 16
        %v530 = vrot.slane %v528, 5
        %v531 = vor.u32 %v527, %v530
        %v532 = vrot.slane %v531, 4
        %v534 = vshll.u32 %v503, 16
        %v536 = vrot.slane %v534, 5
        %v537 = vsel %vm251, %v532, %v536
        %v539 = vshrl.u32 %v487, 16
        %v541 = vrot.slane %v539, 4
        %v542 = vshll.u32 %v487, 16
        %v544 = vrot.slane %v542, 5
        %v545 = vor.u32 %v541, %v544
        %v546 = vrot.slane %v545, 4
        %v548 = vshll.u32 %v504, 16
        %v550 = vrot.slane %v548, 5
        %v551 = vsel %vm251, %v546, %v550
        %v553 = vshrl.u32 %v488, 16
        %v555 = vrot.slane %v553, 4
        %v556 = vshll.u32 %v488, 16
        %v558 = vrot.slane %v556, 5
        %v559 = vor.u32 %v555, %v558
        %v560 = vrot.slane %v559, 4
        %v562 = vshll.u32 %v505, 16
        %v564 = vrot.slane %v562, 5
        %v565 = vsel %vm251, %v560, %v564
        %v567 = vshrl.u32 %v489, 16
        %v569 = vrot.slane %v567, 4
        %v570 = vshll.u32 %v489, 16
        %v572 = vrot.slane %v570, 5
        %v573 = vor.u32 %v569, %v572
        %v574 = vrot.slane %v573, 4
        %v576 = vshll.u32 %v506, 16
        %v578 = vrot.slane %v576, 5
        %v579 = vsel %vm251, %v574, %v578
        %v581 = vshrl.u32 %v490, 16
        %v583 = vrot.slane %v581, 4
        %v584 = vshll.u32 %v490, 16
        %v586 = vrot.slane %v584, 5
        %v587 = vor.u32 %v583, %v586
        %v588 = vrot.slane %v587, 4
        %v590 = vshll.u32 %v507, 16
        %v592 = vrot.slane %v590, 5
        %v593 = vsel %vm251, %v588, %v592
        %v595 = vshrl.u32 %v491, 16
        %v597 = vrot.slane %v595, 4
        %v598 = vshll.u32 %v491, 16
        %v600 = vrot.slane %v598, 5
        %v601 = vor.u32 %v597, %v600
        %v602 = vrot.slane %v601, 4
        %v604 = vshll.u32 %v508, 16
        %v606 = vrot.slane %v604, 5
        %v607 = vsel %vm251, %v602, %v606
        %v609 = vshrl.u32 %v492, 16
        %v611 = vrot.slane %v609, 4
        %v612 = vshll.u32 %v492, 16
        %v614 = vrot.slane %v612, 5
        %v615 = vor.u32 %v611, %v614
        %v616 = vrot.slane %v615, 4
        %v618 = vshll.u32 %v509, 16
        %v620 = vrot.slane %v618, 5
        %v621 = vsel %vm251, %v616, %v620
        %v622 = vld [vmem:[%s493 + $0x4] sm:$0x1]
        %v623 = vld [vmem:[%s493 + $0xc] sm:$0x1]
        %v624 = vld [vmem:[%s493 + $0x14] sm:$0x1]
        %v625 = vld [vmem:[%s493 + $0x1c] sm:$0x1]
        %v626 = vld [vmem:[%s493 + $0x24] sm:$0x1]
        %v627 = vld [vmem:[%s493 + $0x2c] sm:$0x1]
        %v628 = vld [vmem:[%s493 + $0x34] sm:$0x1]
        %v629 = vld [vmem:[%s493 + $0x3c] sm:$0x1]
        %v631 = vshrl.u32 %v494, 16
        %v633 = vrot.slane %v631, 4
        %v634 = vshll.u32 %v494, 16
        %v636 = vrot.slane %v634, 5
        %v637 = vor.u32 %v633, %v636
        %v638 = vrot.slane %v637, 4
        %v640 = vshll.u32 %v622, 16
        %v642 = vrot.slane %v640, 5
        %v643 = vsel %vm251, %v638, %v642
        %v645 = vshrl.u32 %v495, 16
        %v647 = vrot.slane %v645, 4
        %v648 = vshll.u32 %v495, 16
        %v650 = vrot.slane %v648, 5
        %v651 = vor.u32 %v647, %v650
        %v652 = vrot.slane %v651, 4
        %v654 = vshll.u32 %v623, 16
        %v656 = vrot.slane %v654, 5
        %v657 = vsel %vm251, %v652, %v656
        %v659 = vshrl.u32 %v496, 16
        %v661 = vrot.slane %v659, 4
        %v662 = vshll.u32 %v496, 16
        %v664 = vrot.slane %v662, 5
        %v665 = vor.u32 %v661, %v664
        %v666 = vrot.slane %v665, 4
        %v668 = vshll.u32 %v624, 16
        %v670 = vrot.slane %v668, 5
        %v671 = vsel %vm251, %v666, %v670
        %v673 = vshrl.u32 %v497, 16
        %v675 = vrot.slane %v673, 4
        %v676 = vshll.u32 %v497, 16
        %v678 = vrot.slane %v676, 5
        %v679 = vor.u32 %v675, %v678
        %v680 = vrot.slane %v679, 4
        %v682 = vshll.u32 %v625, 16
        %v684 = vrot.slane %v682, 5
        %v685 = vsel %vm251, %v680, %v684
        %v687 = vshrl.u32 %v498, 16
        %v689 = vrot.slane %v687, 4
        %v690 = vshll.u32 %v498, 16
        %v692 = vrot.slane %v690, 5
        %v693 = vor.u32 %v689, %v692
        %v694 = vrot.slane %v693, 4
        %v696 = vshll.u32 %v626, 16
        %v698 = vrot.slane %v696, 5
        %v699 = vsel %vm251, %v694, %v698
        %v701 = vshrl.u32 %v499, 16
        %v703 = vrot.slane %v701, 4
        %v704 = vshll.u32 %v499, 16
        %v706 = vrot.slane %v704, 5
        %v707 = vor.u32 %v703, %v706
        %v708 = vrot.slane %v707, 4
        %v710 = vshll.u32 %v627, 16
        %v712 = vrot.slane %v710, 5
        %v713 = vsel %vm251, %v708, %v712
        %v715 = vshrl.u32 %v500, 16
        %v717 = vrot.slane %v715, 4
        %v718 = vshll.u32 %v500, 16
        %v720 = vrot.slane %v718, 5
        %v721 = vor.u32 %v717, %v720
        %v722 = vrot.slane %v721, 4
        %v724 = vshll.u32 %v628, 16
        %v726 = vrot.slane %v724, 5
        %v727 = vsel %vm251, %v722, %v726
        %v729 = vshrl.u32 %v501, 16
        %v731 = vrot.slane %v729, 4
        %v732 = vshll.u32 %v501, 16
        %v734 = vrot.slane %v732, 5
        %v735 = vor.u32 %v731, %v734
        %v736 = vrot.slane %v735, 4
        %v738 = vshll.u32 %v629, 16
        %v740 = vrot.slane %v738, 5
        %v741 = vsel %vm251, %v736, %v740
        %s742 = scalar_lea.vmem %s222, 8
        %v743 = vld [vmem:[%s742] sm:$0xf]
        %v744 = vld [vmem:[%s742 + $0x8] sm:$0xf]
        %v745 = vld [vmem:[%s742 + $0x10] sm:$0xf]
        %v746 = vld [vmem:[%s742 + $0x18] sm:$0xf]
        %v747 = vld [vmem:[%s742 + $0x20] sm:$0xf]
        %v748 = vld [vmem:[%s742 + $0x28] sm:$0xf]
        %v749 = vld [vmem:[%s742 + $0x30] sm:$0xf]
        %v750 = vld [vmem:[%s742 + $0x38] sm:$0xf]
        %s751 = scalar_lea.vmem %s222, 80
        %v752 = vld [vmem:[%s751] sm:$0xf]
        %v753 = vld [vmem:[%s751 + $0x8] sm:$0xf]
        %v754 = vld [vmem:[%s751 + $0x10] sm:$0xf]
        %v755 = vld [vmem:[%s751 + $0x18] sm:$0xf]
        %v756 = vld [vmem:[%s751 + $0x20] sm:$0xf]
        %v757 = vld [vmem:[%s751 + $0x28] sm:$0xf]
        %v758 = vld [vmem:[%s751 + $0x30] sm:$0xf]
        %v759 = vld [vmem:[%s751 + $0x38] sm:$0xf]
        %v760 = vld [vmem:[%s742 + $0x4] sm:$0x1]
        %v761 = vld [vmem:[%s742 + $0xc] sm:$0x1]
        %v762 = vld [vmem:[%s742 + $0x14] sm:$0x1]
        %v763 = vld [vmem:[%s742 + $0x1c] sm:$0x1]
        %v764 = vld [vmem:[%s742 + $0x24] sm:$0x1]
        %v765 = vld [vmem:[%s742 + $0x2c] sm:$0x1]
        %v766 = vld [vmem:[%s742 + $0x34] sm:$0x1]
        %v767 = vld [vmem:[%s742 + $0x3c] sm:$0x1]
        %v769 = vshrl.u32 %v743, 16
        %v771 = vrot.slane %v769, 4
        %v772 = vshll.u32 %v743, 16
        %v774 = vrot.slane %v772, 5
        %v775 = vor.u32 %v771, %v774
        %v776 = vrot.slane %v775, 4
        %v778 = vshll.u32 %v760, 16
        %v780 = vrot.slane %v778, 5
        %v781 = vsel %vm251, %v776, %v780
        %v783 = vshrl.u32 %v744, 16
        %v785 = vrot.slane %v783, 4
        %v786 = vshll.u32 %v744, 16
        %v788 = vrot.slane %v786, 5
        %v789 = vor.u32 %v785, %v788
        %v790 = vrot.slane %v789, 4
        %v792 = vshll.u32 %v761, 16
        %v794 = vrot.slane %v792, 5
        %v795 = vsel %vm251, %v790, %v794
        %v797 = vshrl.u32 %v745, 16
        %v799 = vrot.slane %v797, 4
        %v800 = vshll.u32 %v745, 16
        %v802 = vrot.slane %v800, 5
        %v803 = vor.u32 %v799, %v802
        %v804 = vrot.slane %v803, 4
        %v806 = vshll.u32 %v762, 16
        %v808 = vrot.slane %v806, 5
        %v809 = vsel %vm251, %v804, %v808
        %v811 = vshrl.u32 %v746, 16
        %v813 = vrot.slane %v811, 4
        %v814 = vshll.u32 %v746, 16
        %v816 = vrot.slane %v814, 5
        %v817 = vor.u32 %v813, %v816
        %v818 = vrot.slane %v817, 4
        %v820 = vshll.u32 %v763, 16
        %v822 = vrot.slane %v820, 5
        %v823 = vsel %vm251, %v818, %v822
        %v825 = vshrl.u32 %v747, 16
        %v827 = vrot.slane %v825, 4
        %v828 = vshll.u32 %v747, 16
        %v830 = vrot.slane %v828, 5
        %v831 = vor.u32 %v827, %v830
        %v832 = vrot.slane %v831, 4
        %v834 = vshll.u32 %v764, 16
        %v836 = vrot.slane %v834, 5
        %v837 = vsel %vm251, %v832, %v836
        %v839 = vshrl.u32 %v748, 16
        %v841 = vrot.slane %v839, 4
        %v842 = vshll.u32 %v748, 16
        %v844 = vrot.slane %v842, 5
        %v845 = vor.u32 %v841, %v844
        %v846 = vrot.slane %v845, 4
        %v848 = vshll.u32 %v765, 16
        %v850 = vrot.slane %v848, 5
        %v851 = vsel %vm251, %v846, %v850
        %v853 = vshrl.u32 %v749, 16
        %v855 = vrot.slane %v853, 4
        %v856 = vshll.u32 %v749, 16
        %v858 = vrot.slane %v856, 5
        %v859 = vor.u32 %v855, %v858
        %v860 = vrot.slane %v859, 4
        %v862 = vshll.u32 %v766, 16
        %v864 = vrot.slane %v862, 5
        %v865 = vsel %vm251, %v860, %v864
        %v867 = vshrl.u32 %v750, 16
        %v869 = vrot.slane %v867, 4
        %v870 = vshll.u32 %v750, 16
        %v872 = vrot.slane %v870, 5
        %v873 = vor.u32 %v869, %v872
        %v874 = vrot.slane %v873, 4
        %v876 = vshll.u32 %v767, 16
        %v878 = vrot.slane %v876, 5
        %v879 = vsel %vm251, %v874, %v878
        %v880 = vld [vmem:[%s751 + $0x4] sm:$0x1]
        %v881 = vld [vmem:[%s751 + $0xc] sm:$0x1]
        %v882 = vld [vmem:[%s751 + $0x14] sm:$0x1]
        %v883 = vld [vmem:[%s751 + $0x1c] sm:$0x1]
        %v884 = vld [vmem:[%s751 + $0x24] sm:$0x1]
        %v885 = vld [vmem:[%s751 + $0x2c] sm:$0x1]
        %v886 = vld [vmem:[%s751 + $0x34] sm:$0x1]
        %v887 = vld [vmem:[%s751 + $0x3c] sm:$0x1]
        %v889 = vshrl.u32 %v752, 16
        %v891 = vrot.slane %v889, 4
        %v892 = vshll.u32 %v752, 16
        %v894 = vrot.slane %v892, 5
        %v895 = vor.u32 %v891, %v894
        %v896 = vrot.slane %v895, 4
        %v898 = vshll.u32 %v880, 16
        %v900 = vrot.slane %v898, 5
        %v901 = vsel %vm251, %v896, %v900
        %v903 = vshrl.u32 %v753, 16
        %v905 = vrot.slane %v903, 4
        %v906 = vshll.u32 %v753, 16
        %v908 = vrot.slane %v906, 5
        %v909 = vor.u32 %v905, %v908
        %v910 = vrot.slane %v909, 4
        %v912 = vshll.u32 %v881, 16
        %v914 = vrot.slane %v912, 5
        %v915 = vsel %vm251, %v910, %v914
        %v917 = vshrl.u32 %v754, 16
        %v919 = vrot.slane %v917, 4
        %v920 = vshll.u32 %v754, 16
        %v922 = vrot.slane %v920, 5
        %v923 = vor.u32 %v919, %v922
        %v924 = vrot.slane %v923, 4
        %v926 = vshll.u32 %v882, 16
        %v928 = vrot.slane %v926, 5
        %v929 = vsel %vm251, %v924, %v928
        %v931 = vshrl.u32 %v755, 16
        %v933 = vrot.slane %v931, 4
        %v934 = vshll.u32 %v755, 16
        %v936 = vrot.slane %v934, 5
        %v937 = vor.u32 %v933, %v936
        %v938 = vrot.slane %v937, 4
        %v940 = vshll.u32 %v883, 16
        %v942 = vrot.slane %v940, 5
        %v943 = vsel %vm251, %v938, %v942
        %v945 = vshrl.u32 %v756, 16
        %v947 = vrot.slane %v945, 4
        %v948 = vshll.u32 %v756, 16
        %v950 = vrot.slane %v948, 5
        %v951 = vor.u32 %v947, %v950
        %v952 = vrot.slane %v951, 4
        %v954 = vshll.u32 %v884, 16
        %v956 = vrot.slane %v954, 5
        %v957 = vsel %vm251, %v952, %v956
        %v959 = vshrl.u32 %v757, 16
        %v961 = vrot.slane %v959, 4
        %v962 = vshll.u32 %v757, 16
        %v964 = vrot.slane %v962, 5
        %v965 = vor.u32 %v961, %v964
        %v966 = vrot.slane %v965, 4
        %v968 = vshll.u32 %v885, 16
        %v970 = vrot.slane %v968, 5
        %v971 = vsel %vm251, %v966, %v970
        %v973 = vshrl.u32 %v758, 16
        %v975 = vrot.slane %v973, 4
        %v976 = vshll.u32 %v758, 16
        %v978 = vrot.slane %v976, 5
        %v979 = vor.u32 %v975, %v978
        %v980 = vrot.slane %v979, 4
        %v982 = vshll.u32 %v886, 16
        %v984 = vrot.slane %v982, 5
        %v985 = vsel %vm251, %v980, %v984
        %v987 = vshrl.u32 %v759, 16
        %v989 = vrot.slane %v987, 4
        %v990 = vshll.u32 %v759, 16
        %v992 = vrot.slane %v990, 5
        %v993 = vor.u32 %v989, %v992
        %v994 = vrot.slane %v993, 4
        %v996 = vshll.u32 %v887, 16
        %v998 = vrot.slane %v996, 5
        %v999 = vsel %vm251, %v994, %v998
        %s1000 = scalar_lea.vmem %s222, 152
        %v1001 = vld [vmem:[%s1000] sm:$0xf]
        %v1002 = vld [vmem:[%s1000 + $0x8] sm:$0xf]
        %v1003 = vld [vmem:[%s1000 + $0x10] sm:$0xf]
        %v1004 = vld [vmem:[%s1000 + $0x18] sm:$0xf]
        %v1005 = vld [vmem:[%s1000 + $0x20] sm:$0xf]
        %v1006 = vld [vmem:[%s1000 + $0x28] sm:$0xf]
        %v1007 = vld [vmem:[%s1000 + $0x30] sm:$0xf]
        %v1008 = vld [vmem:[%s1000 + $0x38] sm:$0xf]
        %s1009 = scalar_lea.vmem %s222, 224
        %v1010 = vld [vmem:[%s1009] sm:$0xf]
        %v1011 = vld [vmem:[%s1009 + $0x8] sm:$0xf]
        %v1012 = vld [vmem:[%s1009 + $0x10] sm:$0xf]
        %v1013 = vld [vmem:[%s1009 + $0x18] sm:$0xf]
        %v1014 = vld [vmem:[%s1009 + $0x20] sm:$0xf]
        %v1015 = vld [vmem:[%s1009 + $0x28] sm:$0xf]
        %v1016 = vld [vmem:[%s1009 + $0x30] sm:$0xf]
        %v1017 = vld [vmem:[%s1009 + $0x38] sm:$0xf]
        %v1018 = vld [vmem:[%s1000 + $0x4] sm:$0x1]
        %v1019 = vld [vmem:[%s1000 + $0xc] sm:$0x1]
        %v1020 = vld [vmem:[%s1000 + $0x14] sm:$0x1]
        %v1021 = vld [vmem:[%s1000 + $0x1c] sm:$0x1]
        %v1022 = vld [vmem:[%s1000 + $0x24] sm:$0x1]
        %v1023 = vld [vmem:[%s1000 + $0x2c] sm:$0x1]
        %v1024 = vld [vmem:[%s1000 + $0x34] sm:$0x1]
        %v1025 = vld [vmem:[%s1000 + $0x3c] sm:$0x1]
        %v1027 = vshrl.u32 %v1001, 16
        %v1029 = vrot.slane %v1027, 4
        %v1030 = vshll.u32 %v1001, 16
        %v1032 = vrot.slane %v1030, 5
        %v1033 = vor.u32 %v1029, %v1032
        %v1034 = vrot.slane %v1033, 4
        %v1036 = vshll.u32 %v1018, 16
        %v1038 = vrot.slane %v1036, 5
        %v1039 = vsel %vm251, %v1034, %v1038
        %v1041 = vshrl.u32 %v1002, 16
        %v1043 = vrot.slane %v1041, 4
        %v1044 = vshll.u32 %v1002, 16
        %v1046 = vrot.slane %v1044, 5
        %v1047 = vor.u32 %v1043, %v1046
        %v1048 = vrot.slane %v1047, 4
        %v1050 = vshll.u32 %v1019, 16
        %v1052 = vrot.slane %v1050, 5
        %v1053 = vsel %vm251, %v1048, %v1052
        %v1055 = vshrl.u32 %v1003, 16
        %v1057 = vrot.slane %v1055, 4
        %v1058 = vshll.u32 %v1003, 16
        %v1060 = vrot.slane %v1058, 5
        %v1061 = vor.u32 %v1057, %v1060
        %v1062 = vrot.slane %v1061, 4
        %v1064 = vshll.u32 %v1020, 16
        %v1066 = vrot.slane %v1064, 5
        %v1067 = vsel %vm251, %v1062, %v1066
        %v1069 = vshrl.u32 %v1004, 16
        %v1071 = vrot.slane %v1069, 4
        %v1072 = vshll.u32 %v1004, 16
        %v1074 = vrot.slane %v1072, 5
        %v1075 = vor.u32 %v1071, %v1074
        %v1076 = vrot.slane %v1075, 4
        %v1078 = vshll.u32 %v1021, 16
        %v1080 = vrot.slane %v1078, 5
        %v1081 = vsel %vm251, %v1076, %v1080
        %v1083 = vshrl.u32 %v1005, 16
        %v1085 = vrot.slane %v1083, 4
        %v1086 = vshll.u32 %v1005, 16
        %v1088 = vrot.slane %v1086, 5
        %v1089 = vor.u32 %v1085, %v1088
        %v1090 = vrot.slane %v1089, 4
        %v1092 = vshll.u32 %v1022, 16
        %v1094 = vrot.slane %v1092, 5
        %v1095 = vsel %vm251, %v1090, %v1094
        %v1097 = vshrl.u32 %v1006, 16
        %v1099 = vrot.slane %v1097, 4
        %v1100 = vshll.u32 %v1006, 16
        %v1102 = vrot.slane %v1100, 5
        %v1103 = vor.u32 %v1099, %v1102
        %v1104 = vrot.slane %v1103, 4
        %v1106 = vshll.u32 %v1023, 16
        %v1108 = vrot.slane %v1106, 5
        %v1109 = vsel %vm251, %v1104, %v1108
        %v1111 = vshrl.u32 %v1007, 16
        %v1113 = vrot.slane %v1111, 4
        %v1114 = vshll.u32 %v1007, 16
        %v1116 = vrot.slane %v1114, 5
        %v1117 = vor.u32 %v1113, %v1116
        %v1118 = vrot.slane %v1117, 4
        %v1120 = vshll.u32 %v1024, 16
        %v1122 = vrot.slane %v1120, 5
        %v1123 = vsel %vm251, %v1118, %v1122
        %v1125 = vshrl.u32 %v1008, 16
        %v1127 = vrot.slane %v1125, 4
        %v1128 = vshll.u32 %v1008, 16
        %v1130 = vrot.slane %v1128, 5
        %v1131 = vor.u32 %v1127, %v1130
        %v1132 = vrot.slane %v1131, 4
        %v1134 = vshll.u32 %v1025, 16
        %v1136 = vrot.slane %v1134, 5
        %v1137 = vsel %vm251, %v1132, %v1136
        %v1138 = vld [vmem:[%s1009 + $0x4] sm:$0x1]
        %v1139 = vld [vmem:[%s1009 + $0xc] sm:$0x1]
        %v1140 = vld [vmem:[%s1009 + $0x14] sm:$0x1]
        %v1141 = vld [vmem:[%s1009 + $0x1c] sm:$0x1]
        %v1142 = vld [vmem:[%s1009 + $0x24] sm:$0x1]
        %v1143 = vld [vmem:[%s1009 + $0x2c] sm:$0x1]
        %v1144 = vld [vmem:[%s1009 + $0x34] sm:$0x1]
        %v1145 = vld [vmem:[%s1009 + $0x3c] sm:$0x1]
        %v1147 = vshrl.u32 %v1010, 16
        %v1149 = vrot.slane %v1147, 4
        %v1150 = vshll.u32 %v1010, 16
        %v1152 = vrot.slane %v1150, 5
        %v1153 = vor.u32 %v1149, %v1152
        %v1154 = vrot.slane %v1153, 4
        %v1156 = vshll.u32 %v1138, 16
        %v1158 = vrot.slane %v1156, 5
        %v1159 = vsel %vm251, %v1154, %v1158
        %v1161 = vshrl.u32 %v1011, 16
        %v1163 = vrot.slane %v1161, 4
        %v1164 = vshll.u32 %v1011, 16
        %v1166 = vrot.slane %v1164, 5
        %v1167 = vor.u32 %v1163, %v1166
        %v1168 = vrot.slane %v1167, 4
        %v1170 = vshll.u32 %v1139, 16
        %v1172 = vrot.slane %v1170, 5
        %v1173 = vsel %vm251, %v1168, %v1172
        %v1175 = vshrl.u32 %v1012, 16
        %v1177 = vrot.slane %v1175, 4
        %v1178 = vshll.u32 %v1012, 16
        %v1180 = vrot.slane %v1178, 5
        %v1181 = vor.u32 %v1177, %v1180
        %v1182 = vrot.slane %v1181, 4
        %v1184 = vshll.u32 %v1140, 16
        %v1186 = vrot.slane %v1184, 5
        %v1187 = vsel %vm251, %v1182, %v1186
        %v1189 = vshrl.u32 %v1013, 16
        %v1191 = vrot.slane %v1189, 4
        %v1192 = vshll.u32 %v1013, 16
        %v1194 = vrot.slane %v1192, 5
        %v1195 = vor.u32 %v1191, %v1194
        %v1196 = vrot.slane %v1195, 4
        %v1198 = vshll.u32 %v1141, 16
        %v1200 = vrot.slane %v1198, 5
        %v1201 = vsel %vm251, %v1196, %v1200
        %v1203 = vshrl.u32 %v1014, 16
        %v1205 = vrot.slane %v1203, 4
        %v1206 = vshll.u32 %v1014, 16
        %v1208 = vrot.slane %v1206, 5
        %v1209 = vor.u32 %v1205, %v1208
        %v1210 = vrot.slane %v1209, 4
        %v1212 = vshll.u32 %v1142, 16
        %v1214 = vrot.slane %v1212, 5
        %v1215 = vsel %vm251, %v1210, %v1214
        %v1217 = vshrl.u32 %v1015, 16
        %v1219 = vrot.slane %v1217, 4
        %v1220 = vshll.u32 %v1015, 16
        %v1222 = vrot.slane %v1220, 5
        %v1223 = vor.u32 %v1219, %v1222
        %v1224 = vrot.slane %v1223, 4
        %v1226 = vshll.u32 %v1143, 16
        %v1228 = vrot.slane %v1226, 5
        %v1229 = vsel %vm251, %v1224, %v1228
        %v1231 = vshrl.u32 %v1016, 16
        %v1233 = vrot.slane %v1231, 4
        %v1234 = vshll.u32 %v1016, 16
        %v1236 = vrot.slane %v1234, 5
        %v1237 = vor.u32 %v1233, %v1236
        %v1238 = vrot.slane %v1237, 4
        %v1240 = vshll.u32 %v1144, 16
        %v1242 = vrot.slane %v1240, 5
        %v1243 = vsel %vm251, %v1238, %v1242
        %v1245 = vshrl.u32 %v1017, 16
        %v1247 = vrot.slane %v1245, 4
        %v1248 = vshll.u32 %v1017, 16
        %v1250 = vrot.slane %v1248, 5
        %v1251 = vor.u32 %v1247, %v1250
        %v1252 = vrot.slane %v1251, 4
        %v1254 = vshll.u32 %v1145, 16
        %v1256 = vrot.slane %v1254, 5
        %v1257 = vsel %vm251, %v1252, %v1256
        %v1258 = vld [vmem:[%s1] sm:$0x3]
        %v1259 = vld [vmem:[%s1] sm:$0xc]
        %v1268 = vunpack.c.l.b16 %v233
        %v1269 = vunpack.c.l.b16 %v234
        %v1270 = vunpack.c.l.b16 %v235
        %v1271 = vunpack.c.l.b16 %v236
        %v1272 = vunpack.c.l.b16 %v237
        %v1273 = vunpack.c.l.b16 %v238
        %v1274 = vunpack.c.l.b16 %v239
        %v1275 = vunpack.c.l.b16 %v240
        %v1276 = vpack.c.b16 %v1269, %v1268
        %v1277 = vpack.c.b16 %v1271, %v1270
        %v1278 = vpack.c.b16 %v1273, %v1272
        %v1279 = vpack.c.b16 %v1275, %v1274
        %v1281 = vunpack.c.l.b16 %v1259
        %v1282 = vpack.c.b16 %v1281, %v1281
        %v1283 = vrot.slane %v1282, 2
        %vm1284 = vcmask 31744
        %v1286 = vsel %vm1284, %v1276, 0
        %v1289 = vsel %vm1284, %v1277, 0
        %v1292 = vsel %vm1284, %v1278, 0
        %v1295 = vsel %vm1284, %v1279, 0
        %vm1297 = vcmask 1041408
        %v1299 = vsel %vm1297, %v1283, 0
        %1301 = vmatprep.subr.bf16.mxu0 0
        %1302 = vmatpush1.bf16.msra.mxu0 0
        %1303 = vmatprep.subr.bf16.mxu0 0
        %1304 = vmatpush1.bf16.msra.mxu0 0
        %1305 = vmatprep.subr.bf16.mxu0 0
        %1306 = vmatpush1.bf16.msra.mxu0 0
        %1307 = vmatprep.subr.bf16.mxu0 0
        %1308 = vmatpush1.bf16.msra.mxu0 0
        %1309 = vmatprep.subr.bf16.mxu0 0
        %1310 = vmatpush1.bf16.msra.mxu0 0
        %1311 = vmatprep.subr.bf16.mxu0 0
        %1312 = vmatpush1.bf16.msra.mxu0 0
        %1313 = vmatprep.subr.bf16.mxu0 0
        %1314 = vmatpush1.bf16.msra.mxu0 0
        %1315 = vmatprep.subr.bf16.mxu0 0
        %1316 = vmatpush1.bf16.msra.mxu0 %v1299
        %1317 = vmatprep.subr.bf16.mxu0 0
        %1318 = vmatpush2.bf16.msra.mxu0 0
        %1319 = vmatprep.subr.bf16.mxu0 0
        %1320 = vmatpush2.bf16.msra.mxu0 0
        %1321 = vmatprep.subr.bf16.mxu0 0
        %1322 = vmatpush2.bf16.msra.mxu0 0
        %1323 = vmatprep.subr.bf16.mxu0 0
        %1324 = vmatpush2.bf16.msra.mxu0 0
        %1325 = vmatprep.subr.bf16.mxu0 0
        %1326 = vmatpush2.bf16.msra.mxu0 0
        %1327 = vmatprep.subr.bf16.mxu0 0
        %1328 = vmatpush2.bf16.msra.mxu0 0
        %1329 = vmatprep.subr.bf16.mxu0 0
        %1330 = vmatpush2.bf16.msra.mxu0 0
        %1331 = vmatprep.subr.bf16.mxu0 0
        %1332 = vmatpush2.bf16.msra.mxu0 0
        %1333 = vmatprep.mubr.bf16.mxu0 0
        %1334 = vmatmul.mubr.bf16.gmra.mxu0 %v1286
        %v1335 = vpop.f32.mrf.mxu0
        %v1336 = vadd.f32 0.0, %v1335
        %v1337 = vpop.f32.mrf.mxu0
        %v1338 = vpop.f32.mrf.mxu0
        %v1339 = vadd.f32 0.0, %v1338
        %v1340 = vpop.f32.mrf.mxu0
        %1341 = vmatprep.mubr.bf16.mxu0 0
        %1342 = vmatmul.mubr.bf16.gmra.mxu0 %v1289
        %v1343 = vpop.f32.mrf.mxu0
        %v1344 = vadd.f32 0.0, %v1343
        %v1345 = vpop.f32.mrf.mxu0
        %v1346 = vpop.f32.mrf.mxu0
        %v1347 = vadd.f32 0.0, %v1346
        %v1348 = vpop.f32.mrf.mxu0
        %1349 = vmatprep.mubr.bf16.mxu0 0
        %1350 = vmatmul.mubr.bf16.gmra.mxu0 %v1292
        %v1351 = vpop.f32.mrf.mxu0
        %v1352 = vadd.f32 0.0, %v1351
        %v1353 = vpop.f32.mrf.mxu0
        %v1354 = vpop.f32.mrf.mxu0
        %v1355 = vadd.f32 0.0, %v1354
        %v1356 = vpop.f32.mrf.mxu0
        %1357 = vmatprep.mubr.bf16.mxu0 0
        %1358 = vmatmul.mubr.bf16.gmra.mxu0 %v1295
        %v1359 = vpop.f32.mrf.mxu0
        %v1360 = vadd.f32 0.0, %v1359
        %v1361 = vpop.f32.mrf.mxu0
        %v1362 = vpop.f32.mrf.mxu0
        %v1363 = vadd.f32 0.0, %v1362
        %v1364 = vpop.f32.mrf.mxu0
        %1365 = vdwg.mxu0
        %v1374 = vunpack.c.l.b16 %v224
        %v1375 = vunpack.c.l.b16 %v225
        %v1376 = vunpack.c.l.b16 %v226
        %v1377 = vunpack.c.l.b16 %v227
        %v1378 = vunpack.c.l.b16 %v228
        %v1379 = vunpack.c.l.b16 %v229
        %v1380 = vunpack.c.l.b16 %v230
        %v1381 = vunpack.c.l.b16 %v231
        %v1382 = vpack.c.b16 %v1375, %v1374
        %v1383 = vpack.c.b16 %v1377, %v1376
        %v1384 = vpack.c.b16 %v1379, %v1378
        %v1385 = vpack.c.b16 %v1381, %v1380
        %v1387 = vsel %vm1284, %v1382, 0
        %v1390 = vsel %vm1284, %v1383, 0
        %v1393 = vsel %vm1284, %v1384, 0
        %v1396 = vsel %vm1284, %v1385, 0
        %v1399 = vsel %vm1297, %v1258, 0
        %1401 = vmatprep.subr.bf16.mxu0 0
        %1402 = vmatpush1.bf16.msra.mxu0 0
        %1403 = vmatprep.subr.bf16.mxu0 0
        %1404 = vmatpush1.bf16.msra.mxu0 0
        %1405 = vmatprep.subr.bf16.mxu0 0
        %1406 = vmatpush1.bf16.msra.mxu0 0
        %1407 = vmatprep.subr.bf16.mxu0 0
        %1408 = vmatpush1.bf16.msra.mxu0 0
        %1409 = vmatprep.subr.bf16.mxu0 0
        %1410 = vmatpush1.bf16.msra.mxu0 0
        %1411 = vmatprep.subr.bf16.mxu0 0
        %1412 = vmatpush1.bf16.msra.mxu0 0
        %1413 = vmatprep.subr.bf16.mxu0 0
        %1414 = vmatpush1.bf16.msra.mxu0 0
        %1415 = vmatprep.subr.bf16.mxu0 0
        %1416 = vmatpush1.bf16.msra.mxu0 %v1399
        %1417 = vmatprep.subr.bf16.mxu0 0
        %1418 = vmatpush2.bf16.msra.mxu0 0
        %1419 = vmatprep.subr.bf16.mxu0 0
        %1420 = vmatpush2.bf16.msra.mxu0 0
        %1421 = vmatprep.subr.bf16.mxu0 0
        %1422 = vmatpush2.bf16.msra.mxu0 0
        %1423 = vmatprep.subr.bf16.mxu0 0
        %1424 = vmatpush2.bf16.msra.mxu0 0
        %1425 = vmatprep.subr.bf16.mxu0 0
        %1426 = vmatpush2.bf16.msra.mxu0 0
        %1427 = vmatprep.subr.bf16.mxu0 0
        %1428 = vmatpush2.bf16.msra.mxu0 0
        %1429 = vmatprep.subr.bf16.mxu0 0
        %1430 = vmatpush2.bf16.msra.mxu0 0
        %1431 = vmatprep.subr.bf16.mxu0 0
        %1432 = vmatpush2.bf16.msra.mxu0 0
        %1433 = vmatprep.mubr.bf16.mxu0 0
        %1434 = vmatmul.mubr.bf16.gmra.mxu0 %v1387
        %v1435 = vpop.f32.mrf.mxu0
        %v1436 = vadd.f32 %v1336, %v1435
        %v1437 = vpop.f32.mrf.mxu0
        %v1438 = vpop.f32.mrf.mxu0
        %v1439 = vadd.f32 %v1339, %v1438
        %v1440 = vpop.f32.mrf.mxu0
        %1441 = vmatprep.mubr.bf16.mxu0 0
        %1442 = vmatmul.mubr.bf16.gmra.mxu0 %v1390
        %v1443 = vpop.f32.mrf.mxu0
        %v1444 = vadd.f32 %v1344, %v1443
        %v1445 = vpop.f32.mrf.mxu0
        %v1446 = vpop.f32.mrf.mxu0
        %v1447 = vadd.f32 %v1347, %v1446
        %v1448 = vpop.f32.mrf.mxu0
        %1449 = vmatprep.mubr.bf16.mxu0 0
        %1450 = vmatmul.mubr.bf16.gmra.mxu0 %v1393
        %v1451 = vpop.f32.mrf.mxu0
        %v1452 = vadd.f32 %v1352, %v1451
        %v1453 = vpop.f32.mrf.mxu0
        %v1454 = vpop.f32.mrf.mxu0
        %v1455 = vadd.f32 %v1355, %v1454
        %v1456 = vpop.f32.mrf.mxu0
        %1457 = vmatprep.mubr.bf16.mxu0 0
        %1458 = vmatmul.mubr.bf16.gmra.mxu0 %v1396
        %v1459 = vpop.f32.mrf.mxu0
        %v1460 = vadd.f32 %v1360, %v1459
        %v1461 = vpop.f32.mrf.mxu0
        %v1462 = vpop.f32.mrf.mxu0
        %v1463 = vadd.f32 %v1363, %v1462
        %v1464 = vpop.f32.mrf.mxu0
        %1465 = vdwg.mxu0
        %v1466 = vld [vmem:[%s1 + $0x4] sm:$0x3]
        %v1467 = vunpack.c.l.b16 %v265
        %v1468 = vunpack.c.l.b16 %v279
        %v1469 = vunpack.c.l.b16 %v293
        %v1470 = vunpack.c.l.b16 %v307
        %v1471 = vunpack.c.l.b16 %v321
        %v1472 = vunpack.c.l.b16 %v335
        %v1473 = vunpack.c.l.b16 %v349
        %v1474 = vunpack.c.l.b16 %v363
        %v1475 = vpack.c.b16 %v1468, %v1467
        %v1476 = vpack.c.b16 %v1470, %v1469
        %v1477 = vpack.c.b16 %v1472, %v1471
        %v1478 = vpack.c.b16 %v1474, %v1473
        %v1480 = vsel %vm1284, %v1475, 0
        %v1483 = vsel %vm1284, %v1476, 0
        %v1486 = vsel %vm1284, %v1477, 0
        %v1489 = vsel %vm1284, %v1478, 0
        %v1492 = vsel %vm1297, %v1466, 0
        %1494 = vmatprep.subr.bf16.mxu0 0
        %1495 = vmatpush1.bf16.msra.mxu0 0
        %1496 = vmatprep.subr.bf16.mxu0 0
        %1497 = vmatpush1.bf16.msra.mxu0 0
        %1498 = vmatprep.subr.bf16.mxu0 0
        %1499 = vmatpush1.bf16.msra.mxu0 0
        %1500 = vmatprep.subr.bf16.mxu0 0
        %1501 = vmatpush1.bf16.msra.mxu0 0
        %1502 = vmatprep.subr.bf16.mxu0 0
        %1503 = vmatpush1.bf16.msra.mxu0 0
        %1504 = vmatprep.subr.bf16.mxu0 0
        %1505 = vmatpush1.bf16.msra.mxu0 0
        %1506 = vmatprep.subr.bf16.mxu0 0
        %1507 = vmatpush1.bf16.msra.mxu0 0
        %1508 = vmatprep.subr.bf16.mxu0 0
        %1509 = vmatpush1.bf16.msra.mxu0 %v1492
        %1510 = vmatprep.subr.bf16.mxu0 0
        %1511 = vmatpush2.bf16.msra.mxu0 0
        %1512 = vmatprep.subr.bf16.mxu0 0
        %1513 = vmatpush2.bf16.msra.mxu0 0
        %1514 = vmatprep.subr.bf16.mxu0 0
        %1515 = vmatpush2.bf16.msra.mxu0 0
        %1516 = vmatprep.subr.bf16.mxu0 0
        %1517 = vmatpush2.bf16.msra.mxu0 0
        %1518 = vmatprep.subr.bf16.mxu0 0
        %1519 = vmatpush2.bf16.msra.mxu0 0
        %1520 = vmatprep.subr.bf16.mxu0 0
        %1521 = vmatpush2.bf16.msra.mxu0 0
        %1522 = vmatprep.subr.bf16.mxu0 0
        %1523 = vmatpush2.bf16.msra.mxu0 0
        %1524 = vmatprep.subr.bf16.mxu0 0
        %1525 = vmatpush2.bf16.msra.mxu0 0
        %1526 = vmatprep.mubr.bf16.mxu0 0
        %1527 = vmatmul.mubr.bf16.gmra.mxu0 %v1480
        %v1528 = vpop.f32.mrf.mxu0
        %v1529 = vadd.f32 0.0, %v1528
        %v1530 = vpop.f32.mrf.mxu0
        %v1531 = vpop.f32.mrf.mxu0
        %v1532 = vadd.f32 0.0, %v1531
        %v1533 = vpop.f32.mrf.mxu0
        %1534 = vmatprep.mubr.bf16.mxu0 0
        %1535 = vmatmul.mubr.bf16.gmra.mxu0 %v1483
        %v1536 = vpop.f32.mrf.mxu0
        %v1537 = vadd.f32 0.0, %v1536
        %v1538 = vpop.f32.mrf.mxu0
        %v1539 = vpop.f32.mrf.mxu0
        %v1540 = vadd.f32 0.0, %v1539
        %v1541 = vpop.f32.mrf.mxu0
        %1542 = vmatprep.mubr.bf16.mxu0 0
        %1543 = vmatmul.mubr.bf16.gmra.mxu0 %v1486
        %v1544 = vpop.f32.mrf.mxu0
        %v1545 = vadd.f32 0.0, %v1544
        %v1546 = vpop.f32.mrf.mxu0
        %v1547 = vpop.f32.mrf.mxu0
        %v1548 = vadd.f32 0.0, %v1547
        %v1549 = vpop.f32.mrf.mxu0
        %1550 = vmatprep.mubr.bf16.mxu0 0
        %1551 = vmatmul.mubr.bf16.gmra.mxu0 %v1489
        %v1552 = vpop.f32.mrf.mxu0
        %v1553 = vadd.f32 0.0, %v1552
        %v1554 = vpop.f32.mrf.mxu0
        %v1555 = vpop.f32.mrf.mxu0
        %v1556 = vadd.f32 0.0, %v1555
        %v1557 = vpop.f32.mrf.mxu0
        %1558 = vdwg.mxu0
        %v1559 = vadd.f32 %v1436, %v1529
        %v1560 = vadd.f32 %v1439, %v1532
        %v1561 = vadd.f32 %v1444, %v1537
        %v1562 = vadd.f32 %v1447, %v1540
        %v1563 = vadd.f32 %v1452, %v1545
        %v1564 = vadd.f32 %v1455, %v1548
        %v1565 = vadd.f32 %v1460, %v1553
        %v1566 = vadd.f32 %v1463, %v1556
        %v1567 = vld [vmem:[%s1 + $0x4] sm:$0xc]
        %v1576 = vunpack.c.l.b16 %v485
        %v1577 = vunpack.c.l.b16 %v486
        %v1578 = vunpack.c.l.b16 %v487
        %v1579 = vunpack.c.l.b16 %v488
        %v1580 = vunpack.c.l.b16 %v489
        %v1581 = vunpack.c.l.b16 %v490
        %v1582 = vunpack.c.l.b16 %v491
        %v1583 = vunpack.c.l.b16 %v492
        %v1584 = vpack.c.b16 %v1577, %v1576
        %v1585 = vpack.c.b16 %v1579, %v1578
        %v1586 = vpack.c.b16 %v1581, %v1580
        %v1587 = vpack.c.b16 %v1583, %v1582
        %v1589 = vunpack.c.l.b16 %v1567
        %v1590 = vpack.c.b16 %v1589, %v1589
        %v1591 = vrot.slane %v1590, 2
        %v1593 = vsel %vm1284, %v1584, 0
        %v1596 = vsel %vm1284, %v1585, 0
        %v1599 = vsel %vm1284, %v1586, 0
        %v1602 = vsel %vm1284, %v1587, 0
        %v1605 = vsel %vm1297, %v1591, 0
        %1607 = vmatprep.subr.bf16.mxu0 0
        %1608 = vmatpush1.bf16.msra.mxu0 0
        %1609 = vmatprep.subr.bf16.mxu0 0
        %1610 = vmatpush1.bf16.msra.mxu0 0
        %1611 = vmatprep.subr.bf16.mxu0 0
        %1612 = vmatpush1.bf16.msra.mxu0 0
        %1613 = vmatprep.subr.bf16.mxu0 0
        %1614 = vmatpush1.bf16.msra.mxu0 0
        %1615 = vmatprep.subr.bf16.mxu0 0
        %1616 = vmatpush1.bf16.msra.mxu0 0
        %1617 = vmatprep.subr.bf16.mxu0 0
        %1618 = vmatpush1.bf16.msra.mxu0 0
        %1619 = vmatprep.subr.bf16.mxu0 0
        %1620 = vmatpush1.bf16.msra.mxu0 0
        %1621 = vmatprep.subr.bf16.mxu0 0
        %1622 = vmatpush1.bf16.msra.mxu0 %v1605
        %1623 = vmatprep.subr.bf16.mxu0 0
        %1624 = vmatpush2.bf16.msra.mxu0 0
        %1625 = vmatprep.subr.bf16.mxu0 0
        %1626 = vmatpush2.bf16.msra.mxu0 0
        %1627 = vmatprep.subr.bf16.mxu0 0
        %1628 = vmatpush2.bf16.msra.mxu0 0
        %1629 = vmatprep.subr.bf16.mxu0 0
        %1630 = vmatpush2.bf16.msra.mxu0 0
        %1631 = vmatprep.subr.bf16.mxu0 0
        %1632 = vmatpush2.bf16.msra.mxu0 0
        %1633 = vmatprep.subr.bf16.mxu0 0
        %1634 = vmatpush2.bf16.msra.mxu0 0
        %1635 = vmatprep.subr.bf16.mxu0 0
        %1636 = vmatpush2.bf16.msra.mxu0 0
        %1637 = vmatprep.subr.bf16.mxu0 0
        %1638 = vmatpush2.bf16.msra.mxu0 0
        %1639 = vmatprep.mubr.bf16.mxu0 0
        %1640 = vmatmul.mubr.bf16.gmra.mxu0 %v1593
        %v1641 = vpop.f32.mrf.mxu0
        %v1642 = vadd.f32 0.0, %v1641
        %v1643 = vpop.f32.mrf.mxu0
        %v1644 = vpop.f32.mrf.mxu0
        %v1645 = vadd.f32 0.0, %v1644
        %v1646 = vpop.f32.mrf.mxu0
        %1647 = vmatprep.mubr.bf16.mxu0 0
        %1648 = vmatmul.mubr.bf16.gmra.mxu0 %v1596
        %v1649 = vpop.f32.mrf.mxu0
        %v1650 = vadd.f32 0.0, %v1649
        %v1651 = vpop.f32.mrf.mxu0
        %v1652 = vpop.f32.mrf.mxu0
        %v1653 = vadd.f32 0.0, %v1652
        %v1654 = vpop.f32.mrf.mxu0
        %1655 = vmatprep.mubr.bf16.mxu0 0
        %1656 = vmatmul.mubr.bf16.gmra.mxu0 %v1599
        %v1657 = vpop.f32.mrf.mxu0
        %v1658 = vadd.f32 0.0, %v1657
        %v1659 = vpop.f32.mrf.mxu0
        %v1660 = vpop.f32.mrf.mxu0
        %v1661 = vadd.f32 0.0, %v1660
        %v1662 = vpop.f32.mrf.mxu0
        %1663 = vmatprep.mubr.bf16.mxu0 0
        %1664 = vmatmul.mubr.bf16.gmra.mxu0 %v1602
        %v1665 = vpop.f32.mrf.mxu0
        %v1666 = vadd.f32 0.0, %v1665
        %v1667 = vpop.f32.mrf.mxu0
        %v1668 = vpop.f32.mrf.mxu0
        %v1669 = vadd.f32 0.0, %v1668
        %v1670 = vpop.f32.mrf.mxu0
        %1671 = vdwg.mxu0
        %v1672 = vadd.f32 %v1559, %v1642
        %v1673 = vadd.f32 %v1560, %v1645
        %v1674 = vadd.f32 %v1561, %v1650
        %v1675 = vadd.f32 %v1562, %v1653
        %v1676 = vadd.f32 %v1563, %v1658
        %v1677 = vadd.f32 %v1564, %v1661
        %v1678 = vadd.f32 %v1565, %v1666
        %v1679 = vadd.f32 %v1566, %v1669
        %v1680 = vld [vmem:[%s1 + $0x8] sm:$0x3]
        %v1689 = vunpack.c.l.b16 %v494
        %v1690 = vunpack.c.l.b16 %v495
        %v1691 = vunpack.c.l.b16 %v496
        %v1692 = vunpack.c.l.b16 %v497
        %v1693 = vunpack.c.l.b16 %v498
        %v1694 = vunpack.c.l.b16 %v499
        %v1695 = vunpack.c.l.b16 %v500
        %v1696 = vunpack.c.l.b16 %v501
        %v1697 = vpack.c.b16 %v1690, %v1689
        %v1698 = vpack.c.b16 %v1692, %v1691
        %v1699 = vpack.c.b16 %v1694, %v1693
        %v1700 = vpack.c.b16 %v1696, %v1695
        %v1702 = vsel %vm1284, %v1697, 0
        %v1705 = vsel %vm1284, %v1698, 0
        %v1708 = vsel %vm1284, %v1699, 0
        %v1711 = vsel %vm1284, %v1700, 0
        %v1714 = vsel %vm1297, %v1680, 0
        %1716 = vmatprep.subr.bf16.mxu0 0
        %1717 = vmatpush1.bf16.msra.mxu0 0
        %1718 = vmatprep.subr.bf16.mxu0 0
        %1719 = vmatpush1.bf16.msra.mxu0 0
        %1720 = vmatprep.subr.bf16.mxu0 0
        %1721 = vmatpush1.bf16.msra.mxu0 0
        %1722 = vmatprep.subr.bf16.mxu0 0
        %1723 = vmatpush1.bf16.msra.mxu0 0
        %1724 = vmatprep.subr.bf16.mxu0 0
        %1725 = vmatpush1.bf16.msra.mxu0 0
        %1726 = vmatprep.subr.bf16.mxu0 0
        %1727 = vmatpush1.bf16.msra.mxu0 0
        %1728 = vmatprep.subr.bf16.mxu0 0
        %1729 = vmatpush1.bf16.msra.mxu0 0
        %1730 = vmatprep.subr.bf16.mxu0 0
        %1731 = vmatpush1.bf16.msra.mxu0 %v1714
        %1732 = vmatprep.subr.bf16.mxu0 0
        %1733 = vmatpush2.bf16.msra.mxu0 0
        %1734 = vmatprep.subr.bf16.mxu0 0
        %1735 = vmatpush2.bf16.msra.mxu0 0
        %1736 = vmatprep.subr.bf16.mxu0 0
        %1737 = vmatpush2.bf16.msra.mxu0 0
        %1738 = vmatprep.subr.bf16.mxu0 0
        %1739 = vmatpush2.bf16.msra.mxu0 0
        %1740 = vmatprep.subr.bf16.mxu0 0
        %1741 = vmatpush2.bf16.msra.mxu0 0
        %1742 = vmatprep.subr.bf16.mxu0 0
        %1743 = vmatpush2.bf16.msra.mxu0 0
        %1744 = vmatprep.subr.bf16.mxu0 0
        %1745 = vmatpush2.bf16.msra.mxu0 0
        %1746 = vmatprep.subr.bf16.mxu0 0
        %1747 = vmatpush2.bf16.msra.mxu0 0
        %1748 = vmatprep.mubr.bf16.mxu0 0
        %1749 = vmatmul.mubr.bf16.gmra.mxu0 %v1702
        %v1750 = vpop.f32.mrf.mxu0
        %v1751 = vadd.f32 0.0, %v1750
        %v1752 = vpop.f32.mrf.mxu0
        %v1753 = vpop.f32.mrf.mxu0
        %v1754 = vadd.f32 0.0, %v1753
        %v1755 = vpop.f32.mrf.mxu0
        %1756 = vmatprep.mubr.bf16.mxu0 0
        %1757 = vmatmul.mubr.bf16.gmra.mxu0 %v1705
        %v1758 = vpop.f32.mrf.mxu0
        %v1759 = vadd.f32 0.0, %v1758
        %v1760 = vpop.f32.mrf.mxu0
        %v1761 = vpop.f32.mrf.mxu0
        %v1762 = vadd.f32 0.0, %v1761
        %v1763 = vpop.f32.mrf.mxu0
        %1764 = vmatprep.mubr.bf16.mxu0 0
        %1765 = vmatmul.mubr.bf16.gmra.mxu0 %v1708
        %v1766 = vpop.f32.mrf.mxu0
        %v1767 = vadd.f32 0.0, %v1766
        %v1768 = vpop.f32.mrf.mxu0
        %v1769 = vpop.f32.mrf.mxu0
        %v1770 = vadd.f32 0.0, %v1769
        %v1771 = vpop.f32.mrf.mxu0
        %1772 = vmatprep.mubr.bf16.mxu0 0
        %1773 = vmatmul.mubr.bf16.gmra.mxu0 %v1711
        %v1774 = vpop.f32.mrf.mxu0
        %v1775 = vadd.f32 0.0, %v1774
        %v1776 = vpop.f32.mrf.mxu0
        %v1777 = vpop.f32.mrf.mxu0
        %v1778 = vadd.f32 0.0, %v1777
        %v1779 = vpop.f32.mrf.mxu0
        %1780 = vdwg.mxu0
        %v1781 = vadd.f32 %v1672, %v1751
        %v1782 = vadd.f32 %v1673, %v1754
        %v1783 = vadd.f32 %v1674, %v1759
        %v1784 = vadd.f32 %v1675, %v1762
        %v1785 = vadd.f32 %v1676, %v1767
        %v1786 = vadd.f32 %v1677, %v1770
        %v1787 = vadd.f32 %v1678, %v1775
        %v1788 = vadd.f32 %v1679, %v1778
        %v1789 = vld [vmem:[%s1 + $0x8] sm:$0xc]
        %v1790 = vunpack.c.l.b16 %v523
        %v1791 = vunpack.c.l.b16 %v537
        %v1792 = vunpack.c.l.b16 %v551
        %v1793 = vunpack.c.l.b16 %v565
        %v1794 = vunpack.c.l.b16 %v579
        %v1795 = vunpack.c.l.b16 %v593
        %v1796 = vunpack.c.l.b16 %v607
        %v1797 = vunpack.c.l.b16 %v621
        %v1798 = vpack.c.b16 %v1791, %v1790
        %v1799 = vpack.c.b16 %v1793, %v1792
        %v1800 = vpack.c.b16 %v1795, %v1794
        %v1801 = vpack.c.b16 %v1797, %v1796
        %v1803 = vunpack.c.l.b16 %v1789
        %v1804 = vpack.c.b16 %v1803, %v1803
        %v1805 = vrot.slane %v1804, 2
        %v1807 = vsel %vm1284, %v1798, 0
        %v1810 = vsel %vm1284, %v1799, 0
        %v1813 = vsel %vm1284, %v1800, 0
        %v1816 = vsel %vm1284, %v1801, 0
        %v1819 = vsel %vm1297, %v1805, 0
        %1821 = vmatprep.subr.bf16.mxu0 0
        %1822 = vmatpush1.bf16.msra.mxu0 0
        %1823 = vmatprep.subr.bf16.mxu0 0
        %1824 = vmatpush1.bf16.msra.mxu0 0
        %1825 = vmatprep.subr.bf16.mxu0 0
        %1826 = vmatpush1.bf16.msra.mxu0 0
        %1827 = vmatprep.subr.bf16.mxu0 0
        %1828 = vmatpush1.bf16.msra.mxu0 0
        %1829 = vmatprep.subr.bf16.mxu0 0
        %1830 = vmatpush1.bf16.msra.mxu0 0
        %1831 = vmatprep.subr.bf16.mxu0 0
        %1832 = vmatpush1.bf16.msra.mxu0 0
        %1833 = vmatprep.subr.bf16.mxu0 0
        %1834 = vmatpush1.bf16.msra.mxu0 0
        %1835 = vmatprep.subr.bf16.mxu0 0
        %1836 = vmatpush1.bf16.msra.mxu0 %v1819
        %1837 = vmatprep.subr.bf16.mxu0 0
        %1838 = vmatpush2.bf16.msra.mxu0 0
        %1839 = vmatprep.subr.bf16.mxu0 0
        %1840 = vmatpush2.bf16.msra.mxu0 0
        %1841 = vmatprep.subr.bf16.mxu0 0
        %1842 = vmatpush2.bf16.msra.mxu0 0
        %1843 = vmatprep.subr.bf16.mxu0 0
        %1844 = vmatpush2.bf16.msra.mxu0 0
        %1845 = vmatprep.subr.bf16.mxu0 0
        %1846 = vmatpush2.bf16.msra.mxu0 0
        %1847 = vmatprep.subr.bf16.mxu0 0
        %1848 = vmatpush2.bf16.msra.mxu0 0
        %1849 = vmatprep.subr.bf16.mxu0 0
        %1850 = vmatpush2.bf16.msra.mxu0 0
        %1851 = vmatprep.subr.bf16.mxu0 0
        %1852 = vmatpush2.bf16.msra.mxu0 0
        %1853 = vmatprep.mubr.bf16.mxu0 0
        %1854 = vmatmul.mubr.bf16.gmra.mxu0 %v1807
        %v1855 = vpop.f32.mrf.mxu0
        %v1856 = vadd.f32 0.0, %v1855
        %v1857 = vpop.f32.mrf.mxu0
        %v1858 = vpop.f32.mrf.mxu0
        %v1859 = vadd.f32 0.0, %v1858
        %v1860 = vpop.f32.mrf.mxu0
        %1861 = vmatprep.mubr.bf16.mxu0 0
        %1862 = vmatmul.mubr.bf16.gmra.mxu0 %v1810
        %v1863 = vpop.f32.mrf.mxu0
        %v1864 = vadd.f32 0.0, %v1863
        %v1865 = vpop.f32.mrf.mxu0
        %v1866 = vpop.f32.mrf.mxu0
        %v1867 = vadd.f32 0.0, %v1866
        %v1868 = vpop.f32.mrf.mxu0
        %1869 = vmatprep.mubr.bf16.mxu0 0
        %1870 = vmatmul.mubr.bf16.gmra.mxu0 %v1813
        %v1871 = vpop.f32.mrf.mxu0
        %v1872 = vadd.f32 0.0, %v1871
        %v1873 = vpop.f32.mrf.mxu0
        %v1874 = vpop.f32.mrf.mxu0
        %v1875 = vadd.f32 0.0, %v1874
        %v1876 = vpop.f32.mrf.mxu0
        %1877 = vmatprep.mubr.bf16.mxu0 0
        %1878 = vmatmul.mubr.bf16.gmra.mxu0 %v1816
        %v1879 = vpop.f32.mrf.mxu0
        %v1880 = vadd.f32 0.0, %v1879
        %v1881 = vpop.f32.mrf.mxu0
        %v1882 = vpop.f32.mrf.mxu0
        %v1883 = vadd.f32 0.0, %v1882
        %v1884 = vpop.f32.mrf.mxu0
        %1885 = vdwg.mxu0
        %v1886 = vadd.f32 %v1781, %v1856
        %v1887 = vadd.f32 %v1782, %v1859
        %v1888 = vadd.f32 %v1783, %v1864
        %v1889 = vadd.f32 %v1784, %v1867
        %v1890 = vadd.f32 %v1785, %v1872
        %v1891 = vadd.f32 %v1786, %v1875
        %v1892 = vadd.f32 %v1787, %v1880
        %v1893 = vadd.f32 %v1788, %v1883
        %v1894 = vld [vmem:[%s1 + $0xc] sm:$0x3]
        %v1903 = vunpack.c.l.b16 %v743
        %v1904 = vunpack.c.l.b16 %v744
        %v1905 = vunpack.c.l.b16 %v745
        %v1906 = vunpack.c.l.b16 %v746
        %v1907 = vunpack.c.l.b16 %v747
        %v1908 = vunpack.c.l.b16 %v748
        %v1909 = vunpack.c.l.b16 %v749
        %v1910 = vunpack.c.l.b16 %v750
        %v1911 = vpack.c.b16 %v1904, %v1903
        %v1912 = vpack.c.b16 %v1906, %v1905
        %v1913 = vpack.c.b16 %v1908, %v1907
        %v1914 = vpack.c.b16 %v1910, %v1909
        %v1916 = vsel %vm1284, %v1911, 0
        %v1919 = vsel %vm1284, %v1912, 0
        %v1922 = vsel %vm1284, %v1913, 0
        %v1925 = vsel %vm1284, %v1914, 0
        %v1928 = vsel %vm1297, %v1894, 0
        %1930 = vmatprep.subr.bf16.mxu0 0
        %1931 = vmatpush1.bf16.msra.mxu0 0
        %1932 = vmatprep.subr.bf16.mxu0 0
        %1933 = vmatpush1.bf16.msra.mxu0 0
        %1934 = vmatprep.subr.bf16.mxu0 0
        %1935 = vmatpush1.bf16.msra.mxu0 0
        %1936 = vmatprep.subr.bf16.mxu0 0
        %1937 = vmatpush1.bf16.msra.mxu0 0
        %1938 = vmatprep.subr.bf16.mxu0 0
        %1939 = vmatpush1.bf16.msra.mxu0 0
        %1940 = vmatprep.subr.bf16.mxu0 0
        %1941 = vmatpush1.bf16.msra.mxu0 0
        %1942 = vmatprep.subr.bf16.mxu0 0
        %1943 = vmatpush1.bf16.msra.mxu0 0
        %1944 = vmatprep.subr.bf16.mxu0 0
        %1945 = vmatpush1.bf16.msra.mxu0 %v1928
        %1946 = vmatprep.subr.bf16.mxu0 0
        %1947 = vmatpush2.bf16.msra.mxu0 0
        %1948 = vmatprep.subr.bf16.mxu0 0
        %1949 = vmatpush2.bf16.msra.mxu0 0
        %1950 = vmatprep.subr.bf16.mxu0 0
        %1951 = vmatpush2.bf16.msra.mxu0 0
        %1952 = vmatprep.subr.bf16.mxu0 0
        %1953 = vmatpush2.bf16.msra.mxu0 0
        %1954 = vmatprep.subr.bf16.mxu0 0
        %1955 = vmatpush2.bf16.msra.mxu0 0
        %1956 = vmatprep.subr.bf16.mxu0 0
        %1957 = vmatpush2.bf16.msra.mxu0 0
        %1958 = vmatprep.subr.bf16.mxu0 0
        %1959 = vmatpush2.bf16.msra.mxu0 0
        %1960 = vmatprep.subr.bf16.mxu0 0
        %1961 = vmatpush2.bf16.msra.mxu0 0
        %1962 = vmatprep.mubr.bf16.mxu0 0
        %1963 = vmatmul.mubr.bf16.gmra.mxu0 %v1916
        %v1964 = vpop.f32.mrf.mxu0
        %v1965 = vadd.f32 0.0, %v1964
        %v1966 = vpop.f32.mrf.mxu0
        %v1967 = vpop.f32.mrf.mxu0
        %v1968 = vadd.f32 0.0, %v1967
        %v1969 = vpop.f32.mrf.mxu0
        %1970 = vmatprep.mubr.bf16.mxu0 0
        %1971 = vmatmul.mubr.bf16.gmra.mxu0 %v1919
        %v1972 = vpop.f32.mrf.mxu0
        %v1973 = vadd.f32 0.0, %v1972
        %v1974 = vpop.f32.mrf.mxu0
        %v1975 = vpop.f32.mrf.mxu0
        %v1976 = vadd.f32 0.0, %v1975
        %v1977 = vpop.f32.mrf.mxu0
        %1978 = vmatprep.mubr.bf16.mxu0 0
        %1979 = vmatmul.mubr.bf16.gmra.mxu0 %v1922
        %v1980 = vpop.f32.mrf.mxu0
        %v1981 = vadd.f32 0.0, %v1980
        %v1982 = vpop.f32.mrf.mxu0
        %v1983 = vpop.f32.mrf.mxu0
        %v1984 = vadd.f32 0.0, %v1983
        %v1985 = vpop.f32.mrf.mxu0
        %1986 = vmatprep.mubr.bf16.mxu0 0
        %1987 = vmatmul.mubr.bf16.gmra.mxu0 %v1925
        %v1988 = vpop.f32.mrf.mxu0
        %v1989 = vadd.f32 0.0, %v1988
        %v1990 = vpop.f32.mrf.mxu0
        %v1991 = vpop.f32.mrf.mxu0
        %v1992 = vadd.f32 0.0, %v1991
        %v1993 = vpop.f32.mrf.mxu0
        %1994 = vdwg.mxu0
        %v1995 = vadd.f32 %v1886, %v1965
        %v1996 = vadd.f32 %v1887, %v1968
        %v1997 = vadd.f32 %v1888, %v1973
        %v1998 = vadd.f32 %v1889, %v1976
        %v1999 = vadd.f32 %v1890, %v1981
        %v2000 = vadd.f32 %v1891, %v1984
        %v2001 = vadd.f32 %v1892, %v1989
        %v2002 = vadd.f32 %v1893, %v1992
        %v2003 = vld [vmem:[%s1 + $0xc] sm:$0xc]
        %v2012 = vunpack.c.l.b16 %v752
        %v2013 = vunpack.c.l.b16 %v753
        %v2014 = vunpack.c.l.b16 %v754
        %v2015 = vunpack.c.l.b16 %v755
        %v2016 = vunpack.c.l.b16 %v756
        %v2017 = vunpack.c.l.b16 %v757
        %v2018 = vunpack.c.l.b16 %v758
        %v2019 = vunpack.c.l.b16 %v759
        %v2020 = vpack.c.b16 %v2013, %v2012
        %v2021 = vpack.c.b16 %v2015, %v2014
        %v2022 = vpack.c.b16 %v2017, %v2016
        %v2023 = vpack.c.b16 %v2019, %v2018
        %v2025 = vunpack.c.l.b16 %v2003
        %v2026 = vpack.c.b16 %v2025, %v2025
        %v2027 = vrot.slane %v2026, 2
        %v2029 = vsel %vm1284, %v2020, 0
        %v2032 = vsel %vm1284, %v2021, 0
        %v2035 = vsel %vm1284, %v2022, 0
        %v2038 = vsel %vm1284, %v2023, 0
        %v2041 = vsel %vm1297, %v2027, 0
        %2043 = vmatprep.subr.bf16.mxu0 0
        %2044 = vmatpush1.bf16.msra.mxu0 0
        %2045 = vmatprep.subr.bf16.mxu0 0
        %2046 = vmatpush1.bf16.msra.mxu0 0
        %2047 = vmatprep.subr.bf16.mxu0 0
        %2048 = vmatpush1.bf16.msra.mxu0 0
        %2049 = vmatprep.subr.bf16.mxu0 0
        %2050 = vmatpush1.bf16.msra.mxu0 0
        %2051 = vmatprep.subr.bf16.mxu0 0
        %2052 = vmatpush1.bf16.msra.mxu0 0
        %2053 = vmatprep.subr.bf16.mxu0 0
        %2054 = vmatpush1.bf16.msra.mxu0 0
        %2055 = vmatprep.subr.bf16.mxu0 0
        %2056 = vmatpush1.bf16.msra.mxu0 0
        %2057 = vmatprep.subr.bf16.mxu0 0
        %2058 = vmatpush1.bf16.msra.mxu0 %v2041
        %2059 = vmatprep.subr.bf16.mxu0 0
        %2060 = vmatpush2.bf16.msra.mxu0 0
        %2061 = vmatprep.subr.bf16.mxu0 0
        %2062 = vmatpush2.bf16.msra.mxu0 0
        %2063 = vmatprep.subr.bf16.mxu0 0
        %2064 = vmatpush2.bf16.msra.mxu0 0
        %2065 = vmatprep.subr.bf16.mxu0 0
        %2066 = vmatpush2.bf16.msra.mxu0 0
        %2067 = vmatprep.subr.bf16.mxu0 0
        %2068 = vmatpush2.bf16.msra.mxu0 0
        %2069 = vmatprep.subr.bf16.mxu0 0
        %2070 = vmatpush2.bf16.msra.mxu0 0
        %2071 = vmatprep.subr.bf16.mxu0 0
        %2072 = vmatpush2.bf16.msra.mxu0 0
        %2073 = vmatprep.subr.bf16.mxu0 0
        %2074 = vmatpush2.bf16.msra.mxu0 0
        %2075 = vmatprep.mubr.bf16.mxu0 0
        %2076 = vmatmul.mubr.bf16.gmra.mxu0 %v2029
        %v2077 = vpop.f32.mrf.mxu0
        %v2078 = vadd.f32 0.0, %v2077
        %v2079 = vpop.f32.mrf.mxu0
        %v2080 = vpop.f32.mrf.mxu0
        %v2081 = vadd.f32 0.0, %v2080
        %v2082 = vpop.f32.mrf.mxu0
        %2083 = vmatprep.mubr.bf16.mxu0 0
        %2084 = vmatmul.mubr.bf16.gmra.mxu0 %v2032
        %v2085 = vpop.f32.mrf.mxu0
        %v2086 = vadd.f32 0.0, %v2085
        %v2087 = vpop.f32.mrf.mxu0
        %v2088 = vpop.f32.mrf.mxu0
        %v2089 = vadd.f32 0.0, %v2088
        %v2090 = vpop.f32.mrf.mxu0
        %2091 = vmatprep.mubr.bf16.mxu0 0
        %2092 = vmatmul.mubr.bf16.gmra.mxu0 %v2035
        %v2093 = vpop.f32.mrf.mxu0
        %v2094 = vadd.f32 0.0, %v2093
        %v2095 = vpop.f32.mrf.mxu0
        %v2096 = vpop.f32.mrf.mxu0
        %v2097 = vadd.f32 0.0, %v2096
        %v2098 = vpop.f32.mrf.mxu0
        %2099 = vmatprep.mubr.bf16.mxu0 0
        %2100 = vmatmul.mubr.bf16.gmra.mxu0 %v2038
        %v2101 = vpop.f32.mrf.mxu0
        %v2102 = vadd.f32 0.0, %v2101
        %v2103 = vpop.f32.mrf.mxu0
        %v2104 = vpop.f32.mrf.mxu0
        %v2105 = vadd.f32 0.0, %v2104
        %v2106 = vpop.f32.mrf.mxu0
        %2107 = vdwg.mxu0
        %v2108 = vadd.f32 %v1995, %v2078
        %v2109 = vadd.f32 %v1996, %v2081
        %v2110 = vadd.f32 %v1997, %v2086
        %v2111 = vadd.f32 %v1998, %v2089
        %v2112 = vadd.f32 %v1999, %v2094
        %v2113 = vadd.f32 %v2000, %v2097
        %v2114 = vadd.f32 %v2001, %v2102
        %v2115 = vadd.f32 %v2002, %v2105
        %v2116 = vld [vmem:[%s1 + $0x10] sm:$0x3]
        %v2117 = vunpack.c.l.b16 %v781
        %v2118 = vunpack.c.l.b16 %v795
        %v2119 = vunpack.c.l.b16 %v809
        %v2120 = vunpack.c.l.b16 %v823
        %v2121 = vunpack.c.l.b16 %v837
        %v2122 = vunpack.c.l.b16 %v851
        %v2123 = vunpack.c.l.b16 %v865
        %v2124 = vunpack.c.l.b16 %v879
        %v2125 = vpack.c.b16 %v2118, %v2117
        %v2126 = vpack.c.b16 %v2120, %v2119
        %v2127 = vpack.c.b16 %v2122, %v2121
        %v2128 = vpack.c.b16 %v2124, %v2123
        %v2130 = vsel %vm1284, %v2125, 0
        %v2133 = vsel %vm1284, %v2126, 0
        %v2136 = vsel %vm1284, %v2127, 0
        %v2139 = vsel %vm1284, %v2128, 0
        %v2142 = vsel %vm1297, %v2116, 0
        %2144 = vmatprep.subr.bf16.mxu0 0
        %2145 = vmatpush1.bf16.msra.mxu0 0
        %2146 = vmatprep.subr.bf16.mxu0 0
        %2147 = vmatpush1.bf16.msra.mxu0 0
        %2148 = vmatprep.subr.bf16.mxu0 0
        %2149 = vmatpush1.bf16.msra.mxu0 0
        %2150 = vmatprep.subr.bf16.mxu0 0
        %2151 = vmatpush1.bf16.msra.mxu0 0
        %2152 = vmatprep.subr.bf16.mxu0 0
        %2153 = vmatpush1.bf16.msra.mxu0 0
        %2154 = vmatprep.subr.bf16.mxu0 0
        %2155 = vmatpush1.bf16.msra.mxu0 0
        %2156 = vmatprep.subr.bf16.mxu0 0
        %2157 = vmatpush1.bf16.msra.mxu0 0
        %2158 = vmatprep.subr.bf16.mxu0 0
        %2159 = vmatpush1.bf16.msra.mxu0 %v2142
        %2160 = vmatprep.subr.bf16.mxu0 0
        %2161 = vmatpush2.bf16.msra.mxu0 0
        %2162 = vmatprep.subr.bf16.mxu0 0
        %2163 = vmatpush2.bf16.msra.mxu0 0
        %2164 = vmatprep.subr.bf16.mxu0 0
        %2165 = vmatpush2.bf16.msra.mxu0 0
        %2166 = vmatprep.subr.bf16.mxu0 0
        %2167 = vmatpush2.bf16.msra.mxu0 0
        %2168 = vmatprep.subr.bf16.mxu0 0
        %2169 = vmatpush2.bf16.msra.mxu0 0
        %2170 = vmatprep.subr.bf16.mxu0 0
        %2171 = vmatpush2.bf16.msra.mxu0 0
        %2172 = vmatprep.subr.bf16.mxu0 0
        %2173 = vmatpush2.bf16.msra.mxu0 0
        %2174 = vmatprep.subr.bf16.mxu0 0
        %2175 = vmatpush2.bf16.msra.mxu0 0
        %2176 = vmatprep.mubr.bf16.mxu0 0
        %2177 = vmatmul.mubr.bf16.gmra.mxu0 %v2130
        %v2178 = vpop.f32.mrf.mxu0
        %v2179 = vadd.f32 0.0, %v2178
        %v2180 = vpop.f32.mrf.mxu0
        %v2181 = vpop.f32.mrf.mxu0
        %v2182 = vadd.f32 0.0, %v2181
        %v2183 = vpop.f32.mrf.mxu0
        %2184 = vmatprep.mubr.bf16.mxu0 0
        %2185 = vmatmul.mubr.bf16.gmra.mxu0 %v2133
        %v2186 = vpop.f32.mrf.mxu0
        %v2187 = vadd.f32 0.0, %v2186
        %v2188 = vpop.f32.mrf.mxu0
        %v2189 = vpop.f32.mrf.mxu0
        %v2190 = vadd.f32 0.0, %v2189
        %v2191 = vpop.f32.mrf.mxu0
        %2192 = vmatprep.mubr.bf16.mxu0 0
        %2193 = vmatmul.mubr.bf16.gmra.mxu0 %v2136
        %v2194 = vpop.f32.mrf.mxu0
        %v2195 = vadd.f32 0.0, %v2194
        %v2196 = vpop.f32.mrf.mxu0
        %v2197 = vpop.f32.mrf.mxu0
        %v2198 = vadd.f32 0.0, %v2197
        %v2199 = vpop.f32.mrf.mxu0
        %2200 = vmatprep.mubr.bf16.mxu0 0
        %2201 = vmatmul.mubr.bf16.gmra.mxu0 %v2139
        %v2202 = vpop.f32.mrf.mxu0
        %v2203 = vadd.f32 0.0, %v2202
        %v2204 = vpop.f32.mrf.mxu0
        %v2205 = vpop.f32.mrf.mxu0
        %v2206 = vadd.f32 0.0, %v2205
        %v2207 = vpop.f32.mrf.mxu0
        %2208 = vdwg.mxu0
        %v2209 = vadd.f32 %v2108, %v2179
        %v2210 = vadd.f32 %v2109, %v2182
        %v2211 = vadd.f32 %v2110, %v2187
        %v2212 = vadd.f32 %v2111, %v2190
        %v2213 = vadd.f32 %v2112, %v2195
        %v2214 = vadd.f32 %v2113, %v2198
        %v2215 = vadd.f32 %v2114, %v2203
        %v2216 = vadd.f32 %v2115, %v2206
        %v2217 = vld [vmem:[%s2] sm:$0x1]
        %v2219 = vlaneseq
        %v2220 = vshrl.u32 %v2219, 7
        %v2221 = vsub.s32 0, %v2220
        %v2222 = vrot.slane %v2217, %v2221
        %v2224 = vadd.f32 %v2209, %v2222
        %v2225 = vadd.f32 %v2210, %v2222
        %v2226 = vadd.f32 %v2211, %v2222
        %v2227 = vadd.f32 %v2212, %v2222
        %v2228 = vadd.f32 %v2213, %v2222
        %v2229 = vadd.f32 %v2214, %v2222
        %v2230 = vadd.f32 %v2215, %v2222
        %v2231 = vadd.f32 %v2216, %v2222
        %v2232 = vmax.f32 %v2224, 0.0
        %v2233 = vmax.f32 %v2225, 0.0
        %v2234 = vmax.f32 %v2226, 0.0
        %v2235 = vmax.f32 %v2227, 0.0
        %v2236 = vmax.f32 %v2228, 0.0
        %v2237 = vmax.f32 %v2229, 0.0
        %v2238 = vmax.f32 %v2230, 0.0
        %v2239 = vmax.f32 %v2231, 0.0
        %2240 = vmatprep.subr.bf16.mxu0 0
        %2241 = vmatpush1.bf16.msra.mxu0 0
        %2242 = vmatprep.subr.bf16.mxu0 0
        %2243 = vmatpush1.bf16.msra.mxu0 0
        %2244 = vmatprep.subr.bf16.mxu0 0
        %2245 = vmatpush1.bf16.msra.mxu0 0
        %2246 = vmatprep.subr.bf16.mxu0 0
        %2247 = vmatpush1.bf16.msra.mxu0 0
        %2248 = vmatprep.subr.bf16.mxu0 0
        %2249 = vmatpush1.bf16.msra.mxu0 0
        %2250 = vmatprep.subr.bf16.mxu0 0
        %2251 = vmatpush1.bf16.msra.mxu0 0
        %2252 = vmatprep.subr.bf16.mxu0 0
        %2253 = vmatpush1.bf16.msra.mxu0 0
        %2254 = vmatprep.subr.bf16.mxu0 0
        %2255 = vmatpush1.bf16.msra.mxu0 %v1299
        %2256 = vmatprep.subr.bf16.mxu0 0
        %2257 = vmatpush2.bf16.msra.mxu0 0
        %2258 = vmatprep.subr.bf16.mxu0 0
        %2259 = vmatpush2.bf16.msra.mxu0 0
        %2260 = vmatprep.subr.bf16.mxu0 0
        %2261 = vmatpush2.bf16.msra.mxu0 0
        %2262 = vmatprep.subr.bf16.mxu0 0
        %2263 = vmatpush2.bf16.msra.mxu0 0
        %2264 = vmatprep.subr.bf16.mxu0 0
        %2265 = vmatpush2.bf16.msra.mxu0 0
        %2266 = vmatprep.subr.bf16.mxu0 0
        %2267 = vmatpush2.bf16.msra.mxu0 0
        %2268 = vmatprep.subr.bf16.mxu0 0
        %2269 = vmatpush2.bf16.msra.mxu0 0
        %2270 = vmatprep.subr.bf16.mxu0 0
        %2271 = vmatpush2.bf16.msra.mxu0 0
        %2272 = vmatprep.mubr.bf16.mxu0 0
        %2273 = vmatmul.mubr.bf16.gmra.mxu0 %v1480
        %v2274 = vpop.f32.mrf.mxu0
        %v2275 = vadd.f32 0.0, %v2274
        %v2276 = vpop.f32.mrf.mxu0
        %v2277 = vpop.f32.mrf.mxu0
        %v2278 = vadd.f32 0.0, %v2277
        %v2279 = vpop.f32.mrf.mxu0
        %2280 = vmatprep.mubr.bf16.mxu0 0
        %2281 = vmatmul.mubr.bf16.gmra.mxu0 %v1483
        %v2282 = vpop.f32.mrf.mxu0
        %v2283 = vadd.f32 0.0, %v2282
        %v2284 = vpop.f32.mrf.mxu0
        %v2285 = vpop.f32.mrf.mxu0
        %v2286 = vadd.f32 0.0, %v2285
        %v2287 = vpop.f32.mrf.mxu0
        %2288 = vmatprep.mubr.bf16.mxu0 0
        %2289 = vmatmul.mubr.bf16.gmra.mxu0 %v1486
        %v2290 = vpop.f32.mrf.mxu0
        %v2291 = vadd.f32 0.0, %v2290
        %v2292 = vpop.f32.mrf.mxu0
        %v2293 = vpop.f32.mrf.mxu0
        %v2294 = vadd.f32 0.0, %v2293
        %v2295 = vpop.f32.mrf.mxu0
        %2296 = vmatprep.mubr.bf16.mxu0 0
        %2297 = vmatmul.mubr.bf16.gmra.mxu0 %v1489
        %v2298 = vpop.f32.mrf.mxu0
        %v2299 = vadd.f32 0.0, %v2298
        %v2300 = vpop.f32.mrf.mxu0
        %v2301 = vpop.f32.mrf.mxu0
        %v2302 = vadd.f32 0.0, %v2301
        %v2303 = vpop.f32.mrf.mxu0
        %2304 = vdwg.mxu0
        %2305 = vmatprep.subr.bf16.mxu0 0
        %2306 = vmatpush1.bf16.msra.mxu0 0
        %2307 = vmatprep.subr.bf16.mxu0 0
        %2308 = vmatpush1.bf16.msra.mxu0 0
        %2309 = vmatprep.subr.bf16.mxu0 0
        %2310 = vmatpush1.bf16.msra.mxu0 0
        %2311 = vmatprep.subr.bf16.mxu0 0
        %2312 = vmatpush1.bf16.msra.mxu0 0
        %2313 = vmatprep.subr.bf16.mxu0 0
        %2314 = vmatpush1.bf16.msra.mxu0 0
        %2315 = vmatprep.subr.bf16.mxu0 0
        %2316 = vmatpush1.bf16.msra.mxu0 0
        %2317 = vmatprep.subr.bf16.mxu0 0
        %2318 = vmatpush1.bf16.msra.mxu0 0
        %2319 = vmatprep.subr.bf16.mxu0 0
        %2320 = vmatpush1.bf16.msra.mxu0 %v1399
        %2321 = vmatprep.subr.bf16.mxu0 0
        %2322 = vmatpush2.bf16.msra.mxu0 0
        %2323 = vmatprep.subr.bf16.mxu0 0
        %2324 = vmatpush2.bf16.msra.mxu0 0
        %2325 = vmatprep.subr.bf16.mxu0 0
        %2326 = vmatpush2.bf16.msra.mxu0 0
        %2327 = vmatprep.subr.bf16.mxu0 0
        %2328 = vmatpush2.bf16.msra.mxu0 0
        %2329 = vmatprep.subr.bf16.mxu0 0
        %2330 = vmatpush2.bf16.msra.mxu0 0
        %2331 = vmatprep.subr.bf16.mxu0 0
        %2332 = vmatpush2.bf16.msra.mxu0 0
        %2333 = vmatprep.subr.bf16.mxu0 0
        %2334 = vmatpush2.bf16.msra.mxu0 0
        %2335 = vmatprep.subr.bf16.mxu0 0
        %2336 = vmatpush2.bf16.msra.mxu0 0
        %2337 = vmatprep.mubr.bf16.mxu0 0
        %2338 = vmatmul.mubr.bf16.gmra.mxu0 %v1286
        %v2339 = vpop.f32.mrf.mxu0
        %v2340 = vadd.f32 %v2275, %v2339
        %v2341 = vpop.f32.mrf.mxu0
        %v2342 = vpop.f32.mrf.mxu0
        %v2343 = vadd.f32 %v2278, %v2342
        %v2344 = vpop.f32.mrf.mxu0
        %2345 = vmatprep.mubr.bf16.mxu0 0
        %2346 = vmatmul.mubr.bf16.gmra.mxu0 %v1289
        %v2347 = vpop.f32.mrf.mxu0
        %v2348 = vadd.f32 %v2283, %v2347
        %v2349 = vpop.f32.mrf.mxu0
        %v2350 = vpop.f32.mrf.mxu0
        %v2351 = vadd.f32 %v2286, %v2350
        %v2352 = vpop.f32.mrf.mxu0
        %2353 = vmatprep.mubr.bf16.mxu0 0
        %2354 = vmatmul.mubr.bf16.gmra.mxu0 %v1292
        %v2355 = vpop.f32.mrf.mxu0
        %v2356 = vadd.f32 %v2291, %v2355
        %v2357 = vpop.f32.mrf.mxu0
        %v2358 = vpop.f32.mrf.mxu0
        %v2359 = vadd.f32 %v2294, %v2358
        %v2360 = vpop.f32.mrf.mxu0
        %2361 = vmatprep.mubr.bf16.mxu0 0
        %2362 = vmatmul.mubr.bf16.gmra.mxu0 %v1295
        %v2363 = vpop.f32.mrf.mxu0
        %v2364 = vadd.f32 %v2299, %v2363
        %v2365 = vpop.f32.mrf.mxu0
        %v2366 = vpop.f32.mrf.mxu0
        %v2367 = vadd.f32 %v2302, %v2366
        %v2368 = vpop.f32.mrf.mxu0
        %2369 = vdwg.mxu0
        %v2370 = vunpack.c.l.b16 %v385
        %v2371 = vunpack.c.l.b16 %v399
        %v2372 = vunpack.c.l.b16 %v413
        %v2373 = vunpack.c.l.b16 %v427
        %v2374 = vunpack.c.l.b16 %v441
        %v2375 = vunpack.c.l.b16 %v455
        %v2376 = vunpack.c.l.b16 %v469
        %v2377 = vunpack.c.l.b16 %v483
        %v2378 = vpack.c.b16 %v2371, %v2370
        %v2379 = vpack.c.b16 %v2373, %v2372
        %v2380 = vpack.c.b16 %v2375, %v2374
        %v2381 = vpack.c.b16 %v2377, %v2376
        %v2383 = vsel %vm1284, %v2378, 0
        %v2386 = vsel %vm1284, %v2379, 0
        %v2389 = vsel %vm1284, %v2380, 0
        %v2392 = vsel %vm1284, %v2381, 0
        %2394 = vmatprep.subr.bf16.mxu0 0
        %2395 = vmatpush1.bf16.msra.mxu0 0
        %2396 = vmatprep.subr.bf16.mxu0 0
        %2397 = vmatpush1.bf16.msra.mxu0 0
        %2398 = vmatprep.subr.bf16.mxu0 0
        %2399 = vmatpush1.bf16.msra.mxu0 0
        %2400 = vmatprep.subr.bf16.mxu0 0
        %2401 = vmatpush1.bf16.msra.mxu0 0
        %2402 = vmatprep.subr.bf16.mxu0 0
        %2403 = vmatpush1.bf16.msra.mxu0 0
        %2404 = vmatprep.subr.bf16.mxu0 0
        %2405 = vmatpush1.bf16.msra.mxu0 0
        %2406 = vmatprep.subr.bf16.mxu0 0
        %2407 = vmatpush1.bf16.msra.mxu0 0
        %2408 = vmatprep.subr.bf16.mxu0 0
        %2409 = vmatpush1.bf16.msra.mxu0 %v1492
        %2410 = vmatprep.subr.bf16.mxu0 0
        %2411 = vmatpush2.bf16.msra.mxu0 0
        %2412 = vmatprep.subr.bf16.mxu0 0
        %2413 = vmatpush2.bf16.msra.mxu0 0
        %2414 = vmatprep.subr.bf16.mxu0 0
        %2415 = vmatpush2.bf16.msra.mxu0 0
        %2416 = vmatprep.subr.bf16.mxu0 0
        %2417 = vmatpush2.bf16.msra.mxu0 0
        %2418 = vmatprep.subr.bf16.mxu0 0
        %2419 = vmatpush2.bf16.msra.mxu0 0
        %2420 = vmatprep.subr.bf16.mxu0 0
        %2421 = vmatpush2.bf16.msra.mxu0 0
        %2422 = vmatprep.subr.bf16.mxu0 0
        %2423 = vmatpush2.bf16.msra.mxu0 0
        %2424 = vmatprep.subr.bf16.mxu0 0
        %2425 = vmatpush2.bf16.msra.mxu0 0
        %2426 = vmatprep.mubr.bf16.mxu0 0
        %2427 = vmatmul.mubr.bf16.gmra.mxu0 %v2383
        %v2428 = vpop.f32.mrf.mxu0
        %v2429 = vadd.f32 0.0, %v2428
        %v2430 = vpop.f32.mrf.mxu0
        %v2431 = vpop.f32.mrf.mxu0
        %v2432 = vadd.f32 0.0, %v2431
        %v2433 = vpop.f32.mrf.mxu0
        %2434 = vmatprep.mubr.bf16.mxu0 0
        %2435 = vmatmul.mubr.bf16.gmra.mxu0 %v2386
        %v2436 = vpop.f32.mrf.mxu0
        %v2437 = vadd.f32 0.0, %v2436
        %v2438 = vpop.f32.mrf.mxu0
        %v2439 = vpop.f32.mrf.mxu0
        %v2440 = vadd.f32 0.0, %v2439
        %v2441 = vpop.f32.mrf.mxu0
        %2442 = vmatprep.mubr.bf16.mxu0 0
        %2443 = vmatmul.mubr.bf16.gmra.mxu0 %v2389
        %v2444 = vpop.f32.mrf.mxu0
        %v2445 = vadd.f32 0.0, %v2444
        %v2446 = vpop.f32.mrf.mxu0
        %v2447 = vpop.f32.mrf.mxu0
        %v2448 = vadd.f32 0.0, %v2447
        %v2449 = vpop.f32.mrf.mxu0
        %2450 = vmatprep.mubr.bf16.mxu0 0
        %2451 = vmatmul.mubr.bf16.gmra.mxu0 %v2392
        %v2452 = vpop.f32.mrf.mxu0
        %v2453 = vadd.f32 0.0, %v2452
        %v2454 = vpop.f32.mrf.mxu0
        %v2455 = vpop.f32.mrf.mxu0
        %v2456 = vadd.f32 0.0, %v2455
        %v2457 = vpop.f32.mrf.mxu0
        %2458 = vdwg.mxu0
        %v2459 = vadd.f32 %v2340, %v2429
        %v2460 = vadd.f32 %v2343, %v2432
        %v2461 = vadd.f32 %v2348, %v2437
        %v2462 = vadd.f32 %v2351, %v2440
        %v2463 = vadd.f32 %v2356, %v2445
        %v2464 = vadd.f32 %v2359, %v2448
        %v2465 = vadd.f32 %v2364, %v2453
        %v2466 = vadd.f32 %v2367, %v2456
        %2467 = vmatprep.subr.bf16.mxu0 0
        %2468 = vmatpush1.bf16.msra.mxu0 0
        %2469 = vmatprep.subr.bf16.mxu0 0
        %2470 = vmatpush1.bf16.msra.mxu0 0
        %2471 = vmatprep.subr.bf16.mxu0 0
        %2472 = vmatpush1.bf16.msra.mxu0 0
        %2473 = vmatprep.subr.bf16.mxu0 0
        %2474 = vmatpush1.bf16.msra.mxu0 0
        %2475 = vmatprep.subr.bf16.mxu0 0
        %2476 = vmatpush1.bf16.msra.mxu0 0
        %2477 = vmatprep.subr.bf16.mxu0 0
        %2478 = vmatpush1.bf16.msra.mxu0 0
        %2479 = vmatprep.subr.bf16.mxu0 0
        %2480 = vmatpush1.bf16.msra.mxu0 0
        %2481 = vmatprep.subr.bf16.mxu0 0
        %2482 = vmatpush1.bf16.msra.mxu0 %v1605
        %2483 = vmatprep.subr.bf16.mxu0 0
        %2484 = vmatpush2.bf16.msra.mxu0 0
        %2485 = vmatprep.subr.bf16.mxu0 0
        %2486 = vmatpush2.bf16.msra.mxu0 0
        %2487 = vmatprep.subr.bf16.mxu0 0
        %2488 = vmatpush2.bf16.msra.mxu0 0
        %2489 = vmatprep.subr.bf16.mxu0 0
        %2490 = vmatpush2.bf16.msra.mxu0 0
        %2491 = vmatprep.subr.bf16.mxu0 0
        %2492 = vmatpush2.bf16.msra.mxu0 0
        %2493 = vmatprep.subr.bf16.mxu0 0
        %2494 = vmatpush2.bf16.msra.mxu0 0
        %2495 = vmatprep.subr.bf16.mxu0 0
        %2496 = vmatpush2.bf16.msra.mxu0 0
        %2497 = vmatprep.subr.bf16.mxu0 0
        %2498 = vmatpush2.bf16.msra.mxu0 0
        %2499 = vmatprep.mubr.bf16.mxu0 0
        %2500 = vmatmul.mubr.bf16.gmra.mxu0 %v1702
        %v2501 = vpop.f32.mrf.mxu0
        %v2502 = vadd.f32 0.0, %v2501
        %v2503 = vpop.f32.mrf.mxu0
        %v2504 = vpop.f32.mrf.mxu0
        %v2505 = vadd.f32 0.0, %v2504
        %v2506 = vpop.f32.mrf.mxu0
        %2507 = vmatprep.mubr.bf16.mxu0 0
        %2508 = vmatmul.mubr.bf16.gmra.mxu0 %v1705
        %v2509 = vpop.f32.mrf.mxu0
        %v2510 = vadd.f32 0.0, %v2509
        %v2511 = vpop.f32.mrf.mxu0
        %v2512 = vpop.f32.mrf.mxu0
        %v2513 = vadd.f32 0.0, %v2512
        %v2514 = vpop.f32.mrf.mxu0
        %2515 = vmatprep.mubr.bf16.mxu0 0
        %2516 = vmatmul.mubr.bf16.gmra.mxu0 %v1708
        %v2517 = vpop.f32.mrf.mxu0
        %v2518 = vadd.f32 0.0, %v2517
        %v2519 = vpop.f32.mrf.mxu0
        %v2520 = vpop.f32.mrf.mxu0
        %v2521 = vadd.f32 0.0, %v2520
        %v2522 = vpop.f32.mrf.mxu0
        %2523 = vmatprep.mubr.bf16.mxu0 0
        %2524 = vmatmul.mubr.bf16.gmra.mxu0 %v1711
        %v2525 = vpop.f32.mrf.mxu0
        %v2526 = vadd.f32 0.0, %v2525
        %v2527 = vpop.f32.mrf.mxu0
        %v2528 = vpop.f32.mrf.mxu0
        %v2529 = vadd.f32 0.0, %v2528
        %v2530 = vpop.f32.mrf.mxu0
        %2531 = vdwg.mxu0
        %v2532 = vadd.f32 %v2459, %v2502
        %v2533 = vadd.f32 %v2460, %v2505
        %v2534 = vadd.f32 %v2461, %v2510
        %v2535 = vadd.f32 %v2462, %v2513
        %v2536 = vadd.f32 %v2463, %v2518
        %v2537 = vadd.f32 %v2464, %v2521
        %v2538 = vadd.f32 %v2465, %v2526
        %v2539 = vadd.f32 %v2466, %v2529
        %2540 = vmatprep.subr.bf16.mxu0 0
        %2541 = vmatpush1.bf16.msra.mxu0 0
        %2542 = vmatprep.subr.bf16.mxu0 0
        %2543 = vmatpush1.bf16.msra.mxu0 0
        %2544 = vmatprep.subr.bf16.mxu0 0
        %2545 = vmatpush1.bf16.msra.mxu0 0
        %2546 = vmatprep.subr.bf16.mxu0 0
        %2547 = vmatpush1.bf16.msra.mxu0 0
        %2548 = vmatprep.subr.bf16.mxu0 0
        %2549 = vmatpush1.bf16.msra.mxu0 0
        %2550 = vmatprep.subr.bf16.mxu0 0
        %2551 = vmatpush1.bf16.msra.mxu0 0
        %2552 = vmatprep.subr.bf16.mxu0 0
        %2553 = vmatpush1.bf16.msra.mxu0 0
        %2554 = vmatprep.subr.bf16.mxu0 0
        %2555 = vmatpush1.bf16.msra.mxu0 %v1714
        %2556 = vmatprep.subr.bf16.mxu0 0
        %2557 = vmatpush2.bf16.msra.mxu0 0
        %2558 = vmatprep.subr.bf16.mxu0 0
        %2559 = vmatpush2.bf16.msra.mxu0 0
        %2560 = vmatprep.subr.bf16.mxu0 0
        %2561 = vmatpush2.bf16.msra.mxu0 0
        %2562 = vmatprep.subr.bf16.mxu0 0
        %2563 = vmatpush2.bf16.msra.mxu0 0
        %2564 = vmatprep.subr.bf16.mxu0 0
        %2565 = vmatpush2.bf16.msra.mxu0 0
        %2566 = vmatprep.subr.bf16.mxu0 0
        %2567 = vmatpush2.bf16.msra.mxu0 0
        %2568 = vmatprep.subr.bf16.mxu0 0
        %2569 = vmatpush2.bf16.msra.mxu0 0
        %2570 = vmatprep.subr.bf16.mxu0 0
        %2571 = vmatpush2.bf16.msra.mxu0 0
        %2572 = vmatprep.mubr.bf16.mxu0 0
        %2573 = vmatmul.mubr.bf16.gmra.mxu0 %v1807
        %v2574 = vpop.f32.mrf.mxu0
        %v2575 = vadd.f32 0.0, %v2574
        %v2576 = vpop.f32.mrf.mxu0
        %v2577 = vpop.f32.mrf.mxu0
        %v2578 = vadd.f32 0.0, %v2577
        %v2579 = vpop.f32.mrf.mxu0
        %2580 = vmatprep.mubr.bf16.mxu0 0
        %2581 = vmatmul.mubr.bf16.gmra.mxu0 %v1810
        %v2582 = vpop.f32.mrf.mxu0
        %v2583 = vadd.f32 0.0, %v2582
        %v2584 = vpop.f32.mrf.mxu0
        %v2585 = vpop.f32.mrf.mxu0
        %v2586 = vadd.f32 0.0, %v2585
        %v2587 = vpop.f32.mrf.mxu0
        %2588 = vmatprep.mubr.bf16.mxu0 0
        %2589 = vmatmul.mubr.bf16.gmra.mxu0 %v1813
        %v2590 = vpop.f32.mrf.mxu0
        %v2591 = vadd.f32 0.0, %v2590
        %v2592 = vpop.f32.mrf.mxu0
        %v2593 = vpop.f32.mrf.mxu0
        %v2594 = vadd.f32 0.0, %v2593
        %v2595 = vpop.f32.mrf.mxu0
        %2596 = vmatprep.mubr.bf16.mxu0 0
        %2597 = vmatmul.mubr.bf16.gmra.mxu0 %v1816
        %v2598 = vpop.f32.mrf.mxu0
        %v2599 = vadd.f32 0.0, %v2598
        %v2600 = vpop.f32.mrf.mxu0
        %v2601 = vpop.f32.mrf.mxu0
        %v2602 = vadd.f32 0.0, %v2601
        %v2603 = vpop.f32.mrf.mxu0
        %2604 = vdwg.mxu0
        %v2605 = vadd.f32 %v2532, %v2575
        %v2606 = vadd.f32 %v2533, %v2578
        %v2607 = vadd.f32 %v2534, %v2583
        %v2608 = vadd.f32 %v2535, %v2586
        %v2609 = vadd.f32 %v2536, %v2591
        %v2610 = vadd.f32 %v2537, %v2594
        %v2611 = vadd.f32 %v2538, %v2599
        %v2612 = vadd.f32 %v2539, %v2602
        %v2613 = vunpack.c.l.b16 %v643
        %v2614 = vunpack.c.l.b16 %v657
        %v2615 = vunpack.c.l.b16 %v671
        %v2616 = vunpack.c.l.b16 %v685
        %v2617 = vunpack.c.l.b16 %v699
        %v2618 = vunpack.c.l.b16 %v713
        %v2619 = vunpack.c.l.b16 %v727
        %v2620 = vunpack.c.l.b16 %v741
        %v2621 = vpack.c.b16 %v2614, %v2613
        %v2622 = vpack.c.b16 %v2616, %v2615
        %v2623 = vpack.c.b16 %v2618, %v2617
        %v2624 = vpack.c.b16 %v2620, %v2619
        %v2626 = vsel %vm1284, %v2621, 0
        %v2629 = vsel %vm1284, %v2622, 0
        %v2632 = vsel %vm1284, %v2623, 0
        %v2635 = vsel %vm1284, %v2624, 0
        %2637 = vmatprep.subr.bf16.mxu0 0
        %2638 = vmatpush1.bf16.msra.mxu0 0
        %2639 = vmatprep.subr.bf16.mxu0 0
        %2640 = vmatpush1.bf16.msra.mxu0 0
        %2641 = vmatprep.subr.bf16.mxu0 0
        %2642 = vmatpush1.bf16.msra.mxu0 0
        %2643 = vmatprep.subr.bf16.mxu0 0
        %2644 = vmatpush1.bf16.msra.mxu0 0
        %2645 = vmatprep.subr.bf16.mxu0 0
        %2646 = vmatpush1.bf16.msra.mxu0 0
        %2647 = vmatprep.subr.bf16.mxu0 0
        %2648 = vmatpush1.bf16.msra.mxu0 0
        %2649 = vmatprep.subr.bf16.mxu0 0
        %2650 = vmatpush1.bf16.msra.mxu0 0
        %2651 = vmatprep.subr.bf16.mxu0 0
        %2652 = vmatpush1.bf16.msra.mxu0 %v1819
        %2653 = vmatprep.subr.bf16.mxu0 0
        %2654 = vmatpush2.bf16.msra.mxu0 0
        %2655 = vmatprep.subr.bf16.mxu0 0
        %2656 = vmatpush2.bf16.msra.mxu0 0
        %2657 = vmatprep.subr.bf16.mxu0 0
        %2658 = vmatpush2.bf16.msra.mxu0 0
        %2659 = vmatprep.subr.bf16.mxu0 0
        %2660 = vmatpush2.bf16.msra.mxu0 0
        %2661 = vmatprep.subr.bf16.mxu0 0
        %2662 = vmatpush2.bf16.msra.mxu0 0
        %2663 = vmatprep.subr.bf16.mxu0 0
        %2664 = vmatpush2.bf16.msra.mxu0 0
        %2665 = vmatprep.subr.bf16.mxu0 0
        %2666 = vmatpush2.bf16.msra.mxu0 0
        %2667 = vmatprep.subr.bf16.mxu0 0
        %2668 = vmatpush2.bf16.msra.mxu0 0
        %2669 = vmatprep.mubr.bf16.mxu0 0
        %2670 = vmatmul.mubr.bf16.gmra.mxu0 %v2626
        %v2671 = vpop.f32.mrf.mxu0
        %v2672 = vadd.f32 0.0, %v2671
        %v2673 = vpop.f32.mrf.mxu0
        %v2674 = vpop.f32.mrf.mxu0
        %v2675 = vadd.f32 0.0, %v2674
        %v2676 = vpop.f32.mrf.mxu0
        %2677 = vmatprep.mubr.bf16.mxu0 0
        %2678 = vmatmul.mubr.bf16.gmra.mxu0 %v2629
        %v2679 = vpop.f32.mrf.mxu0
        %v2680 = vadd.f32 0.0, %v2679
        %v2681 = vpop.f32.mrf.mxu0
        %v2682 = vpop.f32.mrf.mxu0
        %v2683 = vadd.f32 0.0, %v2682
        %v2684 = vpop.f32.mrf.mxu0
        %2685 = vmatprep.mubr.bf16.mxu0 0
        %2686 = vmatmul.mubr.bf16.gmra.mxu0 %v2632
        %v2687 = vpop.f32.mrf.mxu0
        %v2688 = vadd.f32 0.0, %v2687
        %v2689 = vpop.f32.mrf.mxu0
        %v2690 = vpop.f32.mrf.mxu0
        %v2691 = vadd.f32 0.0, %v2690
        %v2692 = vpop.f32.mrf.mxu0
        %2693 = vmatprep.mubr.bf16.mxu0 0
        %2694 = vmatmul.mubr.bf16.gmra.mxu0 %v2635
        %v2695 = vpop.f32.mrf.mxu0
        %v2696 = vadd.f32 0.0, %v2695
        %v2697 = vpop.f32.mrf.mxu0
        %v2698 = vpop.f32.mrf.mxu0
        %v2699 = vadd.f32 0.0, %v2698
        %v2700 = vpop.f32.mrf.mxu0
        %2701 = vdwg.mxu0
        %v2702 = vadd.f32 %v2605, %v2672
        %v2703 = vadd.f32 %v2606, %v2675
        %v2704 = vadd.f32 %v2607, %v2680
        %v2705 = vadd.f32 %v2608, %v2683
        %v2706 = vadd.f32 %v2609, %v2688
        %v2707 = vadd.f32 %v2610, %v2691
        %v2708 = vadd.f32 %v2611, %v2696
        %v2709 = vadd.f32 %v2612, %v2699
        %2710 = vmatprep.subr.bf16.mxu0 0
        %2711 = vmatpush1.bf16.msra.mxu0 0
        %2712 = vmatprep.subr.bf16.mxu0 0
        %2713 = vmatpush1.bf16.msra.mxu0 0
        %2714 = vmatprep.subr.bf16.mxu0 0
        %2715 = vmatpush1.bf16.msra.mxu0 0
        %2716 = vmatprep.subr.bf16.mxu0 0
        %2717 = vmatpush1.bf16.msra.mxu0 0
        %2718 = vmatprep.subr.bf16.mxu0 0
        %2719 = vmatpush1.bf16.msra.mxu0 0
        %2720 = vmatprep.subr.bf16.mxu0 0
        %2721 = vmatpush1.bf16.msra.mxu0 0
        %2722 = vmatprep.subr.bf16.mxu0 0
        %2723 = vmatpush1.bf16.msra.mxu0 0
        %2724 = vmatprep.subr.bf16.mxu0 0
        %2725 = vmatpush1.bf16.msra.mxu0 %v1928
        %2726 = vmatprep.subr.bf16.mxu0 0
        %2727 = vmatpush2.bf16.msra.mxu0 0
        %2728 = vmatprep.subr.bf16.mxu0 0
        %2729 = vmatpush2.bf16.msra.mxu0 0
        %2730 = vmatprep.subr.bf16.mxu0 0
        %2731 = vmatpush2.bf16.msra.mxu0 0
        %2732 = vmatprep.subr.bf16.mxu0 0
        %2733 = vmatpush2.bf16.msra.mxu0 0
        %2734 = vmatprep.subr.bf16.mxu0 0
        %2735 = vmatpush2.bf16.msra.mxu0 0
        %2736 = vmatprep.subr.bf16.mxu0 0
        %2737 = vmatpush2.bf16.msra.mxu0 0
        %2738 = vmatprep.subr.bf16.mxu0 0
        %2739 = vmatpush2.bf16.msra.mxu0 0
        %2740 = vmatprep.subr.bf16.mxu0 0
        %2741 = vmatpush2.bf16.msra.mxu0 0
        %2742 = vmatprep.mubr.bf16.mxu0 0
        %2743 = vmatmul.mubr.bf16.gmra.mxu0 %v2029
        %v2744 = vpop.f32.mrf.mxu0
        %v2745 = vadd.f32 0.0, %v2744
        %v2746 = vpop.f32.mrf.mxu0
        %v2747 = vpop.f32.mrf.mxu0
        %v2748 = vadd.f32 0.0, %v2747
        %v2749 = vpop.f32.mrf.mxu0
        %2750 = vmatprep.mubr.bf16.mxu0 0
        %2751 = vmatmul.mubr.bf16.gmra.mxu0 %v2032
        %v2752 = vpop.f32.mrf.mxu0
        %v2753 = vadd.f32 0.0, %v2752
        %v2754 = vpop.f32.mrf.mxu0
        %v2755 = vpop.f32.mrf.mxu0
        %v2756 = vadd.f32 0.0, %v2755
        %v2757 = vpop.f32.mrf.mxu0
        %2758 = vmatprep.mubr.bf16.mxu0 0
        %2759 = vmatmul.mubr.bf16.gmra.mxu0 %v2035
        %v2760 = vpop.f32.mrf.mxu0
        %v2761 = vadd.f32 0.0, %v2760
        %v2762 = vpop.f32.mrf.mxu0
        %v2763 = vpop.f32.mrf.mxu0
        %v2764 = vadd.f32 0.0, %v2763
        %v2765 = vpop.f32.mrf.mxu0
        %2766 = vmatprep.mubr.bf16.mxu0 0
        %2767 = vmatmul.mubr.bf16.gmra.mxu0 %v2038
        %v2768 = vpop.f32.mrf.mxu0
        %v2769 = vadd.f32 0.0, %v2768
        %v2770 = vpop.f32.mrf.mxu0
        %v2771 = vpop.f32.mrf.mxu0
        %v2772 = vadd.f32 0.0, %v2771
        %v2773 = vpop.f32.mrf.mxu0
        %2774 = vdwg.mxu0
        %v2775 = vadd.f32 %v2702, %v2745
        %v2776 = vadd.f32 %v2703, %v2748
        %v2777 = vadd.f32 %v2704, %v2753
        %v2778 = vadd.f32 %v2705, %v2756
        %v2779 = vadd.f32 %v2706, %v2761
        %v2780 = vadd.f32 %v2707, %v2764
        %v2781 = vadd.f32 %v2708, %v2769
        %v2782 = vadd.f32 %v2709, %v2772
        %2783 = vmatprep.subr.bf16.mxu0 0
        %2784 = vmatpush1.bf16.msra.mxu0 0
        %2785 = vmatprep.subr.bf16.mxu0 0
        %2786 = vmatpush1.bf16.msra.mxu0 0
        %2787 = vmatprep.subr.bf16.mxu0 0
        %2788 = vmatpush1.bf16.msra.mxu0 0
        %2789 = vmatprep.subr.bf16.mxu0 0
        %2790 = vmatpush1.bf16.msra.mxu0 0
        %2791 = vmatprep.subr.bf16.mxu0 0
        %2792 = vmatpush1.bf16.msra.mxu0 0
        %2793 = vmatprep.subr.bf16.mxu0 0
        %2794 = vmatpush1.bf16.msra.mxu0 0
        %2795 = vmatprep.subr.bf16.mxu0 0
        %2796 = vmatpush1.bf16.msra.mxu0 0
        %2797 = vmatprep.subr.bf16.mxu0 0
        %2798 = vmatpush1.bf16.msra.mxu0 %v2041
        %2799 = vmatprep.subr.bf16.mxu0 0
        %2800 = vmatpush2.bf16.msra.mxu0 0
        %2801 = vmatprep.subr.bf16.mxu0 0
        %2802 = vmatpush2.bf16.msra.mxu0 0
        %2803 = vmatprep.subr.bf16.mxu0 0
        %2804 = vmatpush2.bf16.msra.mxu0 0
        %2805 = vmatprep.subr.bf16.mxu0 0
        %2806 = vmatpush2.bf16.msra.mxu0 0
        %2807 = vmatprep.subr.bf16.mxu0 0
        %2808 = vmatpush2.bf16.msra.mxu0 0
        %2809 = vmatprep.subr.bf16.mxu0 0
        %2810 = vmatpush2.bf16.msra.mxu0 0
        %2811 = vmatprep.subr.bf16.mxu0 0
        %2812 = vmatpush2.bf16.msra.mxu0 0
        %2813 = vmatprep.subr.bf16.mxu0 0
        %2814 = vmatpush2.bf16.msra.mxu0 0
        %2815 = vmatprep.mubr.bf16.mxu0 0
        %2816 = vmatmul.mubr.bf16.gmra.mxu0 %v2130
        %v2817 = vpop.f32.mrf.mxu0
        %v2818 = vadd.f32 0.0, %v2817
        %v2819 = vpop.f32.mrf.mxu0
        %v2820 = vpop.f32.mrf.mxu0
        %v2821 = vadd.f32 0.0, %v2820
        %v2822 = vpop.f32.mrf.mxu0
        %2823 = vmatprep.mubr.bf16.mxu0 0
        %2824 = vmatmul.mubr.bf16.gmra.mxu0 %v2133
        %v2825 = vpop.f32.mrf.mxu0
        %v2826 = vadd.f32 0.0, %v2825
        %v2827 = vpop.f32.mrf.mxu0
        %v2828 = vpop.f32.mrf.mxu0
        %v2829 = vadd.f32 0.0, %v2828
        %v2830 = vpop.f32.mrf.mxu0
        %2831 = vmatprep.mubr.bf16.mxu0 0
        %2832 = vmatmul.mubr.bf16.gmra.mxu0 %v2136
        %v2833 = vpop.f32.mrf.mxu0
        %v2834 = vadd.f32 0.0, %v2833
        %v2835 = vpop.f32.mrf.mxu0
        %v2836 = vpop.f32.mrf.mxu0
        %v2837 = vadd.f32 0.0, %v2836
        %v2838 = vpop.f32.mrf.mxu0
        %2839 = vmatprep.mubr.bf16.mxu0 0
        %2840 = vmatmul.mubr.bf16.gmra.mxu0 %v2139
        %v2841 = vpop.f32.mrf.mxu0
        %v2842 = vadd.f32 0.0, %v2841
        %v2843 = vpop.f32.mrf.mxu0
        %v2844 = vpop.f32.mrf.mxu0
        %v2845 = vadd.f32 0.0, %v2844
        %v2846 = vpop.f32.mrf.mxu0
        %2847 = vdwg.mxu0
        %v2848 = vadd.f32 %v2775, %v2818
        %v2849 = vadd.f32 %v2776, %v2821
        %v2850 = vadd.f32 %v2777, %v2826
        %v2851 = vadd.f32 %v2778, %v2829
        %v2852 = vadd.f32 %v2779, %v2834
        %v2853 = vadd.f32 %v2780, %v2837
        %v2854 = vadd.f32 %v2781, %v2842
        %v2855 = vadd.f32 %v2782, %v2845
        %v2856 = vunpack.c.l.b16 %v901
        %v2857 = vunpack.c.l.b16 %v915
        %v2858 = vunpack.c.l.b16 %v929
        %v2859 = vunpack.c.l.b16 %v943
        %v2860 = vunpack.c.l.b16 %v957
        %v2861 = vunpack.c.l.b16 %v971
        %v2862 = vunpack.c.l.b16 %v985
        %v2863 = vunpack.c.l.b16 %v999
        %v2864 = vpack.c.b16 %v2857, %v2856
        %v2865 = vpack.c.b16 %v2859, %v2858
        %v2866 = vpack.c.b16 %v2861, %v2860
        %v2867 = vpack.c.b16 %v2863, %v2862
        %v2869 = vsel %vm1284, %v2864, 0
        %v2872 = vsel %vm1284, %v2865, 0
        %v2875 = vsel %vm1284, %v2866, 0
        %v2878 = vsel %vm1284, %v2867, 0
        %2880 = vmatprep.subr.bf16.mxu0 0
        %2881 = vmatpush1.bf16.msra.mxu0 0
        %2882 = vmatprep.subr.bf16.mxu0 0
        %2883 = vmatpush1.bf16.msra.mxu0 0
        %2884 = vmatprep.subr.bf16.mxu0 0
        %2885 = vmatpush1.bf16.msra.mxu0 0
        %2886 = vmatprep.subr.bf16.mxu0 0
        %2887 = vmatpush1.bf16.msra.mxu0 0
        %2888 = vmatprep.subr.bf16.mxu0 0
        %2889 = vmatpush1.bf16.msra.mxu0 0
        %2890 = vmatprep.subr.bf16.mxu0 0
        %2891 = vmatpush1.bf16.msra.mxu0 0
        %2892 = vmatprep.subr.bf16.mxu0 0
        %2893 = vmatpush1.bf16.msra.mxu0 0
        %2894 = vmatprep.subr.bf16.mxu0 0
        %2895 = vmatpush1.bf16.msra.mxu0 %v2142
        %2896 = vmatprep.subr.bf16.mxu0 0
        %2897 = vmatpush2.bf16.msra.mxu0 0
        %2898 = vmatprep.subr.bf16.mxu0 0
        %2899 = vmatpush2.bf16.msra.mxu0 0
        %2900 = vmatprep.subr.bf16.mxu0 0
        %2901 = vmatpush2.bf16.msra.mxu0 0
        %2902 = vmatprep.subr.bf16.mxu0 0
        %2903 = vmatpush2.bf16.msra.mxu0 0
        %2904 = vmatprep.subr.bf16.mxu0 0
        %2905 = vmatpush2.bf16.msra.mxu0 0
        %2906 = vmatprep.subr.bf16.mxu0 0
        %2907 = vmatpush2.bf16.msra.mxu0 0
        %2908 = vmatprep.subr.bf16.mxu0 0
        %2909 = vmatpush2.bf16.msra.mxu0 0
        %2910 = vmatprep.subr.bf16.mxu0 0
        %2911 = vmatpush2.bf16.msra.mxu0 0
        %2912 = vmatprep.mubr.bf16.mxu0 0
        %2913 = vmatmul.mubr.bf16.gmra.mxu0 %v2869
        %v2914 = vpop.f32.mrf.mxu0
        %v2915 = vadd.f32 0.0, %v2914
        %v2916 = vpop.f32.mrf.mxu0
        %v2917 = vpop.f32.mrf.mxu0
        %v2918 = vadd.f32 0.0, %v2917
        %v2919 = vpop.f32.mrf.mxu0
        %2920 = vmatprep.mubr.bf16.mxu0 0
        %2921 = vmatmul.mubr.bf16.gmra.mxu0 %v2872
        %v2922 = vpop.f32.mrf.mxu0
        %v2923 = vadd.f32 0.0, %v2922
        %v2924 = vpop.f32.mrf.mxu0
        %v2925 = vpop.f32.mrf.mxu0
        %v2926 = vadd.f32 0.0, %v2925
        %v2927 = vpop.f32.mrf.mxu0
        %2928 = vmatprep.mubr.bf16.mxu0 0
        %2929 = vmatmul.mubr.bf16.gmra.mxu0 %v2875
        %v2930 = vpop.f32.mrf.mxu0
        %v2931 = vadd.f32 0.0, %v2930
        %v2932 = vpop.f32.mrf.mxu0
        %v2933 = vpop.f32.mrf.mxu0
        %v2934 = vadd.f32 0.0, %v2933
        %v2935 = vpop.f32.mrf.mxu0
        %2936 = vmatprep.mubr.bf16.mxu0 0
        %2937 = vmatmul.mubr.bf16.gmra.mxu0 %v2878
        %v2938 = vpop.f32.mrf.mxu0
        %v2939 = vadd.f32 0.0, %v2938
        %v2940 = vpop.f32.mrf.mxu0
        %v2941 = vpop.f32.mrf.mxu0
        %v2942 = vadd.f32 0.0, %v2941
        %v2943 = vpop.f32.mrf.mxu0
        %2944 = vdwg.mxu0
        %v2945 = vadd.f32 %v2848, %v2915
        %v2946 = vadd.f32 %v2849, %v2918
        %v2947 = vadd.f32 %v2850, %v2923
        %v2948 = vadd.f32 %v2851, %v2926
        %v2949 = vadd.f32 %v2852, %v2931
        %v2950 = vadd.f32 %v2853, %v2934
        %v2951 = vadd.f32 %v2854, %v2939
        %v2952 = vadd.f32 %v2855, %v2942
        %v2953 = vadd.f32 %v2945, %v2222
        %v2954 = vadd.f32 %v2946, %v2222
        %v2955 = vadd.f32 %v2947, %v2222
        %v2956 = vadd.f32 %v2948, %v2222
        %v2957 = vadd.f32 %v2949, %v2222
        %v2958 = vadd.f32 %v2950, %v2222
        %v2959 = vadd.f32 %v2951, %v2222
        %v2960 = vadd.f32 %v2952, %v2222
        %v2961 = vmax.f32 %v2953, 0.0
        %v2962 = vmax.f32 %v2954, 0.0
        %v2963 = vmax.f32 %v2955, 0.0
        %v2964 = vmax.f32 %v2956, 0.0
        %v2965 = vmax.f32 %v2957, 0.0
        %v2966 = vmax.f32 %v2958, 0.0
        %v2967 = vmax.f32 %v2959, 0.0
        %v2968 = vmax.f32 %v2960, 0.0
        %v2969 = vmax.f32 %v2232, %v2961
        %v2970 = vmax.f32 %v2233, %v2962
        %v2971 = vmax.f32 %v2234, %v2963
        %v2972 = vmax.f32 %v2235, %v2964
        %v2973 = vmax.f32 %v2236, %v2965
        %v2974 = vmax.f32 %v2237, %v2966
        %v2975 = vmax.f32 %v2238, %v2967
        %v2976 = vmax.f32 %v2239, %v2968
        %2977 = vmatprep.subr.bf16.mxu0 0
        %2978 = vmatpush1.bf16.msra.mxu0 0
        %2979 = vmatprep.subr.bf16.mxu0 0
        %2980 = vmatpush1.bf16.msra.mxu0 0
        %2981 = vmatprep.subr.bf16.mxu0 0
        %2982 = vmatpush1.bf16.msra.mxu0 0
        %2983 = vmatprep.subr.bf16.mxu0 0
        %2984 = vmatpush1.bf16.msra.mxu0 0
        %2985 = vmatprep.subr.bf16.mxu0 0
        %2986 = vmatpush1.bf16.msra.mxu0 0
        %2987 = vmatprep.subr.bf16.mxu0 0
        %2988 = vmatpush1.bf16.msra.mxu0 0
        %2989 = vmatprep.subr.bf16.mxu0 0
        %2990 = vmatpush1.bf16.msra.mxu0 0
        %2991 = vmatprep.subr.bf16.mxu0 0
        %2992 = vmatpush1.bf16.msra.mxu0 %v1299
        %2993 = vmatprep.subr.bf16.mxu0 0
        %2994 = vmatpush2.bf16.msra.mxu0 0
        %2995 = vmatprep.subr.bf16.mxu0 0
        %2996 = vmatpush2.bf16.msra.mxu0 0
        %2997 = vmatprep.subr.bf16.mxu0 0
        %2998 = vmatpush2.bf16.msra.mxu0 0
        %2999 = vmatprep.subr.bf16.mxu0 0
        %3000 = vmatpush2.bf16.msra.mxu0 0
        %3001 = vmatprep.subr.bf16.mxu0 0
        %3002 = vmatpush2.bf16.msra.mxu0 0
        %3003 = vmatprep.subr.bf16.mxu0 0
        %3004 = vmatpush2.bf16.msra.mxu0 0
        %3005 = vmatprep.subr.bf16.mxu0 0
        %3006 = vmatpush2.bf16.msra.mxu0 0
        %3007 = vmatprep.subr.bf16.mxu0 0
        %3008 = vmatpush2.bf16.msra.mxu0 0
        %3009 = vmatprep.mubr.bf16.mxu0 0
        %3010 = vmatmul.mubr.bf16.gmra.mxu0 %v1702
        %v3011 = vpop.f32.mrf.mxu0
        %v3012 = vadd.f32 0.0, %v3011
        %v3013 = vpop.f32.mrf.mxu0
        %v3014 = vpop.f32.mrf.mxu0
        %v3015 = vadd.f32 0.0, %v3014
        %v3016 = vpop.f32.mrf.mxu0
        %3017 = vmatprep.mubr.bf16.mxu0 0
        %3018 = vmatmul.mubr.bf16.gmra.mxu0 %v1705
        %v3019 = vpop.f32.mrf.mxu0
        %v3020 = vadd.f32 0.0, %v3019
        %v3021 = vpop.f32.mrf.mxu0
        %v3022 = vpop.f32.mrf.mxu0
        %v3023 = vadd.f32 0.0, %v3022
        %v3024 = vpop.f32.mrf.mxu0
        %3025 = vmatprep.mubr.bf16.mxu0 0
        %3026 = vmatmul.mubr.bf16.gmra.mxu0 %v1708
        %v3027 = vpop.f32.mrf.mxu0
        %v3028 = vadd.f32 0.0, %v3027
        %v3029 = vpop.f32.mrf.mxu0
        %v3030 = vpop.f32.mrf.mxu0
        %v3031 = vadd.f32 0.0, %v3030
        %v3032 = vpop.f32.mrf.mxu0
        %3033 = vmatprep.mubr.bf16.mxu0 0
        %3034 = vmatmul.mubr.bf16.gmra.mxu0 %v1711
        %v3035 = vpop.f32.mrf.mxu0
        %v3036 = vadd.f32 0.0, %v3035
        %v3037 = vpop.f32.mrf.mxu0
        %v3038 = vpop.f32.mrf.mxu0
        %v3039 = vadd.f32 0.0, %v3038
        %v3040 = vpop.f32.mrf.mxu0
        %3041 = vdwg.mxu0
        %3042 = vmatprep.subr.bf16.mxu0 0
        %3043 = vmatpush1.bf16.msra.mxu0 0
        %3044 = vmatprep.subr.bf16.mxu0 0
        %3045 = vmatpush1.bf16.msra.mxu0 0
        %3046 = vmatprep.subr.bf16.mxu0 0
        %3047 = vmatpush1.bf16.msra.mxu0 0
        %3048 = vmatprep.subr.bf16.mxu0 0
        %3049 = vmatpush1.bf16.msra.mxu0 0
        %3050 = vmatprep.subr.bf16.mxu0 0
        %3051 = vmatpush1.bf16.msra.mxu0 0
        %3052 = vmatprep.subr.bf16.mxu0 0
        %3053 = vmatpush1.bf16.msra.mxu0 0
        %3054 = vmatprep.subr.bf16.mxu0 0
        %3055 = vmatpush1.bf16.msra.mxu0 0
        %3056 = vmatprep.subr.bf16.mxu0 0
        %3057 = vmatpush1.bf16.msra.mxu0 %v1399
        %3058 = vmatprep.subr.bf16.mxu0 0
        %3059 = vmatpush2.bf16.msra.mxu0 0
        %3060 = vmatprep.subr.bf16.mxu0 0
        %3061 = vmatpush2.bf16.msra.mxu0 0
        %3062 = vmatprep.subr.bf16.mxu0 0
        %3063 = vmatpush2.bf16.msra.mxu0 0
        %3064 = vmatprep.subr.bf16.mxu0 0
        %3065 = vmatpush2.bf16.msra.mxu0 0
        %3066 = vmatprep.subr.bf16.mxu0 0
        %3067 = vmatpush2.bf16.msra.mxu0 0
        %3068 = vmatprep.subr.bf16.mxu0 0
        %3069 = vmatpush2.bf16.msra.mxu0 0
        %3070 = vmatprep.subr.bf16.mxu0 0
        %3071 = vmatpush2.bf16.msra.mxu0 0
        %3072 = vmatprep.subr.bf16.mxu0 0
        %3073 = vmatpush2.bf16.msra.mxu0 0
        %3074 = vmatprep.mubr.bf16.mxu0 0
        %3075 = vmatmul.mubr.bf16.gmra.mxu0 %v1593
        %v3076 = vpop.f32.mrf.mxu0
        %v3077 = vadd.f32 %v3012, %v3076
        %v3078 = vpop.f32.mrf.mxu0
        %v3079 = vpop.f32.mrf.mxu0
        %v3080 = vadd.f32 %v3015, %v3079
        %v3081 = vpop.f32.mrf.mxu0
        %3082 = vmatprep.mubr.bf16.mxu0 0
        %3083 = vmatmul.mubr.bf16.gmra.mxu0 %v1596
        %v3084 = vpop.f32.mrf.mxu0
        %v3085 = vadd.f32 %v3020, %v3084
        %v3086 = vpop.f32.mrf.mxu0
        %v3087 = vpop.f32.mrf.mxu0
        %v3088 = vadd.f32 %v3023, %v3087
        %v3089 = vpop.f32.mrf.mxu0
        %3090 = vmatprep.mubr.bf16.mxu0 0
        %3091 = vmatmul.mubr.bf16.gmra.mxu0 %v1599
        %v3092 = vpop.f32.mrf.mxu0
        %v3093 = vadd.f32 %v3028, %v3092
        %v3094 = vpop.f32.mrf.mxu0
        %v3095 = vpop.f32.mrf.mxu0
        %v3096 = vadd.f32 %v3031, %v3095
        %v3097 = vpop.f32.mrf.mxu0
        %3098 = vmatprep.mubr.bf16.mxu0 0
        %3099 = vmatmul.mubr.bf16.gmra.mxu0 %v1602
        %v3100 = vpop.f32.mrf.mxu0
        %v3101 = vadd.f32 %v3036, %v3100
        %v3102 = vpop.f32.mrf.mxu0
        %v3103 = vpop.f32.mrf.mxu0
        %v3104 = vadd.f32 %v3039, %v3103
        %v3105 = vpop.f32.mrf.mxu0
        %3106 = vdwg.mxu0
        %3107 = vmatprep.subr.bf16.mxu0 0
        %3108 = vmatpush1.bf16.msra.mxu0 0
        %3109 = vmatprep.subr.bf16.mxu0 0
        %3110 = vmatpush1.bf16.msra.mxu0 0
        %3111 = vmatprep.subr.bf16.mxu0 0
        %3112 = vmatpush1.bf16.msra.mxu0 0
        %3113 = vmatprep.subr.bf16.mxu0 0
        %3114 = vmatpush1.bf16.msra.mxu0 0
        %3115 = vmatprep.subr.bf16.mxu0 0
        %3116 = vmatpush1.bf16.msra.mxu0 0
        %3117 = vmatprep.subr.bf16.mxu0 0
        %3118 = vmatpush1.bf16.msra.mxu0 0
        %3119 = vmatprep.subr.bf16.mxu0 0
        %3120 = vmatpush1.bf16.msra.mxu0 0
        %3121 = vmatprep.subr.bf16.mxu0 0
        %3122 = vmatpush1.bf16.msra.mxu0 %v1492
        %3123 = vmatprep.subr.bf16.mxu0 0
        %3124 = vmatpush2.bf16.msra.mxu0 0
        %3125 = vmatprep.subr.bf16.mxu0 0
        %3126 = vmatpush2.bf16.msra.mxu0 0
        %3127 = vmatprep.subr.bf16.mxu0 0
        %3128 = vmatpush2.bf16.msra.mxu0 0
        %3129 = vmatprep.subr.bf16.mxu0 0
        %3130 = vmatpush2.bf16.msra.mxu0 0
        %3131 = vmatprep.subr.bf16.mxu0 0
        %3132 = vmatpush2.bf16.msra.mxu0 0
        %3133 = vmatprep.subr.bf16.mxu0 0
        %3134 = vmatpush2.bf16.msra.mxu0 0
        %3135 = vmatprep.subr.bf16.mxu0 0
        %3136 = vmatpush2.bf16.msra.mxu0 0
        %3137 = vmatprep.subr.bf16.mxu0 0
        %3138 = vmatpush2.bf16.msra.mxu0 0
        %3139 = vmatprep.mubr.bf16.mxu0 0
        %3140 = vmatmul.mubr.bf16.gmra.mxu0 %v1807
        %v3141 = vpop.f32.mrf.mxu0
        %v3142 = vadd.f32 0.0, %v3141
        %v3143 = vpop.f32.mrf.mxu0
        %v3144 = vpop.f32.mrf.mxu0
        %v3145 = vadd.f32 0.0, %v3144
        %v3146 = vpop.f32.mrf.mxu0
        %3147 = vmatprep.mubr.bf16.mxu0 0
        %3148 = vmatmul.mubr.bf16.gmra.mxu0 %v1810
        %v3149 = vpop.f32.mrf.mxu0
        %v3150 = vadd.f32 0.0, %v3149
        %v3151 = vpop.f32.mrf.mxu0
        %v3152 = vpop.f32.mrf.mxu0
        %v3153 = vadd.f32 0.0, %v3152
        %v3154 = vpop.f32.mrf.mxu0
        %3155 = vmatprep.mubr.bf16.mxu0 0
        %3156 = vmatmul.mubr.bf16.gmra.mxu0 %v1813
        %v3157 = vpop.f32.mrf.mxu0
        %v3158 = vadd.f32 0.0, %v3157
        %v3159 = vpop.f32.mrf.mxu0
        %v3160 = vpop.f32.mrf.mxu0
        %v3161 = vadd.f32 0.0, %v3160
        %v3162 = vpop.f32.mrf.mxu0
        %3163 = vmatprep.mubr.bf16.mxu0 0
        %3164 = vmatmul.mubr.bf16.gmra.mxu0 %v1816
        %v3165 = vpop.f32.mrf.mxu0
        %v3166 = vadd.f32 0.0, %v3165
        %v3167 = vpop.f32.mrf.mxu0
        %v3168 = vpop.f32.mrf.mxu0
        %v3169 = vadd.f32 0.0, %v3168
        %v3170 = vpop.f32.mrf.mxu0
        %3171 = vdwg.mxu0
        %v3172 = vadd.f32 %v3077, %v3142
        %v3173 = vadd.f32 %v3080, %v3145
        %v3174 = vadd.f32 %v3085, %v3150
        %v3175 = vadd.f32 %v3088, %v3153
        %v3176 = vadd.f32 %v3093, %v3158
        %v3177 = vadd.f32 %v3096, %v3161
        %v3178 = vadd.f32 %v3101, %v3166
        %v3179 = vadd.f32 %v3104, %v3169
        %3180 = vmatprep.subr.bf16.mxu0 0
        %3181 = vmatpush1.bf16.msra.mxu0 0
        %3182 = vmatprep.subr.bf16.mxu0 0
        %3183 = vmatpush1.bf16.msra.mxu0 0
        %3184 = vmatprep.subr.bf16.mxu0 0
        %3185 = vmatpush1.bf16.msra.mxu0 0
        %3186 = vmatprep.subr.bf16.mxu0 0
        %3187 = vmatpush1.bf16.msra.mxu0 0
        %3188 = vmatprep.subr.bf16.mxu0 0
        %3189 = vmatpush1.bf16.msra.mxu0 0
        %3190 = vmatprep.subr.bf16.mxu0 0
        %3191 = vmatpush1.bf16.msra.mxu0 0
        %3192 = vmatprep.subr.bf16.mxu0 0
        %3193 = vmatpush1.bf16.msra.mxu0 0
        %3194 = vmatprep.subr.bf16.mxu0 0
        %3195 = vmatpush1.bf16.msra.mxu0 %v1605
        %3196 = vmatprep.subr.bf16.mxu0 0
        %3197 = vmatpush2.bf16.msra.mxu0 0
        %3198 = vmatprep.subr.bf16.mxu0 0
        %3199 = vmatpush2.bf16.msra.mxu0 0
        %3200 = vmatprep.subr.bf16.mxu0 0
        %3201 = vmatpush2.bf16.msra.mxu0 0
        %3202 = vmatprep.subr.bf16.mxu0 0
        %3203 = vmatpush2.bf16.msra.mxu0 0
        %3204 = vmatprep.subr.bf16.mxu0 0
        %3205 = vmatpush2.bf16.msra.mxu0 0
        %3206 = vmatprep.subr.bf16.mxu0 0
        %3207 = vmatpush2.bf16.msra.mxu0 0
        %3208 = vmatprep.subr.bf16.mxu0 0
        %3209 = vmatpush2.bf16.msra.mxu0 0
        %3210 = vmatprep.subr.bf16.mxu0 0
        %3211 = vmatpush2.bf16.msra.mxu0 0
        %3212 = vmatprep.mubr.bf16.mxu0 0
        %3213 = vmatmul.mubr.bf16.gmra.mxu0 %v1916
        %v3214 = vpop.f32.mrf.mxu0
        %v3215 = vadd.f32 0.0, %v3214
        %v3216 = vpop.f32.mrf.mxu0
        %v3217 = vpop.f32.mrf.mxu0
        %v3218 = vadd.f32 0.0, %v3217
        %v3219 = vpop.f32.mrf.mxu0
        %3220 = vmatprep.mubr.bf16.mxu0 0
        %3221 = vmatmul.mubr.bf16.gmra.mxu0 %v1919
        %v3222 = vpop.f32.mrf.mxu0
        %v3223 = vadd.f32 0.0, %v3222
        %v3224 = vpop.f32.mrf.mxu0
        %v3225 = vpop.f32.mrf.mxu0
        %v3226 = vadd.f32 0.0, %v3225
        %v3227 = vpop.f32.mrf.mxu0
        %3228 = vmatprep.mubr.bf16.mxu0 0
        %3229 = vmatmul.mubr.bf16.gmra.mxu0 %v1922
        %v3230 = vpop.f32.mrf.mxu0
        %v3231 = vadd.f32 0.0, %v3230
        %v3232 = vpop.f32.mrf.mxu0
        %v3233 = vpop.f32.mrf.mxu0
        %v3234 = vadd.f32 0.0, %v3233
        %v3235 = vpop.f32.mrf.mxu0
        %3236 = vmatprep.mubr.bf16.mxu0 0
        %3237 = vmatmul.mubr.bf16.gmra.mxu0 %v1925
        %v3238 = vpop.f32.mrf.mxu0
        %v3239 = vadd.f32 0.0, %v3238
        %v3240 = vpop.f32.mrf.mxu0
        %v3241 = vpop.f32.mrf.mxu0
        %v3242 = vadd.f32 0.0, %v3241
        %v3243 = vpop.f32.mrf.mxu0
        %3244 = vdwg.mxu0
        %v3245 = vadd.f32 %v3172, %v3215
        %v3246 = vadd.f32 %v3173, %v3218
        %v3247 = vadd.f32 %v3174, %v3223
        %v3248 = vadd.f32 %v3175, %v3226
        %v3249 = vadd.f32 %v3176, %v3231
        %v3250 = vadd.f32 %v3177, %v3234
        %v3251 = vadd.f32 %v3178, %v3239
        %v3252 = vadd.f32 %v3179, %v3242
        %3253 = vmatprep.subr.bf16.mxu0 0
        %3254 = vmatpush1.bf16.msra.mxu0 0
        %3255 = vmatprep.subr.bf16.mxu0 0
        %3256 = vmatpush1.bf16.msra.mxu0 0
        %3257 = vmatprep.subr.bf16.mxu0 0
        %3258 = vmatpush1.bf16.msra.mxu0 0
        %3259 = vmatprep.subr.bf16.mxu0 0
        %3260 = vmatpush1.bf16.msra.mxu0 0
        %3261 = vmatprep.subr.bf16.mxu0 0
        %3262 = vmatpush1.bf16.msra.mxu0 0
        %3263 = vmatprep.subr.bf16.mxu0 0
        %3264 = vmatpush1.bf16.msra.mxu0 0
        %3265 = vmatprep.subr.bf16.mxu0 0
        %3266 = vmatpush1.bf16.msra.mxu0 0
        %3267 = vmatprep.subr.bf16.mxu0 0
        %3268 = vmatpush1.bf16.msra.mxu0 %v1714
        %3269 = vmatprep.subr.bf16.mxu0 0
        %3270 = vmatpush2.bf16.msra.mxu0 0
        %3271 = vmatprep.subr.bf16.mxu0 0
        %3272 = vmatpush2.bf16.msra.mxu0 0
        %3273 = vmatprep.subr.bf16.mxu0 0
        %3274 = vmatpush2.bf16.msra.mxu0 0
        %3275 = vmatprep.subr.bf16.mxu0 0
        %3276 = vmatpush2.bf16.msra.mxu0 0
        %3277 = vmatprep.subr.bf16.mxu0 0
        %3278 = vmatpush2.bf16.msra.mxu0 0
        %3279 = vmatprep.subr.bf16.mxu0 0
        %3280 = vmatpush2.bf16.msra.mxu0 0
        %3281 = vmatprep.subr.bf16.mxu0 0
        %3282 = vmatpush2.bf16.msra.mxu0 0
        %3283 = vmatprep.subr.bf16.mxu0 0
        %3284 = vmatpush2.bf16.msra.mxu0 0
        %3285 = vmatprep.mubr.bf16.mxu0 0
        %3286 = vmatmul.mubr.bf16.gmra.mxu0 %v2029
        %v3287 = vpop.f32.mrf.mxu0
        %v3288 = vadd.f32 0.0, %v3287
        %v3289 = vpop.f32.mrf.mxu0
        %v3290 = vpop.f32.mrf.mxu0
        %v3291 = vadd.f32 0.0, %v3290
        %v3292 = vpop.f32.mrf.mxu0
        %3293 = vmatprep.mubr.bf16.mxu0 0
        %3294 = vmatmul.mubr.bf16.gmra.mxu0 %v2032
        %v3295 = vpop.f32.mrf.mxu0
        %v3296 = vadd.f32 0.0, %v3295
        %v3297 = vpop.f32.mrf.mxu0
        %v3298 = vpop.f32.mrf.mxu0
        %v3299 = vadd.f32 0.0, %v3298
        %v3300 = vpop.f32.mrf.mxu0
        %3301 = vmatprep.mubr.bf16.mxu0 0
        %3302 = vmatmul.mubr.bf16.gmra.mxu0 %v2035
        %v3303 = vpop.f32.mrf.mxu0
        %v3304 = vadd.f32 0.0, %v3303
        %v3305 = vpop.f32.mrf.mxu0
        %v3306 = vpop.f32.mrf.mxu0
        %v3307 = vadd.f32 0.0, %v3306
        %v3308 = vpop.f32.mrf.mxu0
        %3309 = vmatprep.mubr.bf16.mxu0 0
        %3310 = vmatmul.mubr.bf16.gmra.mxu0 %v2038
        %v3311 = vpop.f32.mrf.mxu0
        %v3312 = vadd.f32 0.0, %v3311
        %v3313 = vpop.f32.mrf.mxu0
        %v3314 = vpop.f32.mrf.mxu0
        %v3315 = vadd.f32 0.0, %v3314
        %v3316 = vpop.f32.mrf.mxu0
        %3317 = vdwg.mxu0
        %v3318 = vadd.f32 %v3245, %v3288
        %v3319 = vadd.f32 %v3246, %v3291
        %v3320 = vadd.f32 %v3247, %v3296
        %v3321 = vadd.f32 %v3248, %v3299
        %v3322 = vadd.f32 %v3249, %v3304
        %v3323 = vadd.f32 %v3250, %v3307
        %v3324 = vadd.f32 %v3251, %v3312
        %v3325 = vadd.f32 %v3252, %v3315
        %3326 = vmatprep.subr.bf16.mxu0 0
        %3327 = vmatpush1.bf16.msra.mxu0 0
        %3328 = vmatprep.subr.bf16.mxu0 0
        %3329 = vmatpush1.bf16.msra.mxu0 0
        %3330 = vmatprep.subr.bf16.mxu0 0
        %3331 = vmatpush1.bf16.msra.mxu0 0
        %3332 = vmatprep.subr.bf16.mxu0 0
        %3333 = vmatpush1.bf16.msra.mxu0 0
        %3334 = vmatprep.subr.bf16.mxu0 0
        %3335 = vmatpush1.bf16.msra.mxu0 0
        %3336 = vmatprep.subr.bf16.mxu0 0
        %3337 = vmatpush1.bf16.msra.mxu0 0
        %3338 = vmatprep.subr.bf16.mxu0 0
        %3339 = vmatpush1.bf16.msra.mxu0 0
        %3340 = vmatprep.subr.bf16.mxu0 0
        %3341 = vmatpush1.bf16.msra.mxu0 %v1819
        %3342 = vmatprep.subr.bf16.mxu0 0
        %3343 = vmatpush2.bf16.msra.mxu0 0
        %3344 = vmatprep.subr.bf16.mxu0 0
        %3345 = vmatpush2.bf16.msra.mxu0 0
        %3346 = vmatprep.subr.bf16.mxu0 0
        %3347 = vmatpush2.bf16.msra.mxu0 0
        %3348 = vmatprep.subr.bf16.mxu0 0
        %3349 = vmatpush2.bf16.msra.mxu0 0
        %3350 = vmatprep.subr.bf16.mxu0 0
        %3351 = vmatpush2.bf16.msra.mxu0 0
        %3352 = vmatprep.subr.bf16.mxu0 0
        %3353 = vmatpush2.bf16.msra.mxu0 0
        %3354 = vmatprep.subr.bf16.mxu0 0
        %3355 = vmatpush2.bf16.msra.mxu0 0
        %3356 = vmatprep.subr.bf16.mxu0 0
        %3357 = vmatpush2.bf16.msra.mxu0 0
        %3358 = vmatprep.mubr.bf16.mxu0 0
        %3359 = vmatmul.mubr.bf16.gmra.mxu0 %v2130
        %v3360 = vpop.f32.mrf.mxu0
        %v3361 = vadd.f32 0.0, %v3360
        %v3362 = vpop.f32.mrf.mxu0
        %v3363 = vpop.f32.mrf.mxu0
        %v3364 = vadd.f32 0.0, %v3363
        %v3365 = vpop.f32.mrf.mxu0
        %3366 = vmatprep.mubr.bf16.mxu0 0
        %3367 = vmatmul.mubr.bf16.gmra.mxu0 %v2133
        %v3368 = vpop.f32.mrf.mxu0
        %v3369 = vadd.f32 0.0, %v3368
        %v3370 = vpop.f32.mrf.mxu0
        %v3371 = vpop.f32.mrf.mxu0
        %v3372 = vadd.f32 0.0, %v3371
        %v3373 = vpop.f32.mrf.mxu0
        %3374 = vmatprep.mubr.bf16.mxu0 0
        %3375 = vmatmul.mubr.bf16.gmra.mxu0 %v2136
        %v3376 = vpop.f32.mrf.mxu0
        %v3377 = vadd.f32 0.0, %v3376
        %v3378 = vpop.f32.mrf.mxu0
        %v3379 = vpop.f32.mrf.mxu0
        %v3380 = vadd.f32 0.0, %v3379
        %v3381 = vpop.f32.mrf.mxu0
        %3382 = vmatprep.mubr.bf16.mxu0 0
        %3383 = vmatmul.mubr.bf16.gmra.mxu0 %v2139
        %v3384 = vpop.f32.mrf.mxu0
        %v3385 = vadd.f32 0.0, %v3384
        %v3386 = vpop.f32.mrf.mxu0
        %v3387 = vpop.f32.mrf.mxu0
        %v3388 = vadd.f32 0.0, %v3387
        %v3389 = vpop.f32.mrf.mxu0
        %3390 = vdwg.mxu0
        %v3391 = vadd.f32 %v3318, %v3361
        %v3392 = vadd.f32 %v3319, %v3364
        %v3393 = vadd.f32 %v3320, %v3369
        %v3394 = vadd.f32 %v3321, %v3372
        %v3395 = vadd.f32 %v3322, %v3377
        %v3396 = vadd.f32 %v3323, %v3380
        %v3397 = vadd.f32 %v3324, %v3385
        %v3398 = vadd.f32 %v3325, %v3388
        %v3407 = vunpack.c.l.b16 %v1001
        %v3408 = vunpack.c.l.b16 %v1002
        %v3409 = vunpack.c.l.b16 %v1003
        %v3410 = vunpack.c.l.b16 %v1004
        %v3411 = vunpack.c.l.b16 %v1005
        %v3412 = vunpack.c.l.b16 %v1006
        %v3413 = vunpack.c.l.b16 %v1007
        %v3414 = vunpack.c.l.b16 %v1008
        %v3415 = vpack.c.b16 %v3408, %v3407
        %v3416 = vpack.c.b16 %v3410, %v3409
        %v3417 = vpack.c.b16 %v3412, %v3411
        %v3418 = vpack.c.b16 %v3414, %v3413
        %v3420 = vsel %vm1284, %v3415, 0
        %v3423 = vsel %vm1284, %v3416, 0
        %v3426 = vsel %vm1284, %v3417, 0
        %v3429 = vsel %vm1284, %v3418, 0
        %3431 = vmatprep.subr.bf16.mxu0 0
        %3432 = vmatpush1.bf16.msra.mxu0 0
        %3433 = vmatprep.subr.bf16.mxu0 0
        %3434 = vmatpush1.bf16.msra.mxu0 0
        %3435 = vmatprep.subr.bf16.mxu0 0
        %3436 = vmatpush1.bf16.msra.mxu0 0
        %3437 = vmatprep.subr.bf16.mxu0 0
        %3438 = vmatpush1.bf16.msra.mxu0 0
        %3439 = vmatprep.subr.bf16.mxu0 0
        %3440 = vmatpush1.bf16.msra.mxu0 0
        %3441 = vmatprep.subr.bf16.mxu0 0
        %3442 = vmatpush1.bf16.msra.mxu0 0
        %3443 = vmatprep.subr.bf16.mxu0 0
        %3444 = vmatpush1.bf16.msra.mxu0 0
        %3445 = vmatprep.subr.bf16.mxu0 0
        %3446 = vmatpush1.bf16.msra.mxu0 %v1928
        %3447 = vmatprep.subr.bf16.mxu0 0
        %3448 = vmatpush2.bf16.msra.mxu0 0
        %3449 = vmatprep.subr.bf16.mxu0 0
        %3450 = vmatpush2.bf16.msra.mxu0 0
        %3451 = vmatprep.subr.bf16.mxu0 0
        %3452 = vmatpush2.bf16.msra.mxu0 0
        %3453 = vmatprep.subr.bf16.mxu0 0
        %3454 = vmatpush2.bf16.msra.mxu0 0
        %3455 = vmatprep.subr.bf16.mxu0 0
        %3456 = vmatpush2.bf16.msra.mxu0 0
        %3457 = vmatprep.subr.bf16.mxu0 0
        %3458 = vmatpush2.bf16.msra.mxu0 0
        %3459 = vmatprep.subr.bf16.mxu0 0
        %3460 = vmatpush2.bf16.msra.mxu0 0
        %3461 = vmatprep.subr.bf16.mxu0 0
        %3462 = vmatpush2.bf16.msra.mxu0 0
        %3463 = vmatprep.mubr.bf16.mxu0 0
        %3464 = vmatmul.mubr.bf16.gmra.mxu0 %v3420
        %v3465 = vpop.f32.mrf.mxu0
        %v3466 = vadd.f32 0.0, %v3465
        %v3467 = vpop.f32.mrf.mxu0
        %v3468 = vpop.f32.mrf.mxu0
        %v3469 = vadd.f32 0.0, %v3468
        %v3470 = vpop.f32.mrf.mxu0
        %3471 = vmatprep.mubr.bf16.mxu0 0
        %3472 = vmatmul.mubr.bf16.gmra.mxu0 %v3423
        %v3473 = vpop.f32.mrf.mxu0
        %v3474 = vadd.f32 0.0, %v3473
        %v3475 = vpop.f32.mrf.mxu0
        %v3476 = vpop.f32.mrf.mxu0
        %v3477 = vadd.f32 0.0, %v3476
        %v3478 = vpop.f32.mrf.mxu0
        %3479 = vmatprep.mubr.bf16.mxu0 0
        %3480 = vmatmul.mubr.bf16.gmra.mxu0 %v3426
        %v3481 = vpop.f32.mrf.mxu0
        %v3482 = vadd.f32 0.0, %v3481
        %v3483 = vpop.f32.mrf.mxu0
        %v3484 = vpop.f32.mrf.mxu0
        %v3485 = vadd.f32 0.0, %v3484
        %v3486 = vpop.f32.mrf.mxu0
        %3487 = vmatprep.mubr.bf16.mxu0 0
        %3488 = vmatmul.mubr.bf16.gmra.mxu0 %v3429
        %v3489 = vpop.f32.mrf.mxu0
        %v3490 = vadd.f32 0.0, %v3489
        %v3491 = vpop.f32.mrf.mxu0
        %v3492 = vpop.f32.mrf.mxu0
        %v3493 = vadd.f32 0.0, %v3492
        %v3494 = vpop.f32.mrf.mxu0
        %3495 = vdwg.mxu0
        %v3496 = vadd.f32 %v3391, %v3466
        %v3497 = vadd.f32 %v3392, %v3469
        %v3498 = vadd.f32 %v3393, %v3474
        %v3499 = vadd.f32 %v3394, %v3477
        %v3500 = vadd.f32 %v3395, %v3482
        %v3501 = vadd.f32 %v3396, %v3485
        %v3502 = vadd.f32 %v3397, %v3490
        %v3503 = vadd.f32 %v3398, %v3493
        %v3512 = vunpack.c.l.b16 %v1010
        %v3513 = vunpack.c.l.b16 %v1011
        %v3514 = vunpack.c.l.b16 %v1012
        %v3515 = vunpack.c.l.b16 %v1013
        %v3516 = vunpack.c.l.b16 %v1014
        %v3517 = vunpack.c.l.b16 %v1015
        %v3518 = vunpack.c.l.b16 %v1016
        %v3519 = vunpack.c.l.b16 %v1017
        %v3520 = vpack.c.b16 %v3513, %v3512
        %v3521 = vpack.c.b16 %v3515, %v3514
        %v3522 = vpack.c.b16 %v3517, %v3516
        %v3523 = vpack.c.b16 %v3519, %v3518
        %v3525 = vsel %vm1284, %v3520, 0
        %v3528 = vsel %vm1284, %v3521, 0
        %v3531 = vsel %vm1284, %v3522, 0
        %v3534 = vsel %vm1284, %v3523, 0
        %3536 = vmatprep.subr.bf16.mxu0 0
        %3537 = vmatpush1.bf16.msra.mxu0 0
        %3538 = vmatprep.subr.bf16.mxu0 0
        %3539 = vmatpush1.bf16.msra.mxu0 0
        %3540 = vmatprep.subr.bf16.mxu0 0
        %3541 = vmatpush1.bf16.msra.mxu0 0
        %3542 = vmatprep.subr.bf16.mxu0 0
        %3543 = vmatpush1.bf16.msra.mxu0 0
        %3544 = vmatprep.subr.bf16.mxu0 0
        %3545 = vmatpush1.bf16.msra.mxu0 0
        %3546 = vmatprep.subr.bf16.mxu0 0
        %3547 = vmatpush1.bf16.msra.mxu0 0
        %3548 = vmatprep.subr.bf16.mxu0 0
        %3549 = vmatpush1.bf16.msra.mxu0 0
        %3550 = vmatprep.subr.bf16.mxu0 0
        %3551 = vmatpush1.bf16.msra.mxu0 %v2041
        %3552 = vmatprep.subr.bf16.mxu0 0
        %3553 = vmatpush2.bf16.msra.mxu0 0
        %3554 = vmatprep.subr.bf16.mxu0 0
        %3555 = vmatpush2.bf16.msra.mxu0 0
        %3556 = vmatprep.subr.bf16.mxu0 0
        %3557 = vmatpush2.bf16.msra.mxu0 0
        %3558 = vmatprep.subr.bf16.mxu0 0
        %3559 = vmatpush2.bf16.msra.mxu0 0
        %3560 = vmatprep.subr.bf16.mxu0 0
        %3561 = vmatpush2.bf16.msra.mxu0 0
        %3562 = vmatprep.subr.bf16.mxu0 0
        %3563 = vmatpush2.bf16.msra.mxu0 0
        %3564 = vmatprep.subr.bf16.mxu0 0
        %3565 = vmatpush2.bf16.msra.mxu0 0
        %3566 = vmatprep.subr.bf16.mxu0 0
        %3567 = vmatpush2.bf16.msra.mxu0 0
        %3568 = vmatprep.mubr.bf16.mxu0 0
        %3569 = vmatmul.mubr.bf16.gmra.mxu0 %v3525
        %v3570 = vpop.f32.mrf.mxu0
        %v3571 = vadd.f32 0.0, %v3570
        %v3572 = vpop.f32.mrf.mxu0
        %v3573 = vpop.f32.mrf.mxu0
        %v3574 = vadd.f32 0.0, %v3573
        %v3575 = vpop.f32.mrf.mxu0
        %3576 = vmatprep.mubr.bf16.mxu0 0
        %3577 = vmatmul.mubr.bf16.gmra.mxu0 %v3528
        %v3578 = vpop.f32.mrf.mxu0
        %v3579 = vadd.f32 0.0, %v3578
        %v3580 = vpop.f32.mrf.mxu0
        %v3581 = vpop.f32.mrf.mxu0
        %v3582 = vadd.f32 0.0, %v3581
        %v3583 = vpop.f32.mrf.mxu0
        %3584 = vmatprep.mubr.bf16.mxu0 0
        %3585 = vmatmul.mubr.bf16.gmra.mxu0 %v3531
        %v3586 = vpop.f32.mrf.mxu0
        %v3587 = vadd.f32 0.0, %v3586
        %v3588 = vpop.f32.mrf.mxu0
        %v3589 = vpop.f32.mrf.mxu0
        %v3590 = vadd.f32 0.0, %v3589
        %v3591 = vpop.f32.mrf.mxu0
        %3592 = vmatprep.mubr.bf16.mxu0 0
        %3593 = vmatmul.mubr.bf16.gmra.mxu0 %v3534
        %v3594 = vpop.f32.mrf.mxu0
        %v3595 = vadd.f32 0.0, %v3594
        %v3596 = vpop.f32.mrf.mxu0
        %v3597 = vpop.f32.mrf.mxu0
        %v3598 = vadd.f32 0.0, %v3597
        %v3599 = vpop.f32.mrf.mxu0
        %3600 = vdwg.mxu0
        %v3601 = vadd.f32 %v3496, %v3571
        %v3602 = vadd.f32 %v3497, %v3574
        %v3603 = vadd.f32 %v3498, %v3579
        %v3604 = vadd.f32 %v3499, %v3582
        %v3605 = vadd.f32 %v3500, %v3587
        %v3606 = vadd.f32 %v3501, %v3590
        %v3607 = vadd.f32 %v3502, %v3595
        %v3608 = vadd.f32 %v3503, %v3598
        %v3609 = vunpack.c.l.b16 %v1039
        %v3610 = vunpack.c.l.b16 %v1053
        %v3611 = vunpack.c.l.b16 %v1067
        %v3612 = vunpack.c.l.b16 %v1081
        %v3613 = vunpack.c.l.b16 %v1095
        %v3614 = vunpack.c.l.b16 %v1109
        %v3615 = vunpack.c.l.b16 %v1123
        %v3616 = vunpack.c.l.b16 %v1137
        %v3617 = vpack.c.b16 %v3610, %v3609
        %v3618 = vpack.c.b16 %v3612, %v3611
        %v3619 = vpack.c.b16 %v3614, %v3613
        %v3620 = vpack.c.b16 %v3616, %v3615
        %v3622 = vsel %vm1284, %v3617, 0
        %v3625 = vsel %vm1284, %v3618, 0
        %v3628 = vsel %vm1284, %v3619, 0
        %v3631 = vsel %vm1284, %v3620, 0
        %3633 = vmatprep.subr.bf16.mxu0 0
        %3634 = vmatpush1.bf16.msra.mxu0 0
        %3635 = vmatprep.subr.bf16.mxu0 0
        %3636 = vmatpush1.bf16.msra.mxu0 0
        %3637 = vmatprep.subr.bf16.mxu0 0
        %3638 = vmatpush1.bf16.msra.mxu0 0
        %3639 = vmatprep.subr.bf16.mxu0 0
        %3640 = vmatpush1.bf16.msra.mxu0 0
        %3641 = vmatprep.subr.bf16.mxu0 0
        %3642 = vmatpush1.bf16.msra.mxu0 0
        %3643 = vmatprep.subr.bf16.mxu0 0
        %3644 = vmatpush1.bf16.msra.mxu0 0
        %3645 = vmatprep.subr.bf16.mxu0 0
        %3646 = vmatpush1.bf16.msra.mxu0 0
        %3647 = vmatprep.subr.bf16.mxu0 0
        %3648 = vmatpush1.bf16.msra.mxu0 %v2142
        %3649 = vmatprep.subr.bf16.mxu0 0
        %3650 = vmatpush2.bf16.msra.mxu0 0
        %3651 = vmatprep.subr.bf16.mxu0 0
        %3652 = vmatpush2.bf16.msra.mxu0 0
        %3653 = vmatprep.subr.bf16.mxu0 0
        %3654 = vmatpush2.bf16.msra.mxu0 0
        %3655 = vmatprep.subr.bf16.mxu0 0
        %3656 = vmatpush2.bf16.msra.mxu0 0
        %3657 = vmatprep.subr.bf16.mxu0 0
        %3658 = vmatpush2.bf16.msra.mxu0 0
        %3659 = vmatprep.subr.bf16.mxu0 0
        %3660 = vmatpush2.bf16.msra.mxu0 0
        %3661 = vmatprep.subr.bf16.mxu0 0
        %3662 = vmatpush2.bf16.msra.mxu0 0
        %3663 = vmatprep.subr.bf16.mxu0 0
        %3664 = vmatpush2.bf16.msra.mxu0 0
        %3665 = vmatprep.mubr.bf16.mxu0 0
        %3666 = vmatmul.mubr.bf16.gmra.mxu0 %v3622
        %v3667 = vpop.f32.mrf.mxu0
        %v3668 = vadd.f32 0.0, %v3667
        %v3669 = vpop.f32.mrf.mxu0
        %v3670 = vpop.f32.mrf.mxu0
        %v3671 = vadd.f32 0.0, %v3670
        %v3672 = vpop.f32.mrf.mxu0
        %3673 = vmatprep.mubr.bf16.mxu0 0
        %3674 = vmatmul.mubr.bf16.gmra.mxu0 %v3625
        %v3675 = vpop.f32.mrf.mxu0
        %v3676 = vadd.f32 0.0, %v3675
        %v3677 = vpop.f32.mrf.mxu0
        %v3678 = vpop.f32.mrf.mxu0
        %v3679 = vadd.f32 0.0, %v3678
        %v3680 = vpop.f32.mrf.mxu0
        %3681 = vmatprep.mubr.bf16.mxu0 0
        %3682 = vmatmul.mubr.bf16.gmra.mxu0 %v3628
        %v3683 = vpop.f32.mrf.mxu0
        %v3684 = vadd.f32 0.0, %v3683
        %v3685 = vpop.f32.mrf.mxu0
        %v3686 = vpop.f32.mrf.mxu0
        %v3687 = vadd.f32 0.0, %v3686
        %v3688 = vpop.f32.mrf.mxu0
        %3689 = vmatprep.mubr.bf16.mxu0 0
        %3690 = vmatmul.mubr.bf16.gmra.mxu0 %v3631
        %v3691 = vpop.f32.mrf.mxu0
        %v3692 = vadd.f32 0.0, %v3691
        %v3693 = vpop.f32.mrf.mxu0
        %v3694 = vpop.f32.mrf.mxu0
        %v3695 = vadd.f32 0.0, %v3694
        %v3696 = vpop.f32.mrf.mxu0
        %3697 = vdwg.mxu0
        %v3698 = vadd.f32 %v3601, %v3668
        %v3699 = vadd.f32 %v3602, %v3671
        %v3700 = vadd.f32 %v3603, %v3676
        %v3701 = vadd.f32 %v3604, %v3679
        %v3702 = vadd.f32 %v3605, %v3684
        %v3703 = vadd.f32 %v3606, %v3687
        %v3704 = vadd.f32 %v3607, %v3692
        %v3705 = vadd.f32 %v3608, %v3695
        %v3706 = vadd.f32 %v3698, %v2222
        %v3707 = vadd.f32 %v3699, %v2222
        %v3708 = vadd.f32 %v3700, %v2222
        %v3709 = vadd.f32 %v3701, %v2222
        %v3710 = vadd.f32 %v3702, %v2222
        %v3711 = vadd.f32 %v3703, %v2222
        %v3712 = vadd.f32 %v3704, %v2222
        %v3713 = vadd.f32 %v3705, %v2222
        %v3714 = vmax.f32 %v3706, 0.0
        %v3715 = vmax.f32 %v3707, 0.0
        %v3716 = vmax.f32 %v3708, 0.0
        %v3717 = vmax.f32 %v3709, 0.0
        %v3718 = vmax.f32 %v3710, 0.0
        %v3719 = vmax.f32 %v3711, 0.0
        %v3720 = vmax.f32 %v3712, 0.0
        %v3721 = vmax.f32 %v3713, 0.0
        %v3722 = vmax.f32 %v2969, %v3714
        %v3723 = vmax.f32 %v2970, %v3715
        %v3724 = vmax.f32 %v2971, %v3716
        %v3725 = vmax.f32 %v2972, %v3717
        %v3726 = vmax.f32 %v2973, %v3718
        %v3727 = vmax.f32 %v2974, %v3719
        %v3728 = vmax.f32 %v2975, %v3720
        %v3729 = vmax.f32 %v2976, %v3721
        %3730 = vmatprep.subr.bf16.mxu0 0
        %3731 = vmatpush1.bf16.msra.mxu0 0
        %3732 = vmatprep.subr.bf16.mxu0 0
        %3733 = vmatpush1.bf16.msra.mxu0 0
        %3734 = vmatprep.subr.bf16.mxu0 0
        %3735 = vmatpush1.bf16.msra.mxu0 0
        %3736 = vmatprep.subr.bf16.mxu0 0
        %3737 = vmatpush1.bf16.msra.mxu0 0
        %3738 = vmatprep.subr.bf16.mxu0 0
        %3739 = vmatpush1.bf16.msra.mxu0 0
        %3740 = vmatprep.subr.bf16.mxu0 0
        %3741 = vmatpush1.bf16.msra.mxu0 0
        %3742 = vmatprep.subr.bf16.mxu0 0
        %3743 = vmatpush1.bf16.msra.mxu0 0
        %3744 = vmatprep.subr.bf16.mxu0 0
        %3745 = vmatpush1.bf16.msra.mxu0 %v1299
        %3746 = vmatprep.subr.bf16.mxu0 0
        %3747 = vmatpush2.bf16.msra.mxu0 0
        %3748 = vmatprep.subr.bf16.mxu0 0
        %3749 = vmatpush2.bf16.msra.mxu0 0
        %3750 = vmatprep.subr.bf16.mxu0 0
        %3751 = vmatpush2.bf16.msra.mxu0 0
        %3752 = vmatprep.subr.bf16.mxu0 0
        %3753 = vmatpush2.bf16.msra.mxu0 0
        %3754 = vmatprep.subr.bf16.mxu0 0
        %3755 = vmatpush2.bf16.msra.mxu0 0
        %3756 = vmatprep.subr.bf16.mxu0 0
        %3757 = vmatpush2.bf16.msra.mxu0 0
        %3758 = vmatprep.subr.bf16.mxu0 0
        %3759 = vmatpush2.bf16.msra.mxu0 0
        %3760 = vmatprep.subr.bf16.mxu0 0
        %3761 = vmatpush2.bf16.msra.mxu0 0
        %3762 = vmatprep.mubr.bf16.mxu0 0
        %3763 = vmatmul.mubr.bf16.gmra.mxu0 %v1807
        %v3764 = vpop.f32.mrf.mxu0
        %v3765 = vadd.f32 0.0, %v3764
        %v3766 = vpop.f32.mrf.mxu0
        %v3767 = vpop.f32.mrf.mxu0
        %v3768 = vadd.f32 0.0, %v3767
        %v3769 = vpop.f32.mrf.mxu0
        %3770 = vmatprep.mubr.bf16.mxu0 0
        %3771 = vmatmul.mubr.bf16.gmra.mxu0 %v1810
        %v3772 = vpop.f32.mrf.mxu0
        %v3773 = vadd.f32 0.0, %v3772
        %v3774 = vpop.f32.mrf.mxu0
        %v3775 = vpop.f32.mrf.mxu0
        %v3776 = vadd.f32 0.0, %v3775
        %v3777 = vpop.f32.mrf.mxu0
        %3778 = vmatprep.mubr.bf16.mxu0 0
        %3779 = vmatmul.mubr.bf16.gmra.mxu0 %v1813
        %v3780 = vpop.f32.mrf.mxu0
        %v3781 = vadd.f32 0.0, %v3780
        %v3782 = vpop.f32.mrf.mxu0
        %v3783 = vpop.f32.mrf.mxu0
        %v3784 = vadd.f32 0.0, %v3783
        %v3785 = vpop.f32.mrf.mxu0
        %3786 = vmatprep.mubr.bf16.mxu0 0
        %3787 = vmatmul.mubr.bf16.gmra.mxu0 %v1816
        %v3788 = vpop.f32.mrf.mxu0
        %v3789 = vadd.f32 0.0, %v3788
        %v3790 = vpop.f32.mrf.mxu0
        %v3791 = vpop.f32.mrf.mxu0
        %v3792 = vadd.f32 0.0, %v3791
        %v3793 = vpop.f32.mrf.mxu0
        %3794 = vdwg.mxu0
        %3795 = vmatprep.subr.bf16.mxu0 0
        %3796 = vmatpush1.bf16.msra.mxu0 0
        %3797 = vmatprep.subr.bf16.mxu0 0
        %3798 = vmatpush1.bf16.msra.mxu0 0
        %3799 = vmatprep.subr.bf16.mxu0 0
        %3800 = vmatpush1.bf16.msra.mxu0 0
        %3801 = vmatprep.subr.bf16.mxu0 0
        %3802 = vmatpush1.bf16.msra.mxu0 0
        %3803 = vmatprep.subr.bf16.mxu0 0
        %3804 = vmatpush1.bf16.msra.mxu0 0
        %3805 = vmatprep.subr.bf16.mxu0 0
        %3806 = vmatpush1.bf16.msra.mxu0 0
        %3807 = vmatprep.subr.bf16.mxu0 0
        %3808 = vmatpush1.bf16.msra.mxu0 0
        %3809 = vmatprep.subr.bf16.mxu0 0
        %3810 = vmatpush1.bf16.msra.mxu0 %v1399
        %3811 = vmatprep.subr.bf16.mxu0 0
        %3812 = vmatpush2.bf16.msra.mxu0 0
        %3813 = vmatprep.subr.bf16.mxu0 0
        %3814 = vmatpush2.bf16.msra.mxu0 0
        %3815 = vmatprep.subr.bf16.mxu0 0
        %3816 = vmatpush2.bf16.msra.mxu0 0
        %3817 = vmatprep.subr.bf16.mxu0 0
        %3818 = vmatpush2.bf16.msra.mxu0 0
        %3819 = vmatprep.subr.bf16.mxu0 0
        %3820 = vmatpush2.bf16.msra.mxu0 0
        %3821 = vmatprep.subr.bf16.mxu0 0
        %3822 = vmatpush2.bf16.msra.mxu0 0
        %3823 = vmatprep.subr.bf16.mxu0 0
        %3824 = vmatpush2.bf16.msra.mxu0 0
        %3825 = vmatprep.subr.bf16.mxu0 0
        %3826 = vmatpush2.bf16.msra.mxu0 0
        %3827 = vmatprep.mubr.bf16.mxu0 0
        %3828 = vmatmul.mubr.bf16.gmra.mxu0 %v1702
        %v3829 = vpop.f32.mrf.mxu0
        %v3830 = vadd.f32 %v3765, %v3829
        %v3831 = vpop.f32.mrf.mxu0
        %v3832 = vpop.f32.mrf.mxu0
        %v3833 = vadd.f32 %v3768, %v3832
        %v3834 = vpop.f32.mrf.mxu0
        %3835 = vmatprep.mubr.bf16.mxu0 0
        %3836 = vmatmul.mubr.bf16.gmra.mxu0 %v1705
        %v3837 = vpop.f32.mrf.mxu0
        %v3838 = vadd.f32 %v3773, %v3837
        %v3839 = vpop.f32.mrf.mxu0
        %v3840 = vpop.f32.mrf.mxu0
        %v3841 = vadd.f32 %v3776, %v3840
        %v3842 = vpop.f32.mrf.mxu0
        %3843 = vmatprep.mubr.bf16.mxu0 0
        %3844 = vmatmul.mubr.bf16.gmra.mxu0 %v1708
        %v3845 = vpop.f32.mrf.mxu0
        %v3846 = vadd.f32 %v3781, %v3845
        %v3847 = vpop.f32.mrf.mxu0
        %v3848 = vpop.f32.mrf.mxu0
        %v3849 = vadd.f32 %v3784, %v3848
        %v3850 = vpop.f32.mrf.mxu0
        %3851 = vmatprep.mubr.bf16.mxu0 0
        %3852 = vmatmul.mubr.bf16.gmra.mxu0 %v1711
        %v3853 = vpop.f32.mrf.mxu0
        %v3854 = vadd.f32 %v3789, %v3853
        %v3855 = vpop.f32.mrf.mxu0
        %v3856 = vpop.f32.mrf.mxu0
        %v3857 = vadd.f32 %v3792, %v3856
        %v3858 = vpop.f32.mrf.mxu0
        %3859 = vdwg.mxu0
        %3860 = vmatprep.subr.bf16.mxu0 0
        %3861 = vmatpush1.bf16.msra.mxu0 0
        %3862 = vmatprep.subr.bf16.mxu0 0
        %3863 = vmatpush1.bf16.msra.mxu0 0
        %3864 = vmatprep.subr.bf16.mxu0 0
        %3865 = vmatpush1.bf16.msra.mxu0 0
        %3866 = vmatprep.subr.bf16.mxu0 0
        %3867 = vmatpush1.bf16.msra.mxu0 0
        %3868 = vmatprep.subr.bf16.mxu0 0
        %3869 = vmatpush1.bf16.msra.mxu0 0
        %3870 = vmatprep.subr.bf16.mxu0 0
        %3871 = vmatpush1.bf16.msra.mxu0 0
        %3872 = vmatprep.subr.bf16.mxu0 0
        %3873 = vmatpush1.bf16.msra.mxu0 0
        %3874 = vmatprep.subr.bf16.mxu0 0
        %3875 = vmatpush1.bf16.msra.mxu0 %v1492
        %3876 = vmatprep.subr.bf16.mxu0 0
        %3877 = vmatpush2.bf16.msra.mxu0 0
        %3878 = vmatprep.subr.bf16.mxu0 0
        %3879 = vmatpush2.bf16.msra.mxu0 0
        %3880 = vmatprep.subr.bf16.mxu0 0
        %3881 = vmatpush2.bf16.msra.mxu0 0
        %3882 = vmatprep.subr.bf16.mxu0 0
        %3883 = vmatpush2.bf16.msra.mxu0 0
        %3884 = vmatprep.subr.bf16.mxu0 0
        %3885 = vmatpush2.bf16.msra.mxu0 0
        %3886 = vmatprep.subr.bf16.mxu0 0
        %3887 = vmatpush2.bf16.msra.mxu0 0
        %3888 = vmatprep.subr.bf16.mxu0 0
        %3889 = vmatpush2.bf16.msra.mxu0 0
        %3890 = vmatprep.subr.bf16.mxu0 0
        %3891 = vmatpush2.bf16.msra.mxu0 0
        %3892 = vmatprep.mubr.bf16.mxu0 0
        %3893 = vmatmul.mubr.bf16.gmra.mxu0 %v2626
        %v3894 = vpop.f32.mrf.mxu0
        %v3895 = vadd.f32 0.0, %v3894
        %v3896 = vpop.f32.mrf.mxu0
        %v3897 = vpop.f32.mrf.mxu0
        %v3898 = vadd.f32 0.0, %v3897
        %v3899 = vpop.f32.mrf.mxu0
        %3900 = vmatprep.mubr.bf16.mxu0 0
        %3901 = vmatmul.mubr.bf16.gmra.mxu0 %v2629
        %v3902 = vpop.f32.mrf.mxu0
        %v3903 = vadd.f32 0.0, %v3902
        %v3904 = vpop.f32.mrf.mxu0
        %v3905 = vpop.f32.mrf.mxu0
        %v3906 = vadd.f32 0.0, %v3905
        %v3907 = vpop.f32.mrf.mxu0
        %3908 = vmatprep.mubr.bf16.mxu0 0
        %3909 = vmatmul.mubr.bf16.gmra.mxu0 %v2632
        %v3910 = vpop.f32.mrf.mxu0
        %v3911 = vadd.f32 0.0, %v3910
        %v3912 = vpop.f32.mrf.mxu0
        %v3913 = vpop.f32.mrf.mxu0
        %v3914 = vadd.f32 0.0, %v3913
        %v3915 = vpop.f32.mrf.mxu0
        %3916 = vmatprep.mubr.bf16.mxu0 0
        %3917 = vmatmul.mubr.bf16.gmra.mxu0 %v2635
        %v3918 = vpop.f32.mrf.mxu0
        %v3919 = vadd.f32 0.0, %v3918
        %v3920 = vpop.f32.mrf.mxu0
        %v3921 = vpop.f32.mrf.mxu0
        %v3922 = vadd.f32 0.0, %v3921
        %v3923 = vpop.f32.mrf.mxu0
        %3924 = vdwg.mxu0
        %v3925 = vadd.f32 %v3830, %v3895
        %v3926 = vadd.f32 %v3833, %v3898
        %v3927 = vadd.f32 %v3838, %v3903
        %v3928 = vadd.f32 %v3841, %v3906
        %v3929 = vadd.f32 %v3846, %v3911
        %v3930 = vadd.f32 %v3849, %v3914
        %v3931 = vadd.f32 %v3854, %v3919
        %v3932 = vadd.f32 %v3857, %v3922
        %3933 = vmatprep.subr.bf16.mxu0 0
        %3934 = vmatpush1.bf16.msra.mxu0 0
        %3935 = vmatprep.subr.bf16.mxu0 0
        %3936 = vmatpush1.bf16.msra.mxu0 0
        %3937 = vmatprep.subr.bf16.mxu0 0
        %3938 = vmatpush1.bf16.msra.mxu0 0
        %3939 = vmatprep.subr.bf16.mxu0 0
        %3940 = vmatpush1.bf16.msra.mxu0 0
        %3941 = vmatprep.subr.bf16.mxu0 0
        %3942 = vmatpush1.bf16.msra.mxu0 0
        %3943 = vmatprep.subr.bf16.mxu0 0
        %3944 = vmatpush1.bf16.msra.mxu0 0
        %3945 = vmatprep.subr.bf16.mxu0 0
        %3946 = vmatpush1.bf16.msra.mxu0 0
        %3947 = vmatprep.subr.bf16.mxu0 0
        %3948 = vmatpush1.bf16.msra.mxu0 %v1605
        %3949 = vmatprep.subr.bf16.mxu0 0
        %3950 = vmatpush2.bf16.msra.mxu0 0
        %3951 = vmatprep.subr.bf16.mxu0 0
        %3952 = vmatpush2.bf16.msra.mxu0 0
        %3953 = vmatprep.subr.bf16.mxu0 0
        %3954 = vmatpush2.bf16.msra.mxu0 0
        %3955 = vmatprep.subr.bf16.mxu0 0
        %3956 = vmatpush2.bf16.msra.mxu0 0
        %3957 = vmatprep.subr.bf16.mxu0 0
        %3958 = vmatpush2.bf16.msra.mxu0 0
        %3959 = vmatprep.subr.bf16.mxu0 0
        %3960 = vmatpush2.bf16.msra.mxu0 0
        %3961 = vmatprep.subr.bf16.mxu0 0
        %3962 = vmatpush2.bf16.msra.mxu0 0
        %3963 = vmatprep.subr.bf16.mxu0 0
        %3964 = vmatpush2.bf16.msra.mxu0 0
        %3965 = vmatprep.mubr.bf16.mxu0 0
        %3966 = vmatmul.mubr.bf16.gmra.mxu0 %v2029
        %v3967 = vpop.f32.mrf.mxu0
        %v3968 = vadd.f32 0.0, %v3967
        %v3969 = vpop.f32.mrf.mxu0
        %v3970 = vpop.f32.mrf.mxu0
        %v3971 = vadd.f32 0.0, %v3970
        %v3972 = vpop.f32.mrf.mxu0
        %3973 = vmatprep.mubr.bf16.mxu0 0
        %3974 = vmatmul.mubr.bf16.gmra.mxu0 %v2032
        %v3975 = vpop.f32.mrf.mxu0
        %v3976 = vadd.f32 0.0, %v3975
        %v3977 = vpop.f32.mrf.mxu0
        %v3978 = vpop.f32.mrf.mxu0
        %v3979 = vadd.f32 0.0, %v3978
        %v3980 = vpop.f32.mrf.mxu0
        %3981 = vmatprep.mubr.bf16.mxu0 0
        %3982 = vmatmul.mubr.bf16.gmra.mxu0 %v2035
        %v3983 = vpop.f32.mrf.mxu0
        %v3984 = vadd.f32 0.0, %v3983
        %v3985 = vpop.f32.mrf.mxu0
        %v3986 = vpop.f32.mrf.mxu0
        %v3987 = vadd.f32 0.0, %v3986
        %v3988 = vpop.f32.mrf.mxu0
        %3989 = vmatprep.mubr.bf16.mxu0 0
        %3990 = vmatmul.mubr.bf16.gmra.mxu0 %v2038
        %v3991 = vpop.f32.mrf.mxu0
        %v3992 = vadd.f32 0.0, %v3991
        %v3993 = vpop.f32.mrf.mxu0
        %v3994 = vpop.f32.mrf.mxu0
        %v3995 = vadd.f32 0.0, %v3994
        %v3996 = vpop.f32.mrf.mxu0
        %3997 = vdwg.mxu0
        %v3998 = vadd.f32 %v3925, %v3968
        %v3999 = vadd.f32 %v3926, %v3971
        %v4000 = vadd.f32 %v3927, %v3976
        %v4001 = vadd.f32 %v3928, %v3979
        %v4002 = vadd.f32 %v3929, %v3984
        %v4003 = vadd.f32 %v3930, %v3987
        %v4004 = vadd.f32 %v3931, %v3992
        %v4005 = vadd.f32 %v3932, %v3995
        %4006 = vmatprep.subr.bf16.mxu0 0
        %4007 = vmatpush1.bf16.msra.mxu0 0
        %4008 = vmatprep.subr.bf16.mxu0 0
        %4009 = vmatpush1.bf16.msra.mxu0 0
        %4010 = vmatprep.subr.bf16.mxu0 0
        %4011 = vmatpush1.bf16.msra.mxu0 0
        %4012 = vmatprep.subr.bf16.mxu0 0
        %4013 = vmatpush1.bf16.msra.mxu0 0
        %4014 = vmatprep.subr.bf16.mxu0 0
        %4015 = vmatpush1.bf16.msra.mxu0 0
        %4016 = vmatprep.subr.bf16.mxu0 0
        %4017 = vmatpush1.bf16.msra.mxu0 0
        %4018 = vmatprep.subr.bf16.mxu0 0
        %4019 = vmatpush1.bf16.msra.mxu0 0
        %4020 = vmatprep.subr.bf16.mxu0 0
        %4021 = vmatpush1.bf16.msra.mxu0 %v1714
        %4022 = vmatprep.subr.bf16.mxu0 0
        %4023 = vmatpush2.bf16.msra.mxu0 0
        %4024 = vmatprep.subr.bf16.mxu0 0
        %4025 = vmatpush2.bf16.msra.mxu0 0
        %4026 = vmatprep.subr.bf16.mxu0 0
        %4027 = vmatpush2.bf16.msra.mxu0 0
        %4028 = vmatprep.subr.bf16.mxu0 0
        %4029 = vmatpush2.bf16.msra.mxu0 0
        %4030 = vmatprep.subr.bf16.mxu0 0
        %4031 = vmatpush2.bf16.msra.mxu0 0
        %4032 = vmatprep.subr.bf16.mxu0 0
        %4033 = vmatpush2.bf16.msra.mxu0 0
        %4034 = vmatprep.subr.bf16.mxu0 0
        %4035 = vmatpush2.bf16.msra.mxu0 0
        %4036 = vmatprep.subr.bf16.mxu0 0
        %4037 = vmatpush2.bf16.msra.mxu0 0
        %4038 = vmatprep.mubr.bf16.mxu0 0
        %4039 = vmatmul.mubr.bf16.gmra.mxu0 %v2130
        %v4040 = vpop.f32.mrf.mxu0
        %v4041 = vadd.f32 0.0, %v4040
        %v4042 = vpop.f32.mrf.mxu0
        %v4043 = vpop.f32.mrf.mxu0
        %v4044 = vadd.f32 0.0, %v4043
        %v4045 = vpop.f32.mrf.mxu0
        %4046 = vmatprep.mubr.bf16.mxu0 0
        %4047 = vmatmul.mubr.bf16.gmra.mxu0 %v2133
        %v4048 = vpop.f32.mrf.mxu0
        %v4049 = vadd.f32 0.0, %v4048
        %v4050 = vpop.f32.mrf.mxu0
        %v4051 = vpop.f32.mrf.mxu0
        %v4052 = vadd.f32 0.0, %v4051
        %v4053 = vpop.f32.mrf.mxu0
        %4054 = vmatprep.mubr.bf16.mxu0 0
        %4055 = vmatmul.mubr.bf16.gmra.mxu0 %v2136
        %v4056 = vpop.f32.mrf.mxu0
        %v4057 = vadd.f32 0.0, %v4056
        %v4058 = vpop.f32.mrf.mxu0
        %v4059 = vpop.f32.mrf.mxu0
        %v4060 = vadd.f32 0.0, %v4059
        %v4061 = vpop.f32.mrf.mxu0
        %4062 = vmatprep.mubr.bf16.mxu0 0
        %4063 = vmatmul.mubr.bf16.gmra.mxu0 %v2139
        %v4064 = vpop.f32.mrf.mxu0
        %v4065 = vadd.f32 0.0, %v4064
        %v4066 = vpop.f32.mrf.mxu0
        %v4067 = vpop.f32.mrf.mxu0
        %v4068 = vadd.f32 0.0, %v4067
        %v4069 = vpop.f32.mrf.mxu0
        %4070 = vdwg.mxu0
        %v4071 = vadd.f32 %v3998, %v4041
        %v4072 = vadd.f32 %v3999, %v4044
        %v4073 = vadd.f32 %v4000, %v4049
        %v4074 = vadd.f32 %v4001, %v4052
        %v4075 = vadd.f32 %v4002, %v4057
        %v4076 = vadd.f32 %v4003, %v4060
        %v4077 = vadd.f32 %v4004, %v4065
        %v4078 = vadd.f32 %v4005, %v4068
        %4079 = vmatprep.subr.bf16.mxu0 0
        %4080 = vmatpush1.bf16.msra.mxu0 0
        %4081 = vmatprep.subr.bf16.mxu0 0
        %4082 = vmatpush1.bf16.msra.mxu0 0
        %4083 = vmatprep.subr.bf16.mxu0 0
        %4084 = vmatpush1.bf16.msra.mxu0 0
        %4085 = vmatprep.subr.bf16.mxu0 0
        %4086 = vmatpush1.bf16.msra.mxu0 0
        %4087 = vmatprep.subr.bf16.mxu0 0
        %4088 = vmatpush1.bf16.msra.mxu0 0
        %4089 = vmatprep.subr.bf16.mxu0 0
        %4090 = vmatpush1.bf16.msra.mxu0 0
        %4091 = vmatprep.subr.bf16.mxu0 0
        %4092 = vmatpush1.bf16.msra.mxu0 0
        %4093 = vmatprep.subr.bf16.mxu0 0
        %4094 = vmatpush1.bf16.msra.mxu0 %v1819
        %4095 = vmatprep.subr.bf16.mxu0 0
        %4096 = vmatpush2.bf16.msra.mxu0 0
        %4097 = vmatprep.subr.bf16.mxu0 0
        %4098 = vmatpush2.bf16.msra.mxu0 0
        %4099 = vmatprep.subr.bf16.mxu0 0
        %4100 = vmatpush2.bf16.msra.mxu0 0
        %4101 = vmatprep.subr.bf16.mxu0 0
        %4102 = vmatpush2.bf16.msra.mxu0 0
        %4103 = vmatprep.subr.bf16.mxu0 0
        %4104 = vmatpush2.bf16.msra.mxu0 0
        %4105 = vmatprep.subr.bf16.mxu0 0
        %4106 = vmatpush2.bf16.msra.mxu0 0
        %4107 = vmatprep.subr.bf16.mxu0 0
        %4108 = vmatpush2.bf16.msra.mxu0 0
        %4109 = vmatprep.subr.bf16.mxu0 0
        %4110 = vmatpush2.bf16.msra.mxu0 0
        %4111 = vmatprep.mubr.bf16.mxu0 0
        %4112 = vmatmul.mubr.bf16.gmra.mxu0 %v2869
        %v4113 = vpop.f32.mrf.mxu0
        %v4114 = vadd.f32 0.0, %v4113
        %v4115 = vpop.f32.mrf.mxu0
        %v4116 = vpop.f32.mrf.mxu0
        %v4117 = vadd.f32 0.0, %v4116
        %v4118 = vpop.f32.mrf.mxu0
        %4119 = vmatprep.mubr.bf16.mxu0 0
        %4120 = vmatmul.mubr.bf16.gmra.mxu0 %v2872
        %v4121 = vpop.f32.mrf.mxu0
        %v4122 = vadd.f32 0.0, %v4121
        %v4123 = vpop.f32.mrf.mxu0
        %v4124 = vpop.f32.mrf.mxu0
        %v4125 = vadd.f32 0.0, %v4124
        %v4126 = vpop.f32.mrf.mxu0
        %4127 = vmatprep.mubr.bf16.mxu0 0
        %4128 = vmatmul.mubr.bf16.gmra.mxu0 %v2875
        %v4129 = vpop.f32.mrf.mxu0
        %v4130 = vadd.f32 0.0, %v4129
        %v4131 = vpop.f32.mrf.mxu0
        %v4132 = vpop.f32.mrf.mxu0
        %v4133 = vadd.f32 0.0, %v4132
        %v4134 = vpop.f32.mrf.mxu0
        %4135 = vmatprep.mubr.bf16.mxu0 0
        %4136 = vmatmul.mubr.bf16.gmra.mxu0 %v2878
        %v4137 = vpop.f32.mrf.mxu0
        %v4138 = vadd.f32 0.0, %v4137
        %v4139 = vpop.f32.mrf.mxu0
        %v4140 = vpop.f32.mrf.mxu0
        %v4141 = vadd.f32 0.0, %v4140
        %v4142 = vpop.f32.mrf.mxu0
        %4143 = vdwg.mxu0
        %v4144 = vadd.f32 %v4071, %v4114
        %v4145 = vadd.f32 %v4072, %v4117
        %v4146 = vadd.f32 %v4073, %v4122
        %v4147 = vadd.f32 %v4074, %v4125
        %v4148 = vadd.f32 %v4075, %v4130
        %v4149 = vadd.f32 %v4076, %v4133
        %v4150 = vadd.f32 %v4077, %v4138
        %v4151 = vadd.f32 %v4078, %v4141
        %4152 = vmatprep.subr.bf16.mxu0 0
        %4153 = vmatpush1.bf16.msra.mxu0 0
        %4154 = vmatprep.subr.bf16.mxu0 0
        %4155 = vmatpush1.bf16.msra.mxu0 0
        %4156 = vmatprep.subr.bf16.mxu0 0
        %4157 = vmatpush1.bf16.msra.mxu0 0
        %4158 = vmatprep.subr.bf16.mxu0 0
        %4159 = vmatpush1.bf16.msra.mxu0 0
        %4160 = vmatprep.subr.bf16.mxu0 0
        %4161 = vmatpush1.bf16.msra.mxu0 0
        %4162 = vmatprep.subr.bf16.mxu0 0
        %4163 = vmatpush1.bf16.msra.mxu0 0
        %4164 = vmatprep.subr.bf16.mxu0 0
        %4165 = vmatpush1.bf16.msra.mxu0 0
        %4166 = vmatprep.subr.bf16.mxu0 0
        %4167 = vmatpush1.bf16.msra.mxu0 %v1928
        %4168 = vmatprep.subr.bf16.mxu0 0
        %4169 = vmatpush2.bf16.msra.mxu0 0
        %4170 = vmatprep.subr.bf16.mxu0 0
        %4171 = vmatpush2.bf16.msra.mxu0 0
        %4172 = vmatprep.subr.bf16.mxu0 0
        %4173 = vmatpush2.bf16.msra.mxu0 0
        %4174 = vmatprep.subr.bf16.mxu0 0
        %4175 = vmatpush2.bf16.msra.mxu0 0
        %4176 = vmatprep.subr.bf16.mxu0 0
        %4177 = vmatpush2.bf16.msra.mxu0 0
        %4178 = vmatprep.subr.bf16.mxu0 0
        %4179 = vmatpush2.bf16.msra.mxu0 0
        %4180 = vmatprep.subr.bf16.mxu0 0
        %4181 = vmatpush2.bf16.msra.mxu0 0
        %4182 = vmatprep.subr.bf16.mxu0 0
        %4183 = vmatpush2.bf16.msra.mxu0 0
        %4184 = vmatprep.mubr.bf16.mxu0 0
        %4185 = vmatmul.mubr.bf16.gmra.mxu0 %v3525
        %v4186 = vpop.f32.mrf.mxu0
        %v4187 = vadd.f32 0.0, %v4186
        %v4188 = vpop.f32.mrf.mxu0
        %v4189 = vpop.f32.mrf.mxu0
        %v4190 = vadd.f32 0.0, %v4189
        %v4191 = vpop.f32.mrf.mxu0
        %4192 = vmatprep.mubr.bf16.mxu0 0
        %4193 = vmatmul.mubr.bf16.gmra.mxu0 %v3528
        %v4194 = vpop.f32.mrf.mxu0
        %v4195 = vadd.f32 0.0, %v4194
        %v4196 = vpop.f32.mrf.mxu0
        %v4197 = vpop.f32.mrf.mxu0
        %v4198 = vadd.f32 0.0, %v4197
        %v4199 = vpop.f32.mrf.mxu0
        %4200 = vmatprep.mubr.bf16.mxu0 0
        %4201 = vmatmul.mubr.bf16.gmra.mxu0 %v3531
        %v4202 = vpop.f32.mrf.mxu0
        %v4203 = vadd.f32 0.0, %v4202
        %v4204 = vpop.f32.mrf.mxu0
        %v4205 = vpop.f32.mrf.mxu0
        %v4206 = vadd.f32 0.0, %v4205
        %v4207 = vpop.f32.mrf.mxu0
        %4208 = vmatprep.mubr.bf16.mxu0 0
        %4209 = vmatmul.mubr.bf16.gmra.mxu0 %v3534
        %v4210 = vpop.f32.mrf.mxu0
        %v4211 = vadd.f32 0.0, %v4210
        %v4212 = vpop.f32.mrf.mxu0
        %v4213 = vpop.f32.mrf.mxu0
        %v4214 = vadd.f32 0.0, %v4213
        %v4215 = vpop.f32.mrf.mxu0
        %4216 = vdwg.mxu0
        %v4217 = vadd.f32 %v4144, %v4187
        %v4218 = vadd.f32 %v4145, %v4190
        %v4219 = vadd.f32 %v4146, %v4195
        %v4220 = vadd.f32 %v4147, %v4198
        %v4221 = vadd.f32 %v4148, %v4203
        %v4222 = vadd.f32 %v4149, %v4206
        %v4223 = vadd.f32 %v4150, %v4211
        %v4224 = vadd.f32 %v4151, %v4214
        %4225 = vmatprep.subr.bf16.mxu0 0
        %4226 = vmatpush1.bf16.msra.mxu0 0
        %4227 = vmatprep.subr.bf16.mxu0 0
        %4228 = vmatpush1.bf16.msra.mxu0 0
        %4229 = vmatprep.subr.bf16.mxu0 0
        %4230 = vmatpush1.bf16.msra.mxu0 0
        %4231 = vmatprep.subr.bf16.mxu0 0
        %4232 = vmatpush1.bf16.msra.mxu0 0
        %4233 = vmatprep.subr.bf16.mxu0 0
        %4234 = vmatpush1.bf16.msra.mxu0 0
        %4235 = vmatprep.subr.bf16.mxu0 0
        %4236 = vmatpush1.bf16.msra.mxu0 0
        %4237 = vmatprep.subr.bf16.mxu0 0
        %4238 = vmatpush1.bf16.msra.mxu0 0
        %4239 = vmatprep.subr.bf16.mxu0 0
        %4240 = vmatpush1.bf16.msra.mxu0 %v2041
        %4241 = vmatprep.subr.bf16.mxu0 0
        %4242 = vmatpush2.bf16.msra.mxu0 0
        %4243 = vmatprep.subr.bf16.mxu0 0
        %4244 = vmatpush2.bf16.msra.mxu0 0
        %4245 = vmatprep.subr.bf16.mxu0 0
        %4246 = vmatpush2.bf16.msra.mxu0 0
        %4247 = vmatprep.subr.bf16.mxu0 0
        %4248 = vmatpush2.bf16.msra.mxu0 0
        %4249 = vmatprep.subr.bf16.mxu0 0
        %4250 = vmatpush2.bf16.msra.mxu0 0
        %4251 = vmatprep.subr.bf16.mxu0 0
        %4252 = vmatpush2.bf16.msra.mxu0 0
        %4253 = vmatprep.subr.bf16.mxu0 0
        %4254 = vmatpush2.bf16.msra.mxu0 0
        %4255 = vmatprep.subr.bf16.mxu0 0
        %4256 = vmatpush2.bf16.msra.mxu0 0
        %4257 = vmatprep.mubr.bf16.mxu0 0
        %4258 = vmatmul.mubr.bf16.gmra.mxu0 %v3622
        %v4259 = vpop.f32.mrf.mxu0
        %v4260 = vadd.f32 0.0, %v4259
        %v4261 = vpop.f32.mrf.mxu0
        %v4262 = vpop.f32.mrf.mxu0
        %v4263 = vadd.f32 0.0, %v4262
        %v4264 = vpop.f32.mrf.mxu0
        %4265 = vmatprep.mubr.bf16.mxu0 0
        %4266 = vmatmul.mubr.bf16.gmra.mxu0 %v3625
        %v4267 = vpop.f32.mrf.mxu0
        %v4268 = vadd.f32 0.0, %v4267
        %v4269 = vpop.f32.mrf.mxu0
        %v4270 = vpop.f32.mrf.mxu0
        %v4271 = vadd.f32 0.0, %v4270
        %v4272 = vpop.f32.mrf.mxu0
        %4273 = vmatprep.mubr.bf16.mxu0 0
        %4274 = vmatmul.mubr.bf16.gmra.mxu0 %v3628
        %v4275 = vpop.f32.mrf.mxu0
        %v4276 = vadd.f32 0.0, %v4275
        %v4277 = vpop.f32.mrf.mxu0
        %v4278 = vpop.f32.mrf.mxu0
        %v4279 = vadd.f32 0.0, %v4278
        %v4280 = vpop.f32.mrf.mxu0
        %4281 = vmatprep.mubr.bf16.mxu0 0
        %4282 = vmatmul.mubr.bf16.gmra.mxu0 %v3631
        %v4283 = vpop.f32.mrf.mxu0
        %v4284 = vadd.f32 0.0, %v4283
        %v4285 = vpop.f32.mrf.mxu0
        %v4286 = vpop.f32.mrf.mxu0
        %v4287 = vadd.f32 0.0, %v4286
        %v4288 = vpop.f32.mrf.mxu0
        %4289 = vdwg.mxu0
        %v4290 = vadd.f32 %v4217, %v4260
        %v4291 = vadd.f32 %v4218, %v4263
        %v4292 = vadd.f32 %v4219, %v4268
        %v4293 = vadd.f32 %v4220, %v4271
        %v4294 = vadd.f32 %v4221, %v4276
        %v4295 = vadd.f32 %v4222, %v4279
        %v4296 = vadd.f32 %v4223, %v4284
        %v4297 = vadd.f32 %v4224, %v4287
        %v4298 = vunpack.c.l.b16 %v1159
        %v4299 = vunpack.c.l.b16 %v1173
        %v4300 = vunpack.c.l.b16 %v1187
        %v4301 = vunpack.c.l.b16 %v1201
        %v4302 = vunpack.c.l.b16 %v1215
        %v4303 = vunpack.c.l.b16 %v1229
        %v4304 = vunpack.c.l.b16 %v1243
        %v4305 = vunpack.c.l.b16 %v1257
        %v4306 = vpack.c.b16 %v4299, %v4298
        %v4307 = vpack.c.b16 %v4301, %v4300
        %v4308 = vpack.c.b16 %v4303, %v4302
        %v4309 = vpack.c.b16 %v4305, %v4304
        %v4311 = vsel %vm1284, %v4306, 0
        %v4314 = vsel %vm1284, %v4307, 0
        %v4317 = vsel %vm1284, %v4308, 0
        %v4320 = vsel %vm1284, %v4309, 0
        %4322 = vmatprep.subr.bf16.mxu0 0
        %4323 = vmatpush1.bf16.msra.mxu0 0
        %4324 = vmatprep.subr.bf16.mxu0 0
        %4325 = vmatpush1.bf16.msra.mxu0 0
        %4326 = vmatprep.subr.bf16.mxu0 0
        %4327 = vmatpush1.bf16.msra.mxu0 0
        %4328 = vmatprep.subr.bf16.mxu0 0
        %4329 = vmatpush1.bf16.msra.mxu0 0
        %4330 = vmatprep.subr.bf16.mxu0 0
        %4331 = vmatpush1.bf16.msra.mxu0 0
        %4332 = vmatprep.subr.bf16.mxu0 0
        %4333 = vmatpush1.bf16.msra.mxu0 0
        %4334 = vmatprep.subr.bf16.mxu0 0
        %4335 = vmatpush1.bf16.msra.mxu0 0
        %4336 = vmatprep.subr.bf16.mxu0 0
        %4337 = vmatpush1.bf16.msra.mxu0 %v2142
        %4338 = vmatprep.subr.bf16.mxu0 0
        %4339 = vmatpush2.bf16.msra.mxu0 0
        %4340 = vmatprep.subr.bf16.mxu0 0
        %4341 = vmatpush2.bf16.msra.mxu0 0
        %4342 = vmatprep.subr.bf16.mxu0 0
        %4343 = vmatpush2.bf16.msra.mxu0 0
        %4344 = vmatprep.subr.bf16.mxu0 0
        %4345 = vmatpush2.bf16.msra.mxu0 0
        %4346 = vmatprep.subr.bf16.mxu0 0
        %4347 = vmatpush2.bf16.msra.mxu0 0
        %4348 = vmatprep.subr.bf16.mxu0 0
        %4349 = vmatpush2.bf16.msra.mxu0 0
        %4350 = vmatprep.subr.bf16.mxu0 0
        %4351 = vmatpush2.bf16.msra.mxu0 0
        %4352 = vmatprep.subr.bf16.mxu0 0
        %4353 = vmatpush2.bf16.msra.mxu0 0
        %4354 = vmatprep.mubr.bf16.mxu0 0
        %4355 = vmatmul.mubr.bf16.gmra.mxu0 %v4311
        %v4356 = vpop.f32.mrf.mxu0
        %v4357 = vadd.f32 0.0, %v4356
        %v4358 = vpop.f32.mrf.mxu0
        %v4359 = vpop.f32.mrf.mxu0
        %v4360 = vadd.f32 0.0, %v4359
        %v4361 = vpop.f32.mrf.mxu0
        %4362 = vmatprep.mubr.bf16.mxu0 0
        %4363 = vmatmul.mubr.bf16.gmra.mxu0 %v4314
        %v4364 = vpop.f32.mrf.mxu0
        %v4365 = vadd.f32 0.0, %v4364
        %v4366 = vpop.f32.mrf.mxu0
        %v4367 = vpop.f32.mrf.mxu0
        %v4368 = vadd.f32 0.0, %v4367
        %v4369 = vpop.f32.mrf.mxu0
        %4370 = vmatprep.mubr.bf16.mxu0 0
        %4371 = vmatmul.mubr.bf16.gmra.mxu0 %v4317
        %v4372 = vpop.f32.mrf.mxu0
        %v4373 = vadd.f32 0.0, %v4372
        %v4374 = vpop.f32.mrf.mxu0
        %v4375 = vpop.f32.mrf.mxu0
        %v4376 = vadd.f32 0.0, %v4375
        %v4377 = vpop.f32.mrf.mxu0
        %4378 = vmatprep.mubr.bf16.mxu0 0
        %4379 = vmatmul.mubr.bf16.gmra.mxu0 %v4320
        %v4380 = vpop.f32.mrf.mxu0
        %v4381 = vadd.f32 0.0, %v4380
        %v4382 = vpop.f32.mrf.mxu0
        %v4383 = vpop.f32.mrf.mxu0
        %v4384 = vadd.f32 0.0, %v4383
        %v4385 = vpop.f32.mrf.mxu0
        %4386 = vdwg.mxu0
        %v4387 = vadd.f32 %v4290, %v4357
        %v4388 = vadd.f32 %v4291, %v4360
        %v4389 = vadd.f32 %v4292, %v4365
        %v4390 = vadd.f32 %v4293, %v4368
        %v4391 = vadd.f32 %v4294, %v4373
        %v4392 = vadd.f32 %v4295, %v4376
        %v4393 = vadd.f32 %v4296, %v4381
        %v4394 = vadd.f32 %v4297, %v4384
        %v4395 = vadd.f32 %v4387, %v2222
        %v4396 = vadd.f32 %v4388, %v2222
        %v4397 = vadd.f32 %v4389, %v2222
        %v4398 = vadd.f32 %v4390, %v2222
        %v4399 = vadd.f32 %v4391, %v2222
        %v4400 = vadd.f32 %v4392, %v2222
        %v4401 = vadd.f32 %v4393, %v2222
        %v4402 = vadd.f32 %v4394, %v2222
        %v4403 = vmax.f32 %v4395, 0.0
        %v4404 = vmax.f32 %v4396, 0.0
        %v4405 = vmax.f32 %v4397, 0.0
        %v4406 = vmax.f32 %v4398, 0.0
        %v4407 = vmax.f32 %v4399, 0.0
        %v4408 = vmax.f32 %v4400, 0.0
        %v4409 = vmax.f32 %v4401, 0.0
        %v4410 = vmax.f32 %v4402, 0.0
        %v4411 = vmax.f32 %v3722, %v4403
        %v4412 = vmax.f32 %v3723, %v4404
        %v4413 = vmax.f32 %v3724, %v4405
        %v4414 = vmax.f32 %v3725, %v4406
        %v4415 = vmax.f32 %v3726, %v4407
        %v4416 = vmax.f32 %v3727, %v4408
        %v4417 = vmax.f32 %v3728, %v4409
        %v4418 = vmax.f32 %v3729, %v4410
        %vm4419 = vcmask 125952
        %4420 = vst.msk [vmem:[#allocation2] sm:$0xf] %vm4419, 0
        %vm4421 = vcmask 122880
        %4422 = vst.msk [vmem:[#allocation2 + $0x4] sm:$0x1] %vm4421, 0
        %s4423 = scalar_lea.vmem [#allocation2], 72
        %4424 = vst.msk [vmem:[%s4423] sm:$0xf] %vm4419, 0
        %4425 = vst.msk [vmem:[%s4423 + $0x4] sm:$0x1] %vm4421, 0
        %vm4426 = vcmask 122880
        %vm4427 = vsmask.f32 256
        %vm4428 = vmand %vm4426, %vm4427
        %v4429 = vld [vmem:[#allocation2] sm:$0x1]
        %v4430 = vsel %vm4428, 0, %v4429
        %4431 = vst [vmem:[#allocation2] sm:$0x1] %v4430
        %v4432 = vld [vmem:[#allocation2 + $0x8] sm:$0x1]
        %v4433 = vsel %vm4428, 0, %v4432
        %4434 = vst [vmem:[#allocation2 + $0x8] sm:$0x1] %v4433
        %v4435 = vld [vmem:[#allocation2 + $0x10] sm:$0x1]
        %v4436 = vsel %vm4428, 0, %v4435
        %4437 = vst [vmem:[#allocation2 + $0x10] sm:$0x1] %v4436
        %v4438 = vld [vmem:[#allocation2 + $0x18] sm:$0x1]
        %v4439 = vsel %vm4428, 0, %v4438
        %4440 = vst [vmem:[#allocation2 + $0x18] sm:$0x1] %v4439
        %v4441 = vld [vmem:[#allocation2 + $0x20] sm:$0x1]
        %v4442 = vsel %vm4428, 0, %v4441
        %4443 = vst [vmem:[#allocation2 + $0x20] sm:$0x1] %v4442
        %v4444 = vld [vmem:[#allocation2 + $0x28] sm:$0x1]
        %v4445 = vsel %vm4428, 0, %v4444
        %4446 = vst [vmem:[#allocation2 + $0x28] sm:$0x1] %v4445
        %v4447 = vld [vmem:[#allocation2 + $0x30] sm:$0x1]
        %v4448 = vsel %vm4428, 0, %v4447
        %4449 = vst [vmem:[#allocation2 + $0x30] sm:$0x1] %v4448
        %v4450 = vld [vmem:[#allocation2 + $0x38] sm:$0x1]
        %v4451 = vsel %vm4428, 0, %v4450
        %4452 = vst [vmem:[#allocation2 + $0x38] sm:$0x1] %v4451
        %v4453 = vld [vmem:[#allocation2 + $0x40] sm:$0x1]
        %v4454 = vsel %vm4428, 0, %v4453
        %4455 = vst [vmem:[#allocation2 + $0x40] sm:$0x1] %v4454
        %v4456 = vld [vmem:[#allocation2 + $0x48] sm:$0x1]
        %v4457 = vsel %vm4428, 0, %v4456
        %4458 = vst [vmem:[#allocation2 + $0x48] sm:$0x1] %v4457
        %vm4459 = vsmask.f32 7938
        %vm4460 = vmand %vm4426, %vm4459
        %v4461 = vld [vmem:[#allocation2 + $0x4] sm:$0x1]
        %v4462 = vsel %vm4460, 0, %v4461
        %4463 = vst [vmem:[#allocation2 + $0x4] sm:$0x1] %v4462
        %v4464 = vld [vmem:[#allocation2 + $0xc] sm:$0x1]
        %v4465 = vsel %vm4460, 0, %v4464
        %4466 = vst [vmem:[#allocation2 + $0xc] sm:$0x1] %v4465
        %v4467 = vld [vmem:[#allocation2 + $0x14] sm:$0x1]
        %v4468 = vsel %vm4460, 0, %v4467
        %4469 = vst [vmem:[#allocation2 + $0x14] sm:$0x1] %v4468
        %v4470 = vld [vmem:[#allocation2 + $0x1c] sm:$0x1]
        %v4471 = vsel %vm4460, 0, %v4470
        %4472 = vst [vmem:[#allocation2 + $0x1c] sm:$0x1] %v4471
        %v4473 = vld [vmem:[#allocation2 + $0x24] sm:$0x1]
        %v4474 = vsel %vm4460, 0, %v4473
        %4475 = vst [vmem:[#allocation2 + $0x24] sm:$0x1] %v4474
        %v4476 = vld [vmem:[#allocation2 + $0x2c] sm:$0x1]
        %v4477 = vsel %vm4460, 0, %v4476
        %4478 = vst [vmem:[#allocation2 + $0x2c] sm:$0x1] %v4477
        %v4479 = vld [vmem:[#allocation2 + $0x34] sm:$0x1]
        %v4480 = vsel %vm4460, 0, %v4479
        %4481 = vst [vmem:[#allocation2 + $0x34] sm:$0x1] %v4480
        %v4482 = vld [vmem:[#allocation2 + $0x3c] sm:$0x1]
        %v4483 = vsel %vm4460, 0, %v4482
        %4484 = vst [vmem:[#allocation2 + $0x3c] sm:$0x1] %v4483
        %v4485 = vld [vmem:[#allocation2 + $0x44] sm:$0x1]
        %v4486 = vsel %vm4460, 0, %v4485
        %4487 = vst [vmem:[#allocation2 + $0x44] sm:$0x1] %v4486
        %v4488 = vld [vmem:[#allocation2 + $0x4c] sm:$0x1]
        %v4489 = vsel %vm4460, 0, %v4488
        %4490 = vst [vmem:[#allocation2 + $0x4c] sm:$0x1] %v4489
        %v4491 = vpack.c.bf16 %v4411, %v4411
        %v4492 = vpack.c.bf16 %v4412, %v4412
        %v4493 = vpack.c.bf16 %v4413, %v4413
        %v4494 = vpack.c.bf16 %v4414, %v4414
        %v4495 = vpack.c.bf16 %v4415, %v4415
        %v4496 = vpack.c.bf16 %v4416, %v4416
        %v4497 = vpack.c.bf16 %v4417, %v4417
        %v4498 = vpack.c.bf16 %v4418, %v4418
        %v4507 = vunpack.c.l.b16 %v4491
        %v4508 = vunpack.c.l.b16 %v4492
        %v4509 = vunpack.c.l.b16 %v4493
        %v4510 = vunpack.c.l.b16 %v4494
        %v4511 = vunpack.c.l.b16 %v4495
        %v4512 = vunpack.c.l.b16 %v4496
        %v4513 = vunpack.c.l.b16 %v4497
        %v4514 = vunpack.c.l.b16 %v4498
        %v4515 = vpack.c.b16 %v4507, %v4507
        %v4516 = vpack.c.b16 %v4508, %v4508
        %v4517 = vpack.c.b16 %v4509, %v4509
        %v4518 = vpack.c.b16 %v4510, %v4510
        %v4519 = vpack.c.b16 %v4511, %v4511
        %v4520 = vpack.c.b16 %v4512, %v4512
        %v4521 = vpack.c.b16 %v4513, %v4513
        %v4522 = vpack.c.b16 %v4514, %v4514
        %v4524 = vshrl.u32 %v4515, 16
        %v4526 = vrot.slane %v4524, 7
        %v4527 = vshll.u32 %v4515, 16
        %v4529 = vor.u32 %v4526, %v4527
        %v4530 = vrot.slane %v4526, 4
        %v4532 = vshrl.u32 %v4516, 16
        %v4534 = vrot.slane %v4532, 7
        %v4535 = vshll.u32 %v4516, 16
        %v4537 = vor.u32 %v4534, %v4535
        %v4538 = vrot.slane %v4534, 4
        %v4540 = vshrl.u32 %v4517, 16
        %v4542 = vrot.slane %v4540, 7
        %v4543 = vshll.u32 %v4517, 16
        %v4545 = vor.u32 %v4542, %v4543
        %v4546 = vrot.slane %v4542, 4
        %v4548 = vshrl.u32 %v4518, 16
        %v4550 = vrot.slane %v4548, 7
        %v4551 = vshll.u32 %v4518, 16
        %v4553 = vor.u32 %v4550, %v4551
        %v4554 = vrot.slane %v4550, 4
        %v4556 = vshrl.u32 %v4519, 16
        %v4558 = vrot.slane %v4556, 7
        %v4559 = vshll.u32 %v4519, 16
        %v4561 = vor.u32 %v4558, %v4559
        %v4562 = vrot.slane %v4558, 4
        %v4564 = vshrl.u32 %v4520, 16
        %v4566 = vrot.slane %v4564, 7
        %v4567 = vshll.u32 %v4520, 16
        %v4569 = vor.u32 %v4566, %v4567
        %v4570 = vrot.slane %v4566, 4
        %v4572 = vshrl.u32 %v4521, 16
        %v4574 = vrot.slane %v4572, 7
        %v4575 = vshll.u32 %v4521, 16
        %v4577 = vor.u32 %v4574, %v4575
        %v4578 = vrot.slane %v4574, 4
        %v4580 = vshrl.u32 %v4522, 16
        %v4582 = vrot.slane %v4580, 7
        %v4583 = vshll.u32 %v4522, 16
        %v4585 = vor.u32 %v4582, %v4583
        %v4586 = vrot.slane %v4582, 4
        %s4603 = scalar_lea.vmem [#allocation2], 8
        %vm4604 = vcmask 125952
        %vm4605 = vmand %vm4604, %vm4459
        %v4606 = vld [vmem:[%s4603] sm:$0xf]
        %v4607 = vsel %vm4605, %v4529, %v4606
        %4608 = vst [vmem:[%s4603] sm:$0xf] %v4607
        %v4609 = vld [vmem:[%s4603 + $0x4] sm:$0x1]
        %v4610 = vsel %vm4428, %v4530, %v4609
        %4611 = vst [vmem:[%s4603 + $0x4] sm:$0x1] %v4610
        %v4612 = vld [vmem:[%s4603 + $0x8] sm:$0xf]
        %v4613 = vsel %vm4605, %v4537, %v4612
        %4614 = vst [vmem:[%s4603 + $0x8] sm:$0xf] %v4613
        %v4615 = vld [vmem:[%s4603 + $0xc] sm:$0x1]
        %v4616 = vsel %vm4428, %v4538, %v4615
        %4617 = vst [vmem:[%s4603 + $0xc] sm:$0x1] %v4616
        %v4618 = vld [vmem:[%s4603 + $0x10] sm:$0xf]
        %v4619 = vsel %vm4605, %v4545, %v4618
        %4620 = vst [vmem:[%s4603 + $0x10] sm:$0xf] %v4619
        %v4621 = vld [vmem:[%s4603 + $0x14] sm:$0x1]
        %v4622 = vsel %vm4428, %v4546, %v4621
        %4623 = vst [vmem:[%s4603 + $0x14] sm:$0x1] %v4622
        %v4624 = vld [vmem:[%s4603 + $0x18] sm:$0xf]
        %v4625 = vsel %vm4605, %v4553, %v4624
        %4626 = vst [vmem:[%s4603 + $0x18] sm:$0xf] %v4625
        %v4627 = vld [vmem:[%s4603 + $0x1c] sm:$0x1]
        %v4628 = vsel %vm4428, %v4554, %v4627
        %4629 = vst [vmem:[%s4603 + $0x1c] sm:$0x1] %v4628
        %v4630 = vld [vmem:[%s4603 + $0x20] sm:$0xf]
        %v4631 = vsel %vm4605, %v4561, %v4630
        %4632 = vst [vmem:[%s4603 + $0x20] sm:$0xf] %v4631
        %v4633 = vld [vmem:[%s4603 + $0x24] sm:$0x1]
        %v4634 = vsel %vm4428, %v4562, %v4633
        %4635 = vst [vmem:[%s4603 + $0x24] sm:$0x1] %v4634
        %v4636 = vld [vmem:[%s4603 + $0x28] sm:$0xf]
        %v4637 = vsel %vm4605, %v4569, %v4636
        %4638 = vst [vmem:[%s4603 + $0x28] sm:$0xf] %v4637
        %v4639 = vld [vmem:[%s4603 + $0x2c] sm:$0x1]
        %v4640 = vsel %vm4428, %v4570, %v4639
        %4641 = vst [vmem:[%s4603 + $0x2c] sm:$0x1] %v4640
        %v4642 = vld [vmem:[%s4603 + $0x30] sm:$0xf]
        %v4643 = vsel %vm4605, %v4577, %v4642
        %4644 = vst [vmem:[%s4603 + $0x30] sm:$0xf] %v4643
        %v4645 = vld [vmem:[%s4603 + $0x34] sm:$0x1]
        %v4646 = vsel %vm4428, %v4578, %v4645
        %4647 = vst [vmem:[%s4603 + $0x34] sm:$0x1] %v4646
        %v4648 = vld [vmem:[%s4603 + $0x38] sm:$0xf]
        %v4649 = vsel %vm4605, %v4585, %v4648
        %4650 = vst [vmem:[%s4603 + $0x38] sm:$0xf] %v4649
        %v4651 = vld [vmem:[%s4603 + $0x3c] sm:$0x1]
        %v4652 = vsel %vm4428, %v4586, %v4651
        %4653 = vst [vmem:[%s4603 + $0x3c] sm:$0x1] %v4652
        %v4654 = vld [vmem:[#allocation2] sm:$0xf]
        %v4655 = vld [vmem:[#allocation2 + $0x8] sm:$0xf]
        %v4656 = vld [vmem:[#allocation2 + $0x10] sm:$0xf]
        %v4657 = vld [vmem:[#allocation2 + $0x18] sm:$0xf]
        %v4658 = vld [vmem:[#allocation2 + $0x20] sm:$0xf]
        %v4659 = vld [vmem:[#allocation2 + $0x28] sm:$0xf]
        %v4660 = vld [vmem:[#allocation2 + $0x30] sm:$0xf]
        %v4661 = vld [vmem:[#allocation2 + $0x38] sm:$0xf]
        %v4662 = vld [vmem:[%s3] sm:$0xf]
        %v4663 = vld [vmem:[%s3 + $0x4] sm:$0xf]
        %v4664 = vld [vmem:[#allocation2 + $0x4] sm:$0x1]
        %v4665 = vld [vmem:[#allocation2 + $0xc] sm:$0x1]
        %v4666 = vld [vmem:[#allocation2 + $0x14] sm:$0x1]
        %v4667 = vld [vmem:[#allocation2 + $0x1c] sm:$0x1]
        %v4668 = vld [vmem:[#allocation2 + $0x24] sm:$0x1]
        %v4669 = vld [vmem:[#allocation2 + $0x2c] sm:$0x1]
        %v4670 = vld [vmem:[#allocation2 + $0x34] sm:$0x1]
        %v4671 = vld [vmem:[#allocation2 + $0x3c] sm:$0x1]
        %v4673 = vshrl.u32 %v4654, 16
        %v4675 = vrot.slane %v4673, 4
        %v4676 = vshll.u32 %v4654, 16
        %v4678 = vrot.slane %v4676, 5
        %v4679 = vor.u32 %v4675, %v4678
        %v4680 = vrot.slane %v4679, 4
        %v4682 = vshll.u32 %v4664, 16
        %v4684 = vrot.slane %v4682, 5
        %v4685 = vsel %vm251, %v4680, %v4684
        %v4687 = vshrl.u32 %v4655, 16
        %v4689 = vrot.slane %v4687, 4
        %v4690 = vshll.u32 %v4655, 16
        %v4692 = vrot.slane %v4690, 5
        %v4693 = vor.u32 %v4689, %v4692
        %v4694 = vrot.slane %v4693, 4
        %v4696 = vshll.u32 %v4665, 16
        %v4698 = vrot.slane %v4696, 5
        %v4699 = vsel %vm251, %v4694, %v4698
        %v4701 = vshrl.u32 %v4656, 16
        %v4703 = vrot.slane %v4701, 4
        %v4704 = vshll.u32 %v4656, 16
        %v4706 = vrot.slane %v4704, 5
        %v4707 = vor.u32 %v4703, %v4706
        %v4708 = vrot.slane %v4707, 4
        %v4710 = vshll.u32 %v4666, 16
        %v4712 = vrot.slane %v4710, 5
        %v4713 = vsel %vm251, %v4708, %v4712
        %v4715 = vshrl.u32 %v4657, 16
        %v4717 = vrot.slane %v4715, 4
        %v4718 = vshll.u32 %v4657, 16
        %v4720 = vrot.slane %v4718, 5
        %v4721 = vor.u32 %v4717, %v4720
        %v4722 = vrot.slane %v4721, 4
        %v4724 = vshll.u32 %v4667, 16
        %v4726 = vrot.slane %v4724, 5
        %v4727 = vsel %vm251, %v4722, %v4726
        %v4729 = vshrl.u32 %v4658, 16
        %v4731 = vrot.slane %v4729, 4
        %v4732 = vshll.u32 %v4658, 16
        %v4734 = vrot.slane %v4732, 5
        %v4735 = vor.u32 %v4731, %v4734
        %v4736 = vrot.slane %v4735, 4
        %v4738 = vshll.u32 %v4668, 16
        %v4740 = vrot.slane %v4738, 5
        %v4741 = vsel %vm251, %v4736, %v4740
        %v4743 = vshrl.u32 %v4659, 16
        %v4745 = vrot.slane %v4743, 4
        %v4746 = vshll.u32 %v4659, 16
        %v4748 = vrot.slane %v4746, 5
        %v4749 = vor.u32 %v4745, %v4748
        %v4750 = vrot.slane %v4749, 4
        %v4752 = vshll.u32 %v4669, 16
        %v4754 = vrot.slane %v4752, 5
        %v4755 = vsel %vm251, %v4750, %v4754
        %v4757 = vshrl.u32 %v4660, 16
        %v4759 = vrot.slane %v4757, 4
        %v4760 = vshll.u32 %v4660, 16
        %v4762 = vrot.slane %v4760, 5
        %v4763 = vor.u32 %v4759, %v4762
        %v4764 = vrot.slane %v4763, 4
        %v4766 = vshll.u32 %v4670, 16
        %v4768 = vrot.slane %v4766, 5
        %v4769 = vsel %vm251, %v4764, %v4768
        %v4771 = vshrl.u32 %v4661, 16
        %v4773 = vrot.slane %v4771, 4
        %v4774 = vshll.u32 %v4661, 16
        %v4776 = vrot.slane %v4774, 5
        %v4777 = vor.u32 %v4773, %v4776
        %v4778 = vrot.slane %v4777, 4
        %v4780 = vshll.u32 %v4671, 16
        %v4782 = vrot.slane %v4780, 5
        %v4783 = vsel %vm251, %v4778, %v4782
        %v4784 = vld [vmem:[%s3 + $0x8] sm:$0xf]
        %v4785 = vld [vmem:[%s3 + $0xc] sm:$0xf]
        %v4786 = vunpack.c.l.b16 %v4685
        %v4787 = vunpack.c.l.b16 %v4699
        %v4788 = vunpack.c.l.b16 %v4713
        %v4789 = vunpack.c.l.b16 %v4727
        %v4790 = vunpack.c.l.b16 %v4741
        %v4791 = vunpack.c.l.b16 %v4755
        %v4792 = vunpack.c.l.b16 %v4769
        %v4793 = vunpack.c.l.b16 %v4783
        %v4794 = vpack.c.b16 %v4787, %v4786
        %v4795 = vpack.c.b16 %v4789, %v4788
        %v4796 = vpack.c.b16 %v4791, %v4790
        %v4797 = vpack.c.b16 %v4793, %v4792
        %v4800 = vunpack.c.l.b16 %v4784
        %v4801 = vunpack.c.l.b16 %v4785
        %v4802 = vpack.c.b16 %v4801, %v4800
        %vm4804 = vcmask 130048
        %v4806 = vsel %vm4804, %v4794, 0
        %v4809 = vsel %vm4804, %v4795, 0
        %v4812 = vsel %vm4804, %v4796, 0
        %v4815 = vsel %vm4804, %v4797, 0
        %4817 = vmatprep.subr.bf16.mxu0 0
        %4818 = vmatpush1.bf16.msra.mxu0 0
        %4819 = vmatprep.subr.bf16.mxu0 0
        %4820 = vmatpush1.bf16.msra.mxu0 0
        %4821 = vmatprep.subr.bf16.mxu0 0
        %4822 = vmatpush1.bf16.msra.mxu0 0
        %4823 = vmatprep.subr.bf16.mxu0 0
        %4824 = vmatpush1.bf16.msra.mxu0 0
        %4825 = vmatprep.subr.bf16.mxu0 0
        %4826 = vmatpush1.bf16.msra.mxu0 0
        %4827 = vmatprep.subr.bf16.mxu0 0
        %4828 = vmatpush1.bf16.msra.mxu0 0
        %4829 = vmatprep.subr.bf16.mxu0 0
        %4830 = vmatpush1.bf16.msra.mxu0 0
        %4831 = vmatprep.subr.bf16.mxu0 0
        %4832 = vmatpush1.bf16.msra.mxu0 %v4802
        %4833 = vmatprep.subr.bf16.mxu0 0
        %4834 = vmatpush2.bf16.msra.mxu0 0
        %4835 = vmatprep.subr.bf16.mxu0 0
        %4836 = vmatpush2.bf16.msra.mxu0 0
        %4837 = vmatprep.subr.bf16.mxu0 0
        %4838 = vmatpush2.bf16.msra.mxu0 0
        %4839 = vmatprep.subr.bf16.mxu0 0
        %4840 = vmatpush2.bf16.msra.mxu0 0
        %4841 = vmatprep.subr.bf16.mxu0 0
        %4842 = vmatpush2.bf16.msra.mxu0 0
        %4843 = vmatprep.subr.bf16.mxu0 0
        %4844 = vmatpush2.bf16.msra.mxu0 0
        %4845 = vmatprep.subr.bf16.mxu0 0
        %4846 = vmatpush2.bf16.msra.mxu0 0
        %4847 = vmatprep.subr.bf16.mxu0 0
        %4848 = vmatpush2.bf16.msra.mxu0 0
        %4849 = vmatprep.mubr.bf16.mxu0 0
        %4850 = vmatmul.mubr.bf16.gmra.mxu0 %v4806
        %v4851 = vpop.f32.mrf.mxu0
        %v4852 = vadd.f32 0.0, %v4851
        %v4853 = vpop.f32.mrf.mxu0
        %v4854 = vpop.f32.mrf.mxu0
        %v4855 = vadd.f32 0.0, %v4854
        %v4856 = vpop.f32.mrf.mxu0
        %4857 = vmatprep.mubr.bf16.mxu0 0
        %4858 = vmatmul.mubr.bf16.gmra.mxu0 %v4809
        %v4859 = vpop.f32.mrf.mxu0
        %v4860 = vadd.f32 0.0, %v4859
        %v4861 = vpop.f32.mrf.mxu0
        %v4862 = vpop.f32.mrf.mxu0
        %v4863 = vadd.f32 0.0, %v4862
        %v4864 = vpop.f32.mrf.mxu0
        %4865 = vmatprep.mubr.bf16.mxu0 0
        %4866 = vmatmul.mubr.bf16.gmra.mxu0 %v4812
        %v4867 = vpop.f32.mrf.mxu0
        %v4868 = vadd.f32 0.0, %v4867
        %v4869 = vpop.f32.mrf.mxu0
        %v4870 = vpop.f32.mrf.mxu0
        %v4871 = vadd.f32 0.0, %v4870
        %v4872 = vpop.f32.mrf.mxu0
        %4873 = vmatprep.mubr.bf16.mxu0 0
        %4874 = vmatmul.mubr.bf16.gmra.mxu0 %v4815
        %v4875 = vpop.f32.mrf.mxu0
        %v4876 = vadd.f32 0.0, %v4875
        %v4877 = vpop.f32.mrf.mxu0
        %v4878 = vpop.f32.mrf.mxu0
        %v4879 = vadd.f32 0.0, %v4878
        %v4880 = vpop.f32.mrf.mxu0
        %4881 = vdwg.mxu0
        %v4890 = vunpack.c.l.b16 %v4654
        %v4891 = vunpack.c.l.b16 %v4655
        %v4892 = vunpack.c.l.b16 %v4656
        %v4893 = vunpack.c.l.b16 %v4657
        %v4894 = vunpack.c.l.b16 %v4658
        %v4895 = vunpack.c.l.b16 %v4659
        %v4896 = vunpack.c.l.b16 %v4660
        %v4897 = vunpack.c.l.b16 %v4661
        %v4898 = vpack.c.b16 %v4891, %v4890
        %v4899 = vpack.c.b16 %v4893, %v4892
        %v4900 = vpack.c.b16 %v4895, %v4894
        %v4901 = vpack.c.b16 %v4897, %v4896
        %v4904 = vunpack.c.l.b16 %v4662
        %v4905 = vunpack.c.l.b16 %v4663
        %v4906 = vpack.c.b16 %v4905, %v4904
        %v4909 = vsel %vm4804, %v4898, 0
        %v4912 = vsel %vm4804, %v4899, 0
        %v4915 = vsel %vm4804, %v4900, 0
        %v4918 = vsel %vm4804, %v4901, 0
        %4920 = vmatprep.subr.bf16.mxu0 0
        %4921 = vmatpush1.bf16.msra.mxu0 0
        %4922 = vmatprep.subr.bf16.mxu0 0
        %4923 = vmatpush1.bf16.msra.mxu0 0
        %4924 = vmatprep.subr.bf16.mxu0 0
        %4925 = vmatpush1.bf16.msra.mxu0 0
        %4926 = vmatprep.subr.bf16.mxu0 0
        %4927 = vmatpush1.bf16.msra.mxu0 0
        %4928 = vmatprep.subr.bf16.mxu0 0
        %4929 = vmatpush1.bf16.msra.mxu0 0
        %4930 = vmatprep.subr.bf16.mxu0 0
        %4931 = vmatpush1.bf16.msra.mxu0 0
        %4932 = vmatprep.subr.bf16.mxu0 0
        %4933 = vmatpush1.bf16.msra.mxu0 0
        %4934 = vmatprep.subr.bf16.mxu0 0
        %4935 = vmatpush1.bf16.msra.mxu0 %v4906
        %4936 = vmatprep.subr.bf16.mxu0 0
        %4937 = vmatpush2.bf16.msra.mxu0 0
        %4938 = vmatprep.subr.bf16.mxu0 0
        %4939 = vmatpush2.bf16.msra.mxu0 0
        %4940 = vmatprep.subr.bf16.mxu0 0
        %4941 = vmatpush2.bf16.msra.mxu0 0
        %4942 = vmatprep.subr.bf16.mxu0 0
        %4943 = vmatpush2.bf16.msra.mxu0 0
        %4944 = vmatprep.subr.bf16.mxu0 0
        %4945 = vmatpush2.bf16.msra.mxu0 0
        %4946 = vmatprep.subr.bf16.mxu0 0
        %4947 = vmatpush2.bf16.msra.mxu0 0
        %4948 = vmatprep.subr.bf16.mxu0 0
        %4949 = vmatpush2.bf16.msra.mxu0 0
        %4950 = vmatprep.subr.bf16.mxu0 0
        %4951 = vmatpush2.bf16.msra.mxu0 0
        %4952 = vmatprep.mubr.bf16.mxu0 0
        %4953 = vmatmul.mubr.bf16.gmra.mxu0 %v4909
        %v4954 = vpop.f32.mrf.mxu0
        %v4955 = vadd.f32 %v4852, %v4954
        %v4956 = vpop.f32.mrf.mxu0
        %v4957 = vpop.f32.mrf.mxu0
        %v4958 = vadd.f32 %v4855, %v4957
        %v4959 = vpop.f32.mrf.mxu0
        %4960 = vmatprep.mubr.bf16.mxu0 0
        %4961 = vmatmul.mubr.bf16.gmra.mxu0 %v4912
        %v4962 = vpop.f32.mrf.mxu0
        %v4963 = vadd.f32 %v4860, %v4962
        %v4964 = vpop.f32.mrf.mxu0
        %v4965 = vpop.f32.mrf.mxu0
        %v4966 = vadd.f32 %v4863, %v4965
        %v4967 = vpop.f32.mrf.mxu0
        %4968 = vmatprep.mubr.bf16.mxu0 0
        %4969 = vmatmul.mubr.bf16.gmra.mxu0 %v4915
        %v4970 = vpop.f32.mrf.mxu0
        %v4971 = vadd.f32 %v4868, %v4970
        %v4972 = vpop.f32.mrf.mxu0
        %v4973 = vpop.f32.mrf.mxu0
        %v4974 = vadd.f32 %v4871, %v4973
        %v4975 = vpop.f32.mrf.mxu0
        %4976 = vmatprep.mubr.bf16.mxu0 0
        %4977 = vmatmul.mubr.bf16.gmra.mxu0 %v4918
        %v4978 = vpop.f32.mrf.mxu0
        %v4979 = vadd.f32 %v4876, %v4978
        %v4980 = vpop.f32.mrf.mxu0
        %v4981 = vpop.f32.mrf.mxu0
        %v4982 = vadd.f32 %v4879, %v4981
        %v4983 = vpop.f32.mrf.mxu0
        %4984 = vdwg.mxu0
        %v4985 = vld [vmem:[#allocation2] sm:$0xe]
        %v4986 = vld [vmem:[#allocation2 + $0x8] sm:$0xe]
        %v4987 = vld [vmem:[#allocation2 + $0x10] sm:$0xe]
        %v4988 = vld [vmem:[#allocation2 + $0x18] sm:$0xe]
        %v4989 = vld [vmem:[#allocation2 + $0x20] sm:$0xe]
        %v4990 = vld [vmem:[#allocation2 + $0x28] sm:$0xe]
        %v4991 = vld [vmem:[#allocation2 + $0x30] sm:$0xe]
        %v4992 = vld [vmem:[#allocation2 + $0x38] sm:$0xe]
        %vm5009 = vcmask 1042432
        %vm5010 = vcmask 1046532
        %vm5011 = vmor %vm5009, %vm5010
        %v5012 = vrot.slane %v4985, 5
        %v5013 = vrot.slane %v5012, 4
        %v5014 = vrot.slane %v4664, 5
        %v5015 = vsel %vm5011, %v5013, %v5014
        %v5016 = vrot.slane %v4986, 5
        %v5017 = vrot.slane %v5016, 4
        %v5018 = vrot.slane %v4665, 5
        %v5019 = vsel %vm5011, %v5017, %v5018
        %v5020 = vrot.slane %v4987, 5
        %v5021 = vrot.slane %v5020, 4
        %v5022 = vrot.slane %v4666, 5
        %v5023 = vsel %vm5011, %v5021, %v5022
        %v5024 = vrot.slane %v4988, 5
        %v5025 = vrot.slane %v5024, 4
        %v5026 = vrot.slane %v4667, 5
        %v5027 = vsel %vm5011, %v5025, %v5026
        %v5028 = vrot.slane %v4989, 5
        %v5029 = vrot.slane %v5028, 4
        %v5030 = vrot.slane %v4668, 5
        %v5031 = vsel %vm5011, %v5029, %v5030
        %v5032 = vrot.slane %v4990, 5
        %v5033 = vrot.slane %v5032, 4
        %v5034 = vrot.slane %v4669, 5
        %v5035 = vsel %vm5011, %v5033, %v5034
        %v5036 = vrot.slane %v4991, 5
        %v5037 = vrot.slane %v5036, 4
        %v5038 = vrot.slane %v4670, 5
        %v5039 = vsel %vm5011, %v5037, %v5038
        %v5040 = vrot.slane %v4992, 5
        %v5041 = vrot.slane %v5040, 4
        %v5042 = vrot.slane %v4671, 5
        %v5043 = vsel %vm5011, %v5041, %v5042
        %v5044 = vld [vmem:[%s3 + $0x10] sm:$0xf]
        %v5045 = vld [vmem:[%s3 + $0x14] sm:$0xf]
        %v5046 = vunpack.c.l.b16 %v5015
        %v5047 = vunpack.c.l.b16 %v5019
        %v5048 = vunpack.c.l.b16 %v5023
        %v5049 = vunpack.c.l.b16 %v5027
        %v5050 = vunpack.c.l.b16 %v5031
        %v5051 = vunpack.c.l.b16 %v5035
        %v5052 = vunpack.c.l.b16 %v5039
        %v5053 = vunpack.c.l.b16 %v5043
        %v5054 = vpack.c.b16 %v5047, %v5046
        %v5055 = vpack.c.b16 %v5049, %v5048
        %v5056 = vpack.c.b16 %v5051, %v5050
        %v5057 = vpack.c.b16 %v5053, %v5052
        %v5060 = vunpack.c.l.b16 %v5044
        %v5061 = vunpack.c.l.b16 %v5045
        %v5062 = vpack.c.b16 %v5061, %v5060
        %v5065 = vsel %vm4804, %v5054, 0
        %v5068 = vsel %vm4804, %v5055, 0
        %v5071 = vsel %vm4804, %v5056, 0
        %v5074 = vsel %vm4804, %v5057, 0
        %5076 = vmatprep.subr.bf16.mxu0 0
        %5077 = vmatpush1.bf16.msra.mxu0 0
        %5078 = vmatprep.subr.bf16.mxu0 0
        %5079 = vmatpush1.bf16.msra.mxu0 0
        %5080 = vmatprep.subr.bf16.mxu0 0
        %5081 = vmatpush1.bf16.msra.mxu0 0
        %5082 = vmatprep.subr.bf16.mxu0 0
        %5083 = vmatpush1.bf16.msra.mxu0 0
        %5084 = vmatprep.subr.bf16.mxu0 0
        %5085 = vmatpush1.bf16.msra.mxu0 0
        %5086 = vmatprep.subr.bf16.mxu0 0
        %5087 = vmatpush1.bf16.msra.mxu0 0
        %5088 = vmatprep.subr.bf16.mxu0 0
        %5089 = vmatpush1.bf16.msra.mxu0 0
        %5090 = vmatprep.subr.bf16.mxu0 0
        %5091 = vmatpush1.bf16.msra.mxu0 %v5062
        %5092 = vmatprep.subr.bf16.mxu0 0
        %5093 = vmatpush2.bf16.msra.mxu0 0
        %5094 = vmatprep.subr.bf16.mxu0 0
        %5095 = vmatpush2.bf16.msra.mxu0 0
        %5096 = vmatprep.subr.bf16.mxu0 0
        %5097 = vmatpush2.bf16.msra.mxu0 0
        %5098 = vmatprep.subr.bf16.mxu0 0
        %5099 = vmatpush2.bf16.msra.mxu0 0
        %5100 = vmatprep.subr.bf16.mxu0 0
        %5101 = vmatpush2.bf16.msra.mxu0 0
        %5102 = vmatprep.subr.bf16.mxu0 0
        %5103 = vmatpush2.bf16.msra.mxu0 0
        %5104 = vmatprep.subr.bf16.mxu0 0
        %5105 = vmatpush2.bf16.msra.mxu0 0
        %5106 = vmatprep.subr.bf16.mxu0 0
        %5107 = vmatpush2.bf16.msra.mxu0 0
        %5108 = vmatprep.mubr.bf16.mxu0 0
        %5109 = vmatmul.mubr.bf16.gmra.mxu0 %v5065
        %v5110 = vpop.f32.mrf.mxu0
        %v5111 = vadd.f32 0.0, %v5110
        %v5112 = vpop.f32.mrf.mxu0
        %v5113 = vpop.f32.mrf.mxu0
        %v5114 = vadd.f32 0.0, %v5113
        %v5115 = vpop.f32.mrf.mxu0
        %5116 = vmatprep.mubr.bf16.mxu0 0
        %5117 = vmatmul.mubr.bf16.gmra.mxu0 %v5068
        %v5118 = vpop.f32.mrf.mxu0
        %v5119 = vadd.f32 0.0, %v5118
        %v5120 = vpop.f32.mrf.mxu0
        %v5121 = vpop.f32.mrf.mxu0
        %v5122 = vadd.f32 0.0, %v5121
        %v5123 = vpop.f32.mrf.mxu0
        %5124 = vmatprep.mubr.bf16.mxu0 0
        %5125 = vmatmul.mubr.bf16.gmra.mxu0 %v5071
        %v5126 = vpop.f32.mrf.mxu0
        %v5127 = vadd.f32 0.0, %v5126
        %v5128 = vpop.f32.mrf.mxu0
        %v5129 = vpop.f32.mrf.mxu0
        %v5130 = vadd.f32 0.0, %v5129
        %v5131 = vpop.f32.mrf.mxu0
        %5132 = vmatprep.mubr.bf16.mxu0 0
        %5133 = vmatmul.mubr.bf16.gmra.mxu0 %v5074
        %v5134 = vpop.f32.mrf.mxu0
        %v5135 = vadd.f32 0.0, %v5134
        %v5136 = vpop.f32.mrf.mxu0
        %v5137 = vpop.f32.mrf.mxu0
        %v5138 = vadd.f32 0.0, %v5137
        %v5139 = vpop.f32.mrf.mxu0
        %5140 = vdwg.mxu0
        %v5141 = vadd.f32 %v4955, %v5111
        %v5142 = vadd.f32 %v4958, %v5114
        %v5143 = vadd.f32 %v4963, %v5119
        %v5144 = vadd.f32 %v4966, %v5122
        %v5145 = vadd.f32 %v4971, %v5127
        %v5146 = vadd.f32 %v4974, %v5130
        %v5147 = vadd.f32 %v4979, %v5135
        %v5148 = vadd.f32 %v4982, %v5138
        %v5149 = vld [vmem:[%s4603] sm:$0xf]
        %v5150 = vld [vmem:[%s4603 + $0x8] sm:$0xf]
        %v5151 = vld [vmem:[%s4603 + $0x10] sm:$0xf]
        %v5152 = vld [vmem:[%s4603 + $0x18] sm:$0xf]
        %v5153 = vld [vmem:[%s4603 + $0x20] sm:$0xf]
        %v5154 = vld [vmem:[%s4603 + $0x28] sm:$0xf]
        %v5155 = vld [vmem:[%s4603 + $0x30] sm:$0xf]
        %v5156 = vld [vmem:[%s4603 + $0x38] sm:$0xf]
        %v5157 = vld [vmem:[%s3 + $0x18] sm:$0xf]
        %v5158 = vld [vmem:[%s3 + $0x1c] sm:$0xf]
        %v5167 = vunpack.c.l.b16 %v5149
        %v5168 = vunpack.c.l.b16 %v5150
        %v5169 = vunpack.c.l.b16 %v5151
        %v5170 = vunpack.c.l.b16 %v5152
        %v5171 = vunpack.c.l.b16 %v5153
        %v5172 = vunpack.c.l.b16 %v5154
        %v5173 = vunpack.c.l.b16 %v5155
        %v5174 = vunpack.c.l.b16 %v5156
        %v5175 = vpack.c.b16 %v5168, %v5167
        %v5176 = vpack.c.b16 %v5170, %v5169
        %v5177 = vpack.c.b16 %v5172, %v5171
        %v5178 = vpack.c.b16 %v5174, %v5173
        %v5181 = vunpack.c.l.b16 %v5157
        %v5182 = vunpack.c.l.b16 %v5158
        %v5183 = vpack.c.b16 %v5182, %v5181
        %v5186 = vsel %vm4804, %v5175, 0
        %v5189 = vsel %vm4804, %v5176, 0
        %v5192 = vsel %vm4804, %v5177, 0
        %v5195 = vsel %vm4804, %v5178, 0
        %5197 = vmatprep.subr.bf16.mxu0 0
        %5198 = vmatpush1.bf16.msra.mxu0 0
        %5199 = vmatprep.subr.bf16.mxu0 0
        %5200 = vmatpush1.bf16.msra.mxu0 0
        %5201 = vmatprep.subr.bf16.mxu0 0
        %5202 = vmatpush1.bf16.msra.mxu0 0
        %5203 = vmatprep.subr.bf16.mxu0 0
        %5204 = vmatpush1.bf16.msra.mxu0 0
        %5205 = vmatprep.subr.bf16.mxu0 0
        %5206 = vmatpush1.bf16.msra.mxu0 0
        %5207 = vmatprep.subr.bf16.mxu0 0
        %5208 = vmatpush1.bf16.msra.mxu0 0
        %5209 = vmatprep.subr.bf16.mxu0 0
        %5210 = vmatpush1.bf16.msra.mxu0 0
        %5211 = vmatprep.subr.bf16.mxu0 0
        %5212 = vmatpush1.bf16.msra.mxu0 %v5183
        %5213 = vmatprep.subr.bf16.mxu0 0
        %5214 = vmatpush2.bf16.msra.mxu0 0
        %5215 = vmatprep.subr.bf16.mxu0 0
        %5216 = vmatpush2.bf16.msra.mxu0 0
        %5217 = vmatprep.subr.bf16.mxu0 0
        %5218 = vmatpush2.bf16.msra.mxu0 0
        %5219 = vmatprep.subr.bf16.mxu0 0
        %5220 = vmatpush2.bf16.msra.mxu0 0
        %5221 = vmatprep.subr.bf16.mxu0 0
        %5222 = vmatpush2.bf16.msra.mxu0 0
        %5223 = vmatprep.subr.bf16.mxu0 0
        %5224 = vmatpush2.bf16.msra.mxu0 0
        %5225 = vmatprep.subr.bf16.mxu0 0
        %5226 = vmatpush2.bf16.msra.mxu0 0
        %5227 = vmatprep.subr.bf16.mxu0 0
        %5228 = vmatpush2.bf16.msra.mxu0 0
        %5229 = vmatprep.mubr.bf16.mxu0 0
        %5230 = vmatmul.mubr.bf16.gmra.mxu0 %v5186
        %v5231 = vpop.f32.mrf.mxu0
        %v5232 = vadd.f32 0.0, %v5231
        %v5233 = vpop.f32.mrf.mxu0
        %v5234 = vpop.f32.mrf.mxu0
        %v5235 = vadd.f32 0.0, %v5234
        %v5236 = vpop.f32.mrf.mxu0
        %5237 = vmatprep.mubr.bf16.mxu0 0
        %5238 = vmatmul.mubr.bf16.gmra.mxu0 %v5189
        %v5239 = vpop.f32.mrf.mxu0
        %v5240 = vadd.f32 0.0, %v5239
        %v5241 = vpop.f32.mrf.mxu0
        %v5242 = vpop.f32.mrf.mxu0
        %v5243 = vadd.f32 0.0, %v5242
        %v5244 = vpop.f32.mrf.mxu0
        %5245 = vmatprep.mubr.bf16.mxu0 0
        %5246 = vmatmul.mubr.bf16.gmra.mxu0 %v5192
        %v5247 = vpop.f32.mrf.mxu0
        %v5248 = vadd.f32 0.0, %v5247
        %v5249 = vpop.f32.mrf.mxu0
        %v5250 = vpop.f32.mrf.mxu0
        %v5251 = vadd.f32 0.0, %v5250
        %v5252 = vpop.f32.mrf.mxu0
        %5253 = vmatprep.mubr.bf16.mxu0 0
        %5254 = vmatmul.mubr.bf16.gmra.mxu0 %v5195
        %v5255 = vpop.f32.mrf.mxu0
        %v5256 = vadd.f32 0.0, %v5255
        %v5257 = vpop.f32.mrf.mxu0
        %v5258 = vpop.f32.mrf.mxu0
        %v5259 = vadd.f32 0.0, %v5258
        %v5260 = vpop.f32.mrf.mxu0
        %5261 = vdwg.mxu0
        %v5262 = vadd.f32 %v5141, %v5232
        %v5263 = vadd.f32 %v5142, %v5235
        %v5264 = vadd.f32 %v5143, %v5240
        %v5265 = vadd.f32 %v5144, %v5243
        %v5266 = vadd.f32 %v5145, %v5248
        %v5267 = vadd.f32 %v5146, %v5251
        %v5268 = vadd.f32 %v5147, %v5256
        %v5269 = vadd.f32 %v5148, %v5259
        %v5270 = vld [vmem:[%s4603] sm:$0xf]
        %v5271 = vld [vmem:[%s4603 + $0x4] sm:$0x1]
        %v5272 = vld [vmem:[%s4603 + $0x8] sm:$0xf]
        %v5273 = vld [vmem:[%s4603 + $0xc] sm:$0x1]
        %v5274 = vld [vmem:[%s4603 + $0x10] sm:$0xf]
        %v5275 = vld [vmem:[%s4603 + $0x14] sm:$0x1]
        %v5276 = vld [vmem:[%s4603 + $0x18] sm:$0xf]
        %v5277 = vld [vmem:[%s4603 + $0x1c] sm:$0x1]
        %v5278 = vld [vmem:[%s4603 + $0x20] sm:$0xf]
        %v5279 = vld [vmem:[%s4603 + $0x24] sm:$0x1]
        %v5280 = vld [vmem:[%s4603 + $0x28] sm:$0xf]
        %v5281 = vld [vmem:[%s4603 + $0x2c] sm:$0x1]
        %v5282 = vld [vmem:[%s4603 + $0x30] sm:$0xf]
        %v5283 = vld [vmem:[%s4603 + $0x34] sm:$0x1]
        %v5284 = vld [vmem:[%s4603 + $0x38] sm:$0xf]
        %v5285 = vld [vmem:[%s4603 + $0x3c] sm:$0x1]
        %v5287 = vshrl.u32 %v5270, 16
        %v5289 = vrot.slane %v5287, 4
        %v5290 = vshll.u32 %v5270, 16
        %v5292 = vrot.slane %v5290, 5
        %v5293 = vor.u32 %v5289, %v5292
        %v5294 = vrot.slane %v5293, 4
        %v5296 = vshll.u32 %v5271, 16
        %v5298 = vrot.slane %v5296, 5
        %v5299 = vsel %vm251, %v5294, %v5298
        %v5301 = vshrl.u32 %v5272, 16
        %v5303 = vrot.slane %v5301, 4
        %v5304 = vshll.u32 %v5272, 16
        %v5306 = vrot.slane %v5304, 5
        %v5307 = vor.u32 %v5303, %v5306
        %v5308 = vrot.slane %v5307, 4
        %v5310 = vshll.u32 %v5273, 16
        %v5312 = vrot.slane %v5310, 5
        %v5313 = vsel %vm251, %v5308, %v5312
        %v5315 = vshrl.u32 %v5274, 16
        %v5317 = vrot.slane %v5315, 4
        %v5318 = vshll.u32 %v5274, 16
        %v5320 = vrot.slane %v5318, 5
        %v5321 = vor.u32 %v5317, %v5320
        %v5322 = vrot.slane %v5321, 4
        %v5324 = vshll.u32 %v5275, 16
        %v5326 = vrot.slane %v5324, 5
        %v5327 = vsel %vm251, %v5322, %v5326
        %v5329 = vshrl.u32 %v5276, 16
        %v5331 = vrot.slane %v5329, 4
        %v5332 = vshll.u32 %v5276, 16
        %v5334 = vrot.slane %v5332, 5
        %v5335 = vor.u32 %v5331, %v5334
        %v5336 = vrot.slane %v5335, 4
        %v5338 = vshll.u32 %v5277, 16
        %v5340 = vrot.slane %v5338, 5
        %v5341 = vsel %vm251, %v5336, %v5340
        %v5343 = vshrl.u32 %v5278, 16
        %v5345 = vrot.slane %v5343, 4
        %v5346 = vshll.u32 %v5278, 16
        %v5348 = vrot.slane %v5346, 5
        %v5349 = vor.u32 %v5345, %v5348
        %v5350 = vrot.slane %v5349, 4
        %v5352 = vshll.u32 %v5279, 16
        %v5354 = vrot.slane %v5352, 5
        %v5355 = vsel %vm251, %v5350, %v5354
        %v5357 = vshrl.u32 %v5280, 16
        %v5359 = vrot.slane %v5357, 4
        %v5360 = vshll.u32 %v5280, 16
        %v5362 = vrot.slane %v5360, 5
        %v5363 = vor.u32 %v5359, %v5362
        %v5364 = vrot.slane %v5363, 4
        %v5366 = vshll.u32 %v5281, 16
        %v5368 = vrot.slane %v5366, 5
        %v5369 = vsel %vm251, %v5364, %v5368
        %v5371 = vshrl.u32 %v5282, 16
        %v5373 = vrot.slane %v5371, 4
        %v5374 = vshll.u32 %v5282, 16
        %v5376 = vrot.slane %v5374, 5
        %v5377 = vor.u32 %v5373, %v5376
        %v5378 = vrot.slane %v5377, 4
        %v5380 = vshll.u32 %v5283, 16
        %v5382 = vrot.slane %v5380, 5
        %v5383 = vsel %vm251, %v5378, %v5382
        %v5385 = vshrl.u32 %v5284, 16
        %v5387 = vrot.slane %v5385, 4
        %v5388 = vshll.u32 %v5284, 16
        %v5390 = vrot.slane %v5388, 5
        %v5391 = vor.u32 %v5387, %v5390
        %v5392 = vrot.slane %v5391, 4
        %v5394 = vshll.u32 %v5285, 16
        %v5396 = vrot.slane %v5394, 5
        %v5397 = vsel %vm251, %v5392, %v5396
        %v5398 = vld [vmem:[%s3 + $0x20] sm:$0xf]
        %v5399 = vld [vmem:[%s3 + $0x24] sm:$0xf]
        %v5400 = vunpack.c.l.b16 %v5299
        %v5401 = vunpack.c.l.b16 %v5313
        %v5402 = vunpack.c.l.b16 %v5327
        %v5403 = vunpack.c.l.b16 %v5341
        %v5404 = vunpack.c.l.b16 %v5355
        %v5405 = vunpack.c.l.b16 %v5369
        %v5406 = vunpack.c.l.b16 %v5383
        %v5407 = vunpack.c.l.b16 %v5397
        %v5408 = vpack.c.b16 %v5401, %v5400
        %v5409 = vpack.c.b16 %v5403, %v5402
        %v5410 = vpack.c.b16 %v5405, %v5404
        %v5411 = vpack.c.b16 %v5407, %v5406
        %v5414 = vunpack.c.l.b16 %v5398
        %v5415 = vunpack.c.l.b16 %v5399
        %v5416 = vpack.c.b16 %v5415, %v5414
        %v5419 = vsel %vm4804, %v5408, 0
        %v5422 = vsel %vm4804, %v5409, 0
        %v5425 = vsel %vm4804, %v5410, 0
        %v5428 = vsel %vm4804, %v5411, 0
        %5430 = vmatprep.subr.bf16.mxu0 0
        %5431 = vmatpush1.bf16.msra.mxu0 0
        %5432 = vmatprep.subr.bf16.mxu0 0
        %5433 = vmatpush1.bf16.msra.mxu0 0
        %5434 = vmatprep.subr.bf16.mxu0 0
        %5435 = vmatpush1.bf16.msra.mxu0 0
        %5436 = vmatprep.subr.bf16.mxu0 0
        %5437 = vmatpush1.bf16.msra.mxu0 0
        %5438 = vmatprep.subr.bf16.mxu0 0
        %5439 = vmatpush1.bf16.msra.mxu0 0
        %5440 = vmatprep.subr.bf16.mxu0 0
        %5441 = vmatpush1.bf16.msra.mxu0 0
        %5442 = vmatprep.subr.bf16.mxu0 0
        %5443 = vmatpush1.bf16.msra.mxu0 0
        %5444 = vmatprep.subr.bf16.mxu0 0
        %5445 = vmatpush1.bf16.msra.mxu0 %v5416
        %5446 = vmatprep.subr.bf16.mxu0 0
        %5447 = vmatpush2.bf16.msra.mxu0 0
        %5448 = vmatprep.subr.bf16.mxu0 0
        %5449 = vmatpush2.bf16.msra.mxu0 0
        %5450 = vmatprep.subr.bf16.mxu0 0
        %5451 = vmatpush2.bf16.msra.mxu0 0
        %5452 = vmatprep.subr.bf16.mxu0 0
        %5453 = vmatpush2.bf16.msra.mxu0 0
        %5454 = vmatprep.subr.bf16.mxu0 0
        %5455 = vmatpush2.bf16.msra.mxu0 0
        %5456 = vmatprep.subr.bf16.mxu0 0
        %5457 = vmatpush2.bf16.msra.mxu0 0
        %5458 = vmatprep.subr.bf16.mxu0 0
        %5459 = vmatpush2.bf16.msra.mxu0 0
        %5460 = vmatprep.subr.bf16.mxu0 0
        %5461 = vmatpush2.bf16.msra.mxu0 0
        %5462 = vmatprep.mubr.bf16.mxu0 0
        %5463 = vmatmul.mubr.bf16.gmra.mxu0 %v5419
        %v5464 = vpop.f32.mrf.mxu0
        %v5465 = vadd.f32 0.0, %v5464
        %v5466 = vpop.f32.mrf.mxu0
        %v5467 = vpop.f32.mrf.mxu0
        %v5468 = vadd.f32 0.0, %v5467
        %v5469 = vpop.f32.mrf.mxu0
        %5470 = vmatprep.mubr.bf16.mxu0 0
        %5471 = vmatmul.mubr.bf16.gmra.mxu0 %v5422
        %v5472 = vpop.f32.mrf.mxu0
        %v5473 = vadd.f32 0.0, %v5472
        %v5474 = vpop.f32.mrf.mxu0
        %v5475 = vpop.f32.mrf.mxu0
        %v5476 = vadd.f32 0.0, %v5475
        %v5477 = vpop.f32.mrf.mxu0
        %5478 = vmatprep.mubr.bf16.mxu0 0
        %5479 = vmatmul.mubr.bf16.gmra.mxu0 %v5425
        %v5480 = vpop.f32.mrf.mxu0
        %v5481 = vadd.f32 0.0, %v5480
        %v5482 = vpop.f32.mrf.mxu0
        %v5483 = vpop.f32.mrf.mxu0
        %v5484 = vadd.f32 0.0, %v5483
        %v5485 = vpop.f32.mrf.mxu0
        %5486 = vmatprep.mubr.bf16.mxu0 0
        %5487 = vmatmul.mubr.bf16.gmra.mxu0 %v5428
        %v5488 = vpop.f32.mrf.mxu0
        %v5489 = vadd.f32 0.0, %v5488
        %v5490 = vpop.f32.mrf.mxu0
        %v5491 = vpop.f32.mrf.mxu0
        %v5492 = vadd.f32 0.0, %v5491
        %v5493 = vpop.f32.mrf.mxu0
        %5494 = vdwg.mxu0
        %v5495 = vadd.f32 %v5262, %v5465
        %v5496 = vadd.f32 %v5263, %v5468
        %v5497 = vadd.f32 %v5264, %v5473
        %v5498 = vadd.f32 %v5265, %v5476
        %v5499 = vadd.f32 %v5266, %v5481
        %v5500 = vadd.f32 %v5267, %v5484
        %v5501 = vadd.f32 %v5268, %v5489
        %v5502 = vadd.f32 %v5269, %v5492
        %v5503 = vld [vmem:[%s4603] sm:$0xe]
        %v5504 = vld [vmem:[%s4603 + $0x8] sm:$0xe]
        %v5505 = vld [vmem:[%s4603 + $0x10] sm:$0xe]
        %v5506 = vld [vmem:[%s4603 + $0x18] sm:$0xe]
        %v5507 = vld [vmem:[%s4603 + $0x20] sm:$0xe]
        %v5508 = vld [vmem:[%s4603 + $0x28] sm:$0xe]
        %v5509 = vld [vmem:[%s4603 + $0x30] sm:$0xe]
        %v5510 = vld [vmem:[%s4603 + $0x38] sm:$0xe]
        %v5527 = vrot.slane %v5503, 5
        %v5528 = vrot.slane %v5527, 4
        %v5529 = vrot.slane %v5271, 5
        %v5530 = vsel %vm5011, %v5528, %v5529
        %v5531 = vrot.slane %v5504, 5
        %v5532 = vrot.slane %v5531, 4
        %v5533 = vrot.slane %v5273, 5
        %v5534 = vsel %vm5011, %v5532, %v5533
        %v5535 = vrot.slane %v5505, 5
        %v5536 = vrot.slane %v5535, 4
        %v5537 = vrot.slane %v5275, 5
        %v5538 = vsel %vm5011, %v5536, %v5537
        %v5539 = vrot.slane %v5506, 5
        %v5540 = vrot.slane %v5539, 4
        %v5541 = vrot.slane %v5277, 5
        %v5542 = vsel %vm5011, %v5540, %v5541
        %v5543 = vrot.slane %v5507, 5
        %v5544 = vrot.slane %v5543, 4
        %v5545 = vrot.slane %v5279, 5
        %v5546 = vsel %vm5011, %v5544, %v5545
        %v5547 = vrot.slane %v5508, 5
        %v5548 = vrot.slane %v5547, 4
        %v5549 = vrot.slane %v5281, 5
        %v5550 = vsel %vm5011, %v5548, %v5549
        %v5551 = vrot.slane %v5509, 5
        %v5552 = vrot.slane %v5551, 4
        %v5553 = vrot.slane %v5283, 5
        %v5554 = vsel %vm5011, %v5552, %v5553
        %v5555 = vrot.slane %v5510, 5
        %v5556 = vrot.slane %v5555, 4
        %v5557 = vrot.slane %v5285, 5
        %v5558 = vsel %vm5011, %v5556, %v5557
        %v5559 = vld [vmem:[%s3 + $0x28] sm:$0xf]
        %v5560 = vld [vmem:[%s3 + $0x2c] sm:$0xf]
        %v5561 = vunpack.c.l.b16 %v5530
        %v5562 = vunpack.c.l.b16 %v5534
        %v5563 = vunpack.c.l.b16 %v5538
        %v5564 = vunpack.c.l.b16 %v5542
        %v5565 = vunpack.c.l.b16 %v5546
        %v5566 = vunpack.c.l.b16 %v5550
        %v5567 = vunpack.c.l.b16 %v5554
        %v5568 = vunpack.c.l.b16 %v5558
        %v5569 = vpack.c.b16 %v5562, %v5561
        %v5570 = vpack.c.b16 %v5564, %v5563
        %v5571 = vpack.c.b16 %v5566, %v5565
        %v5572 = vpack.c.b16 %v5568, %v5567
        %v5575 = vunpack.c.l.b16 %v5559
        %v5576 = vunpack.c.l.b16 %v5560
        %v5577 = vpack.c.b16 %v5576, %v5575
        %v5580 = vsel %vm4804, %v5569, 0
        %v5583 = vsel %vm4804, %v5570, 0
        %v5586 = vsel %vm4804, %v5571, 0
        %v5589 = vsel %vm4804, %v5572, 0
        %5591 = vmatprep.subr.bf16.mxu0 0
        %5592 = vmatpush1.bf16.msra.mxu0 0
        %5593 = vmatprep.subr.bf16.mxu0 0
        %5594 = vmatpush1.bf16.msra.mxu0 0
        %5595 = vmatprep.subr.bf16.mxu0 0
        %5596 = vmatpush1.bf16.msra.mxu0 0
        %5597 = vmatprep.subr.bf16.mxu0 0
        %5598 = vmatpush1.bf16.msra.mxu0 0
        %5599 = vmatprep.subr.bf16.mxu0 0
        %5600 = vmatpush1.bf16.msra.mxu0 0
        %5601 = vmatprep.subr.bf16.mxu0 0
        %5602 = vmatpush1.bf16.msra.mxu0 0
        %5603 = vmatprep.subr.bf16.mxu0 0
        %5604 = vmatpush1.bf16.msra.mxu0 0
        %5605 = vmatprep.subr.bf16.mxu0 0
        %5606 = vmatpush1.bf16.msra.mxu0 %v5577
        %5607 = vmatprep.subr.bf16.mxu0 0
        %5608 = vmatpush2.bf16.msra.mxu0 0
        %5609 = vmatprep.subr.bf16.mxu0 0
        %5610 = vmatpush2.bf16.msra.mxu0 0
        %5611 = vmatprep.subr.bf16.mxu0 0
        %5612 = vmatpush2.bf16.msra.mxu0 0
        %5613 = vmatprep.subr.bf16.mxu0 0
        %5614 = vmatpush2.bf16.msra.mxu0 0
        %5615 = vmatprep.subr.bf16.mxu0 0
        %5616 = vmatpush2.bf16.msra.mxu0 0
        %5617 = vmatprep.subr.bf16.mxu0 0
        %5618 = vmatpush2.bf16.msra.mxu0 0
        %5619 = vmatprep.subr.bf16.mxu0 0
        %5620 = vmatpush2.bf16.msra.mxu0 0
        %5621 = vmatprep.subr.bf16.mxu0 0
        %5622 = vmatpush2.bf16.msra.mxu0 0
        %5623 = vmatprep.mubr.bf16.mxu0 0
        %5624 = vmatmul.mubr.bf16.gmra.mxu0 %v5580
        %v5625 = vpop.f32.mrf.mxu0
        %v5626 = vadd.f32 0.0, %v5625
        %v5627 = vpop.f32.mrf.mxu0
        %v5628 = vpop.f32.mrf.mxu0
        %v5629 = vadd.f32 0.0, %v5628
        %v5630 = vpop.f32.mrf.mxu0
        %5631 = vmatprep.mubr.bf16.mxu0 0
        %5632 = vmatmul.mubr.bf16.gmra.mxu0 %v5583
        %v5633 = vpop.f32.mrf.mxu0
        %v5634 = vadd.f32 0.0, %v5633
        %v5635 = vpop.f32.mrf.mxu0
        %v5636 = vpop.f32.mrf.mxu0
        %v5637 = vadd.f32 0.0, %v5636
        %v5638 = vpop.f32.mrf.mxu0
        %5639 = vmatprep.mubr.bf16.mxu0 0
        %5640 = vmatmul.mubr.bf16.gmra.mxu0 %v5586
        %v5641 = vpop.f32.mrf.mxu0
        %v5642 = vadd.f32 0.0, %v5641
        %v5643 = vpop.f32.mrf.mxu0
        %v5644 = vpop.f32.mrf.mxu0
        %v5645 = vadd.f32 0.0, %v5644
        %v5646 = vpop.f32.mrf.mxu0
        %5647 = vmatprep.mubr.bf16.mxu0 0
        %5648 = vmatmul.mubr.bf16.gmra.mxu0 %v5589
        %v5649 = vpop.f32.mrf.mxu0
        %v5650 = vadd.f32 0.0, %v5649
        %v5651 = vpop.f32.mrf.mxu0
        %v5652 = vpop.f32.mrf.mxu0
        %v5653 = vadd.f32 0.0, %v5652
        %v5654 = vpop.f32.mrf.mxu0
        %5655 = vdwg.mxu0
        %v5656 = vadd.f32 %v5495, %v5626
        %v5657 = vadd.f32 %v5496, %v5629
        %v5658 = vadd.f32 %v5497, %v5634
        %v5659 = vadd.f32 %v5498, %v5637
        %v5660 = vadd.f32 %v5499, %v5642
        %v5661 = vadd.f32 %v5500, %v5645
        %v5662 = vadd.f32 %v5501, %v5650
        %v5663 = vadd.f32 %v5502, %v5653
        %s5664 = scalar_lea.vmem [#allocation2], 16
        %v5665 = vld [vmem:[%s5664] sm:$0xf]
        %v5666 = vld [vmem:[%s5664 + $0x8] sm:$0xf]
        %v5667 = vld [vmem:[%s5664 + $0x10] sm:$0xf]
        %v5668 = vld [vmem:[%s5664 + $0x18] sm:$0xf]
        %v5669 = vld [vmem:[%s5664 + $0x20] sm:$0xf]
        %v5670 = vld [vmem:[%s5664 + $0x28] sm:$0xf]
        %v5671 = vld [vmem:[%s5664 + $0x30] sm:$0xf]
        %v5672 = vld [vmem:[%s5664 + $0x38] sm:$0xf]
        %v5673 = vld [vmem:[%s3 + $0x30] sm:$0xf]
        %v5674 = vld [vmem:[%s3 + $0x34] sm:$0xf]
        %v5683 = vunpack.c.l.b16 %v5665
        %v5684 = vunpack.c.l.b16 %v5666
        %v5685 = vunpack.c.l.b16 %v5667
        %v5686 = vunpack.c.l.b16 %v5668
        %v5687 = vunpack.c.l.b16 %v5669
        %v5688 = vunpack.c.l.b16 %v5670
        %v5689 = vunpack.c.l.b16 %v5671
        %v5690 = vunpack.c.l.b16 %v5672
        %v5691 = vpack.c.b16 %v5684, %v5683
        %v5692 = vpack.c.b16 %v5686, %v5685
        %v5693 = vpack.c.b16 %v5688, %v5687
        %v5694 = vpack.c.b16 %v5690, %v5689
        %v5697 = vunpack.c.l.b16 %v5673
        %v5698 = vunpack.c.l.b16 %v5674
        %v5699 = vpack.c.b16 %v5698, %v5697
        %v5702 = vsel %vm4804, %v5691, 0
        %v5705 = vsel %vm4804, %v5692, 0
        %v5708 = vsel %vm4804, %v5693, 0
        %v5711 = vsel %vm4804, %v5694, 0
        %5713 = vmatprep.subr.bf16.mxu0 0
        %5714 = vmatpush1.bf16.msra.mxu0 0
        %5715 = vmatprep.subr.bf16.mxu0 0
        %5716 = vmatpush1.bf16.msra.mxu0 0
        %5717 = vmatprep.subr.bf16.mxu0 0
        %5718 = vmatpush1.bf16.msra.mxu0 0
        %5719 = vmatprep.subr.bf16.mxu0 0
        %5720 = vmatpush1.bf16.msra.mxu0 0
        %5721 = vmatprep.subr.bf16.mxu0 0
        %5722 = vmatpush1.bf16.msra.mxu0 0
        %5723 = vmatprep.subr.bf16.mxu0 0
        %5724 = vmatpush1.bf16.msra.mxu0 0
        %5725 = vmatprep.subr.bf16.mxu0 0
        %5726 = vmatpush1.bf16.msra.mxu0 0
        %5727 = vmatprep.subr.bf16.mxu0 0
        %5728 = vmatpush1.bf16.msra.mxu0 %v5699
        %5729 = vmatprep.subr.bf16.mxu0 0
        %5730 = vmatpush2.bf16.msra.mxu0 0
        %5731 = vmatprep.subr.bf16.mxu0 0
        %5732 = vmatpush2.bf16.msra.mxu0 0
        %5733 = vmatprep.subr.bf16.mxu0 0
        %5734 = vmatpush2.bf16.msra.mxu0 0
        %5735 = vmatprep.subr.bf16.mxu0 0
        %5736 = vmatpush2.bf16.msra.mxu0 0
        %5737 = vmatprep.subr.bf16.mxu0 0
        %5738 = vmatpush2.bf16.msra.mxu0 0
        %5739 = vmatprep.subr.bf16.mxu0 0
        %5740 = vmatpush2.bf16.msra.mxu0 0
        %5741 = vmatprep.subr.bf16.mxu0 0
        %5742 = vmatpush2.bf16.msra.mxu0 0
        %5743 = vmatprep.subr.bf16.mxu0 0
        %5744 = vmatpush2.bf16.msra.mxu0 0
        %5745 = vmatprep.mubr.bf16.mxu0 0
        %5746 = vmatmul.mubr.bf16.gmra.mxu0 %v5702
        %v5747 = vpop.f32.mrf.mxu0
        %v5748 = vadd.f32 0.0, %v5747
        %v5749 = vpop.f32.mrf.mxu0
        %v5750 = vpop.f32.mrf.mxu0
        %v5751 = vadd.f32 0.0, %v5750
        %v5752 = vpop.f32.mrf.mxu0
        %5753 = vmatprep.mubr.bf16.mxu0 0
        %5754 = vmatmul.mubr.bf16.gmra.mxu0 %v5705
        %v5755 = vpop.f32.mrf.mxu0
        %v5756 = vadd.f32 0.0, %v5755
        %v5757 = vpop.f32.mrf.mxu0
        %v5758 = vpop.f32.mrf.mxu0
        %v5759 = vadd.f32 0.0, %v5758
        %v5760 = vpop.f32.mrf.mxu0
        %5761 = vmatprep.mubr.bf16.mxu0 0
        %5762 = vmatmul.mubr.bf16.gmra.mxu0 %v5708
        %v5763 = vpop.f32.mrf.mxu0
        %v5764 = vadd.f32 0.0, %v5763
        %v5765 = vpop.f32.mrf.mxu0
        %v5766 = vpop.f32.mrf.mxu0
        %v5767 = vadd.f32 0.0, %v5766
        %v5768 = vpop.f32.mrf.mxu0
        %5769 = vmatprep.mubr.bf16.mxu0 0
        %5770 = vmatmul.mubr.bf16.gmra.mxu0 %v5711
        %v5771 = vpop.f32.mrf.mxu0
        %v5772 = vadd.f32 0.0, %v5771
        %v5773 = vpop.f32.mrf.mxu0
        %v5774 = vpop.f32.mrf.mxu0
        %v5775 = vadd.f32 0.0, %v5774
        %v5776 = vpop.f32.mrf.mxu0
        %5777 = vdwg.mxu0
        %v5778 = vadd.f32 %v5656, %v5748
        %v5779 = vadd.f32 %v5657, %v5751
        %v5780 = vadd.f32 %v5658, %v5756
        %v5781 = vadd.f32 %v5659, %v5759
        %v5782 = vadd.f32 %v5660, %v5764
        %v5783 = vadd.f32 %v5661, %v5767
        %v5784 = vadd.f32 %v5662, %v5772
        %v5785 = vadd.f32 %v5663, %v5775
        %v5786 = vld [vmem:[%s5664] sm:$0xf]
        %v5787 = vld [vmem:[%s5664 + $0x4] sm:$0x1]
        %v5788 = vld [vmem:[%s5664 + $0x8] sm:$0xf]
        %v5789 = vld [vmem:[%s5664 + $0xc] sm:$0x1]
        %v5790 = vld [vmem:[%s5664 + $0x10] sm:$0xf]
        %v5791 = vld [vmem:[%s5664 + $0x14] sm:$0x1]
        %v5792 = vld [vmem:[%s5664 + $0x18] sm:$0xf]
        %v5793 = vld [vmem:[%s5664 + $0x1c] sm:$0x1]
        %v5794 = vld [vmem:[%s5664 + $0x20] sm:$0xf]
        %v5795 = vld [vmem:[%s5664 + $0x24] sm:$0x1]
        %v5796 = vld [vmem:[%s5664 + $0x28] sm:$0xf]
        %v5797 = vld [vmem:[%s5664 + $0x2c] sm:$0x1]
        %v5798 = vld [vmem:[%s5664 + $0x30] sm:$0xf]
        %v5799 = vld [vmem:[%s5664 + $0x34] sm:$0x1]
        %v5800 = vld [vmem:[%s5664 + $0x38] sm:$0xf]
        %v5801 = vld [vmem:[%s5664 + $0x3c] sm:$0x1]
        %v5803 = vshrl.u32 %v5786, 16
        %v5805 = vrot.slane %v5803, 4
        %v5806 = vshll.u32 %v5786, 16
        %v5808 = vrot.slane %v5806, 5
        %v5809 = vor.u32 %v5805, %v5808
        %v5810 = vrot.slane %v5809, 4
        %v5812 = vshll.u32 %v5787, 16
        %v5814 = vrot.slane %v5812, 5
        %v5815 = vsel %vm251, %v5810, %v5814
        %v5817 = vshrl.u32 %v5788, 16
        %v5819 = vrot.slane %v5817, 4
        %v5820 = vshll.u32 %v5788, 16
        %v5822 = vrot.slane %v5820, 5
        %v5823 = vor.u32 %v5819, %v5822
        %v5824 = vrot.slane %v5823, 4
        %v5826 = vshll.u32 %v5789, 16
        %v5828 = vrot.slane %v5826, 5
        %v5829 = vsel %vm251, %v5824, %v5828
        %v5831 = vshrl.u32 %v5790, 16
        %v5833 = vrot.slane %v5831, 4
        %v5834 = vshll.u32 %v5790, 16
        %v5836 = vrot.slane %v5834, 5
        %v5837 = vor.u32 %v5833, %v5836
        %v5838 = vrot.slane %v5837, 4
        %v5840 = vshll.u32 %v5791, 16
        %v5842 = vrot.slane %v5840, 5
        %v5843 = vsel %vm251, %v5838, %v5842
        %v5845 = vshrl.u32 %v5792, 16
        %v5847 = vrot.slane %v5845, 4
        %v5848 = vshll.u32 %v5792, 16
        %v5850 = vrot.slane %v5848, 5
        %v5851 = vor.u32 %v5847, %v5850
        %v5852 = vrot.slane %v5851, 4
        %v5854 = vshll.u32 %v5793, 16
        %v5856 = vrot.slane %v5854, 5
        %v5857 = vsel %vm251, %v5852, %v5856
        %v5859 = vshrl.u32 %v5794, 16
        %v5861 = vrot.slane %v5859, 4
        %v5862 = vshll.u32 %v5794, 16
        %v5864 = vrot.slane %v5862, 5
        %v5865 = vor.u32 %v5861, %v5864
        %v5866 = vrot.slane %v5865, 4
        %v5868 = vshll.u32 %v5795, 16
        %v5870 = vrot.slane %v5868, 5
        %v5871 = vsel %vm251, %v5866, %v5870
        %v5873 = vshrl.u32 %v5796, 16
        %v5875 = vrot.slane %v5873, 4
        %v5876 = vshll.u32 %v5796, 16
        %v5878 = vrot.slane %v5876, 5
        %v5879 = vor.u32 %v5875, %v5878
        %v5880 = vrot.slane %v5879, 4
        %v5882 = vshll.u32 %v5797, 16
        %v5884 = vrot.slane %v5882, 5
        %v5885 = vsel %vm251, %v5880, %v5884
        %v5887 = vshrl.u32 %v5798, 16
        %v5889 = vrot.slane %v5887, 4
        %v5890 = vshll.u32 %v5798, 16
        %v5892 = vrot.slane %v5890, 5
        %v5893 = vor.u32 %v5889, %v5892
        %v5894 = vrot.slane %v5893, 4
        %v5896 = vshll.u32 %v5799, 16
        %v5898 = vrot.slane %v5896, 5
        %v5899 = vsel %vm251, %v5894, %v5898
        %v5901 = vshrl.u32 %v5800, 16
        %v5903 = vrot.slane %v5901, 4
        %v5904 = vshll.u32 %v5800, 16
        %v5906 = vrot.slane %v5904, 5
        %v5907 = vor.u32 %v5903, %v5906
        %v5908 = vrot.slane %v5907, 4
        %v5910 = vshll.u32 %v5801, 16
        %v5912 = vrot.slane %v5910, 5
        %v5913 = vsel %vm251, %v5908, %v5912
        %v5914 = vld [vmem:[%s3 + $0x38] sm:$0xf]
        %v5915 = vld [vmem:[%s3 + $0x3c] sm:$0xf]
        %v5916 = vunpack.c.l.b16 %v5815
        %v5917 = vunpack.c.l.b16 %v5829
        %v5918 = vunpack.c.l.b16 %v5843
        %v5919 = vunpack.c.l.b16 %v5857
        %v5920 = vunpack.c.l.b16 %v5871
        %v5921 = vunpack.c.l.b16 %v5885
        %v5922 = vunpack.c.l.b16 %v5899
        %v5923 = vunpack.c.l.b16 %v5913
        %v5924 = vpack.c.b16 %v5917, %v5916
        %v5925 = vpack.c.b16 %v5919, %v5918
        %v5926 = vpack.c.b16 %v5921, %v5920
        %v5927 = vpack.c.b16 %v5923, %v5922
        %v5930 = vunpack.c.l.b16 %v5914
        %v5931 = vunpack.c.l.b16 %v5915
        %v5932 = vpack.c.b16 %v5931, %v5930
        %v5935 = vsel %vm4804, %v5924, 0
        %v5938 = vsel %vm4804, %v5925, 0
        %v5941 = vsel %vm4804, %v5926, 0
        %v5944 = vsel %vm4804, %v5927, 0
        %5946 = vmatprep.subr.bf16.mxu0 0
        %5947 = vmatpush1.bf16.msra.mxu0 0
        %5948 = vmatprep.subr.bf16.mxu0 0
        %5949 = vmatpush1.bf16.msra.mxu0 0
        %5950 = vmatprep.subr.bf16.mxu0 0
        %5951 = vmatpush1.bf16.msra.mxu0 0
        %5952 = vmatprep.subr.bf16.mxu0 0
        %5953 = vmatpush1.bf16.msra.mxu0 0
        %5954 = vmatprep.subr.bf16.mxu0 0
        %5955 = vmatpush1.bf16.msra.mxu0 0
        %5956 = vmatprep.subr.bf16.mxu0 0
        %5957 = vmatpush1.bf16.msra.mxu0 0
        %5958 = vmatprep.subr.bf16.mxu0 0
        %5959 = vmatpush1.bf16.msra.mxu0 0
        %5960 = vmatprep.subr.bf16.mxu0 0
        %5961 = vmatpush1.bf16.msra.mxu0 %v5932
        %5962 = vmatprep.subr.bf16.mxu0 0
        %5963 = vmatpush2.bf16.msra.mxu0 0
        %5964 = vmatprep.subr.bf16.mxu0 0
        %5965 = vmatpush2.bf16.msra.mxu0 0
        %5966 = vmatprep.subr.bf16.mxu0 0
        %5967 = vmatpush2.bf16.msra.mxu0 0
        %5968 = vmatprep.subr.bf16.mxu0 0
        %5969 = vmatpush2.bf16.msra.mxu0 0
        %5970 = vmatprep.subr.bf16.mxu0 0
        %5971 = vmatpush2.bf16.msra.mxu0 0
        %5972 = vmatprep.subr.bf16.mxu0 0
        %5973 = vmatpush2.bf16.msra.mxu0 0
        %5974 = vmatprep.subr.bf16.mxu0 0
        %5975 = vmatpush2.bf16.msra.mxu0 0
        %5976 = vmatprep.subr.bf16.mxu0 0
        %5977 = vmatpush2.bf16.msra.mxu0 0
        %5978 = vmatprep.mubr.bf16.mxu0 0
        %5979 = vmatmul.mubr.bf16.gmra.mxu0 %v5935
        %v5980 = vpop.f32.mrf.mxu0
        %v5981 = vadd.f32 0.0, %v5980
        %v5982 = vpop.f32.mrf.mxu0
        %v5983 = vpop.f32.mrf.mxu0
        %v5984 = vadd.f32 0.0, %v5983
        %v5985 = vpop.f32.mrf.mxu0
        %5986 = vmatprep.mubr.bf16.mxu0 0
        %5987 = vmatmul.mubr.bf16.gmra.mxu0 %v5938
        %v5988 = vpop.f32.mrf.mxu0
        %v5989 = vadd.f32 0.0, %v5988
        %v5990 = vpop.f32.mrf.mxu0
        %v5991 = vpop.f32.mrf.mxu0
        %v5992 = vadd.f32 0.0, %v5991
        %v5993 = vpop.f32.mrf.mxu0
        %5994 = vmatprep.mubr.bf16.mxu0 0
        %5995 = vmatmul.mubr.bf16.gmra.mxu0 %v5941
        %v5996 = vpop.f32.mrf.mxu0
        %v5997 = vadd.f32 0.0, %v5996
        %v5998 = vpop.f32.mrf.mxu0
        %v5999 = vpop.f32.mrf.mxu0
        %v6000 = vadd.f32 0.0, %v5999
        %v6001 = vpop.f32.mrf.mxu0
        %6002 = vmatprep.mubr.bf16.mxu0 0
        %6003 = vmatmul.mubr.bf16.gmra.mxu0 %v5944
        %v6004 = vpop.f32.mrf.mxu0
        %v6005 = vadd.f32 0.0, %v6004
        %v6006 = vpop.f32.mrf.mxu0
        %v6007 = vpop.f32.mrf.mxu0
        %v6008 = vadd.f32 0.0, %v6007
        %v6009 = vpop.f32.mrf.mxu0
        %6010 = vdwg.mxu0
        %v6011 = vadd.f32 %v5778, %v5981
        %v6012 = vadd.f32 %v5779, %v5984
        %v6013 = vadd.f32 %v5780, %v5989
        %v6014 = vadd.f32 %v5781, %v5992
        %v6015 = vadd.f32 %v5782, %v5997
        %v6016 = vadd.f32 %v5783, %v6000
        %v6017 = vadd.f32 %v5784, %v6005
        %v6018 = vadd.f32 %v5785, %v6008
        %v6019 = vld [vmem:[%s5664] sm:$0xe]
        %v6020 = vld [vmem:[%s5664 + $0x8] sm:$0xe]
        %v6021 = vld [vmem:[%s5664 + $0x10] sm:$0xe]
        %v6022 = vld [vmem:[%s5664 + $0x18] sm:$0xe]
        %v6023 = vld [vmem:[%s5664 + $0x20] sm:$0xe]
        %v6024 = vld [vmem:[%s5664 + $0x28] sm:$0xe]
        %v6025 = vld [vmem:[%s5664 + $0x30] sm:$0xe]
        %v6026 = vld [vmem:[%s5664 + $0x38] sm:$0xe]
        %v6043 = vrot.slane %v6019, 5
        %v6044 = vrot.slane %v6043, 4
        %v6045 = vrot.slane %v5787, 5
        %v6046 = vsel %vm5011, %v6044, %v6045
        %v6047 = vrot.slane %v6020, 5
        %v6048 = vrot.slane %v6047, 4
        %v6049 = vrot.slane %v5789, 5
        %v6050 = vsel %vm5011, %v6048, %v6049
        %v6051 = vrot.slane %v6021, 5
        %v6052 = vrot.slane %v6051, 4
        %v6053 = vrot.slane %v5791, 5
        %v6054 = vsel %vm5011, %v6052, %v6053
        %v6055 = vrot.slane %v6022, 5
        %v6056 = vrot.slane %v6055, 4
        %v6057 = vrot.slane %v5793, 5
        %v6058 = vsel %vm5011, %v6056, %v6057
        %v6059 = vrot.slane %v6023, 5
        %v6060 = vrot.slane %v6059, 4
        %v6061 = vrot.slane %v5795, 5
        %v6062 = vsel %vm5011, %v6060, %v6061
        %v6063 = vrot.slane %v6024, 5
        %v6064 = vrot.slane %v6063, 4
        %v6065 = vrot.slane %v5797, 5
        %v6066 = vsel %vm5011, %v6064, %v6065
        %v6067 = vrot.slane %v6025, 5
        %v6068 = vrot.slane %v6067, 4
        %v6069 = vrot.slane %v5799, 5
        %v6070 = vsel %vm5011, %v6068, %v6069
        %v6071 = vrot.slane %v6026, 5
        %v6072 = vrot.slane %v6071, 4
        %v6073 = vrot.slane %v5801, 5
        %v6074 = vsel %vm5011, %v6072, %v6073
        %v6075 = vld [vmem:[%s3 + $0x40] sm:$0xf]
        %v6076 = vld [vmem:[%s3 + $0x44] sm:$0xf]
        %v6077 = vunpack.c.l.b16 %v6046
        %v6078 = vunpack.c.l.b16 %v6050
        %v6079 = vunpack.c.l.b16 %v6054
        %v6080 = vunpack.c.l.b16 %v6058
        %v6081 = vunpack.c.l.b16 %v6062
        %v6082 = vunpack.c.l.b16 %v6066
        %v6083 = vunpack.c.l.b16 %v6070
        %v6084 = vunpack.c.l.b16 %v6074
        %v6085 = vpack.c.b16 %v6078, %v6077
        %v6086 = vpack.c.b16 %v6080, %v6079
        %v6087 = vpack.c.b16 %v6082, %v6081
        %v6088 = vpack.c.b16 %v6084, %v6083
        %v6091 = vunpack.c.l.b16 %v6075
        %v6092 = vunpack.c.l.b16 %v6076
        %v6093 = vpack.c.b16 %v6092, %v6091
        %v6096 = vsel %vm4804, %v6085, 0
        %v6099 = vsel %vm4804, %v6086, 0
        %v6102 = vsel %vm4804, %v6087, 0
        %v6105 = vsel %vm4804, %v6088, 0
        %6107 = vmatprep.subr.bf16.mxu0 0
        %6108 = vmatpush1.bf16.msra.mxu0 0
        %6109 = vmatprep.subr.bf16.mxu0 0
        %6110 = vmatpush1.bf16.msra.mxu0 0
        %6111 = vmatprep.subr.bf16.mxu0 0
        %6112 = vmatpush1.bf16.msra.mxu0 0
        %6113 = vmatprep.subr.bf16.mxu0 0
        %6114 = vmatpush1.bf16.msra.mxu0 0
        %6115 = vmatprep.subr.bf16.mxu0 0
        %6116 = vmatpush1.bf16.msra.mxu0 0
        %6117 = vmatprep.subr.bf16.mxu0 0
        %6118 = vmatpush1.bf16.msra.mxu0 0
        %6119 = vmatprep.subr.bf16.mxu0 0
        %6120 = vmatpush1.bf16.msra.mxu0 0
        %6121 = vmatprep.subr.bf16.mxu0 0
        %6122 = vmatpush1.bf16.msra.mxu0 %v6093
        %6123 = vmatprep.subr.bf16.mxu0 0
        %6124 = vmatpush2.bf16.msra.mxu0 0
        %6125 = vmatprep.subr.bf16.mxu0 0
        %6126 = vmatpush2.bf16.msra.mxu0 0
        %6127 = vmatprep.subr.bf16.mxu0 0
        %6128 = vmatpush2.bf16.msra.mxu0 0
        %6129 = vmatprep.subr.bf16.mxu0 0
        %6130 = vmatpush2.bf16.msra.mxu0 0
        %6131 = vmatprep.subr.bf16.mxu0 0
        %6132 = vmatpush2.bf16.msra.mxu0 0
        %6133 = vmatprep.subr.bf16.mxu0 0
        %6134 = vmatpush2.bf16.msra.mxu0 0
        %6135 = vmatprep.subr.bf16.mxu0 0
        %6136 = vmatpush2.bf16.msra.mxu0 0
        %6137 = vmatprep.subr.bf16.mxu0 0
        %6138 = vmatpush2.bf16.msra.mxu0 0
        %6139 = vmatprep.mubr.bf16.mxu0 0
        %6140 = vmatmul.mubr.bf16.gmra.mxu0 %v6096
        %v6141 = vpop.f32.mrf.mxu0
        %v6142 = vadd.f32 0.0, %v6141
        %v6143 = vpop.f32.mrf.mxu0
        %v6144 = vpop.f32.mrf.mxu0
        %v6145 = vadd.f32 0.0, %v6144
        %v6146 = vpop.f32.mrf.mxu0
        %6147 = vmatprep.mubr.bf16.mxu0 0
        %6148 = vmatmul.mubr.bf16.gmra.mxu0 %v6099
        %v6149 = vpop.f32.mrf.mxu0
        %v6150 = vadd.f32 0.0, %v6149
        %v6151 = vpop.f32.mrf.mxu0
        %v6152 = vpop.f32.mrf.mxu0
        %v6153 = vadd.f32 0.0, %v6152
        %v6154 = vpop.f32.mrf.mxu0
        %6155 = vmatprep.mubr.bf16.mxu0 0
        %6156 = vmatmul.mubr.bf16.gmra.mxu0 %v6102
        %v6157 = vpop.f32.mrf.mxu0
        %v6158 = vadd.f32 0.0, %v6157
        %v6159 = vpop.f32.mrf.mxu0
        %v6160 = vpop.f32.mrf.mxu0
        %v6161 = vadd.f32 0.0, %v6160
        %v6162 = vpop.f32.mrf.mxu0
        %6163 = vmatprep.mubr.bf16.mxu0 0
        %6164 = vmatmul.mubr.bf16.gmra.mxu0 %v6105
        %v6165 = vpop.f32.mrf.mxu0
        %v6166 = vadd.f32 0.0, %v6165
        %v6167 = vpop.f32.mrf.mxu0
        %v6168 = vpop.f32.mrf.mxu0
        %v6169 = vadd.f32 0.0, %v6168
        %v6170 = vpop.f32.mrf.mxu0
        %6171 = vdwg.mxu0
        %v6172 = vadd.f32 %v6011, %v6142
        %v6173 = vadd.f32 %v6012, %v6145
        %v6174 = vadd.f32 %v6013, %v6150
        %v6175 = vadd.f32 %v6014, %v6153
        %v6176 = vadd.f32 %v6015, %v6158
        %v6177 = vadd.f32 %v6016, %v6161
        %v6178 = vadd.f32 %v6017, %v6166
        %v6179 = vadd.f32 %v6018, %v6169
        %v6180 = vld [vmem:[%s4] sm:$0x1]
        %v6182 = vlaneseq
        %v6183 = vshrl.u32 %v6182, 7
        %v6184 = vsub.s32 0, %v6183
        %v6185 = vrot.slane %v6180, %v6184
        %v6187 = vadd.f32 %v6172, %v6185
        %v6188 = vadd.f32 %v6173, %v6185
        %v6189 = vadd.f32 %v6174, %v6185
        %v6190 = vadd.f32 %v6175, %v6185
        %v6191 = vadd.f32 %v6176, %v6185
        %v6192 = vadd.f32 %v6177, %v6185
        %v6193 = vadd.f32 %v6178, %v6185
        %v6194 = vadd.f32 %v6179, %v6185
        %v6195 = vmax.f32 %v6187, 0.0
        %v6196 = vmax.f32 %v6188, 0.0
        %v6197 = vmax.f32 %v6189, 0.0
        %v6198 = vmax.f32 %v6190, 0.0
        %v6199 = vmax.f32 %v6191, 0.0
        %v6200 = vmax.f32 %v6192, 0.0
        %v6201 = vmax.f32 %v6193, 0.0
        %v6202 = vmax.f32 %v6194, 0.0
        %v6203 = vmax.f32 %v6195, %v6196
        %v6204 = vmax.f32 %v6197, %v6198
        %v6205 = vmax.f32 %v6199, %v6200
        %v6206 = vmax.f32 %v6201, %v6202
        %vm6207 = vcmask 261120
        %6208 = vst.msk [vmem:[#allocation3] sm:$0xff] %vm6207, %v6203
        %6209 = vst.msk [vmem:[#allocation3 + $0x8] sm:$0xff] %vm6207, %v6204
        %6210 = vst.msk [vmem:[#allocation3 + $0x10] sm:$0xff] %vm6207, %v6205
        %6211 = vst.msk [vmem:[#allocation3 + $0x18] sm:$0xff] %vm6207, %v6206
        %v6212 = vld [vmem:[#allocation3] ss:$2 sm:$0xf]
        %s6213 = scalar_lea.vmem [#allocation3], 8
        %v6214 = vld [vmem:[%s6213] ss:$2 sm:$0xf]
        %s6215 = scalar_lea.vmem [#allocation3], 16
        %v6216 = vld [vmem:[%s6215] ss:$2 sm:$0xf]
        %s6217 = scalar_lea.vmem [#allocation3], 24
        %v6218 = vld [vmem:[%s6217] ss:$2 sm:$0xf]
        %s6219 = scalar_lea.vmem [#allocation3], 1
        %v6220 = vld [vmem:[%s6219] ss:$2 sm:$0xf]
        %s6221 = scalar_lea.vmem [#allocation3], 9
        %v6222 = vld [vmem:[%s6221] ss:$2 sm:$0xf]
        %s6223 = scalar_lea.vmem [#allocation3], 17
        %v6224 = vld [vmem:[%s6223] ss:$2 sm:$0xf]
        %s6225 = scalar_lea.vmem [#allocation3], 25
        %v6226 = vld [vmem:[%s6225] ss:$2 sm:$0xf]
        %v6227 = vmax.f32 %v6212, %v6220
        %v6228 = vmax.f32 %v6214, %v6222
        %v6229 = vmax.f32 %v6216, %v6224
        %v6230 = vmax.f32 %v6218, %v6226
        %vm6231 = vcmask 257024
        %6232 = vst.msk [vmem:[%s217] sm:$0xf] %vm6231, %v6227
        %6233 = vst.msk [vmem:[%s217 + $0x4] sm:$0xf] %vm6231, %v6228
        %6234 = vst.msk [vmem:[%s217 + $0x8] sm:$0xf] %vm6231, %v6229
        %6235 = vst.msk [vmem:[%s217 + $0xc] sm:$0xf] %vm6231, %v6230
        %s6236 = sand.u32 %s137, 1
        %s6237 = scalar_lea.sflag [#allocation5], %s6236
        %s6238 = sand.u32 %s137, 1
        %s6239 = smul.addr %s6238, 16
        %s6240 = scalar_lea.vmem [#allocation4], %s6239
        // Predicated region
        $region41: #{nn1_forward.1} parent=39 // pred_check
          %p6241 = pneg %p147
        $region42: #{nn1_forward.1} parent=39 // pred_check_branch
          %6243 = sbr.rel (%p6241) target = $region44
        $region43: #{nn1_forward.1} parent=39 // pred_region
          %s6245 = ssub.s32 256, 256
          %6246 = vsyncadd %s6237, %s6245
          %s6247 = smul.addr %s19, 4
          %s6248 = smul.addr %s6247, 64
          %s6249 = scalar_lea.hbm %s5, %s6248
          %s6250 = sshll.u32 %s6240, 4
          %s6251 = int_to_ptr.vmem [resolvable:$true] %s6250
          %6256 = dma.vmem_to_hbm [thread:$0]  %s6251, 256, %s6249, %s6237, 64, 64, 4
        $region44: #{nn1_forward.1} parent=39 // pred_fallthru
          _
      $region40: #{nn1_forward.1} parent=5 // pred_fallthru
        _
      %p6257 = scmp.le.s32.totalorder 2, %s14
      // Predicated region
      $region45: #{nn1_forward.1} parent=5 // pred_check
        %p6258 = pneg %p6257
      $region46: #{nn1_forward.1} parent=5 // pred_check_branch
        %6260 = sbr.rel (%p6258) target = $region48
      $region47: #{nn1_forward.1} parent=5 // pred_region
        %s6261 = ssub.s32 %s14, 2
        // Predicated region
        $region49: #{nn1_forward.1} parent=47 // pred_check
          %p6262 = pneg %p153
        $region50: #{nn1_forward.1} parent=47 // pred_check_branch
          %6264 = sbr.rel (%p6262) target = $region52
        $region51: #{nn1_forward.1} parent=47 // pred_region
          %s6265 = sand.u32 %s138, 1
          %s6266 = scalar_lea.sflag [#allocation5], %s6265
          %s6267 = sand.u32 %s138, 1
          %s6268 = smul.addr %s6267, 16
          %s6269 = scalar_lea.vmem [#allocation4], %s6268
          %6270 = dma.done %s6266, 256
        $region52: #{nn1_forward.1} parent=47 // pred_fallthru
          _
      $region48: #{nn1_forward.1} parent=5 // pred_fallthru
        _
    $region6: #{nn1_forward.1} parent=1 // loop_footer
      %s18 = sadd.s32 1, %s14
    $region7: #{nn1_forward.1} parent=1 // loop_footer_branch
      %13 = sbr.rel target = $region3
    $region8: #{nn1_forward.1} parent=1 // loop_exit
      _
    %6271 = vsyncpa [#allocation5], 1
    %s6272 = scalar_lea.sflag [#allocation5], 1
    %6273 = vsyncpa %s6272, 1

</llo_original>
